<compile_context>
chip_gen: v7x
topology: tpu7x:2x2x1
jax: 0.10.0
libtpu: 0.0.40
codegen_flags: <defaults>
</compile_context>

<pallas_src>
import functools

import jax
import jax.numpy as jnp
from jax.experimental import pallas as pl
from jax.experimental.pallas import tpu as pltpu


# ----------------------------- Pallas kernel ------------------------------- #
def _gnn_kernel(a_ref, x_ref, p_ref, w1_ref, b1_ref, w2_ref, b2_ref,
                wfc_ref, bfc_ref, out_ref, *, B, N, F_PAD, H_PAD):
    a = a_ref[...]                                                      # [B, N, N]   bf16
    x = x_ref[...]                                                      # [B, N, Fp]  bf16

    # GCNConv 1 (propagate-then-project): relu((A @ X) @ W1 + b1)
    ax = jnp.einsum('bij,bjf->bif', a, x,
                    preferred_element_type=jnp.float32)                 # [B, N, Fp]  f32
    ax2 = ax.astype(jnp.bfloat16).reshape(B * N, F_PAD)                 # stacked over graphs
    h = jnp.dot(ax2, w1_ref[...],
                preferred_element_type=jnp.float32) + b1_ref[...]       # [B*N, Hp]   f32
    h = jnp.maximum(h, 0.0).astype(jnp.bfloat16).reshape(B, N, H_PAD)

    # GCNConv 2: relu((A @ H1) @ W2 + b2)   (A reused from VMEM; fetched once per graph)
    ah = jnp.einsum('bij,bjh->bih', a, h,
                    preferred_element_type=jnp.float32)                 # [B, N, Hp]  f32
    ah2 = ah.astype(jnp.bfloat16).reshape(B * N, H_PAD)
    h2 = jnp.dot(ah2, w2_ref[...],
                 preferred_element_type=jnp.float32) + b2_ref[...]      # [B*N, Hp]   f32
    h2 = jnp.maximum(h2, 0.0).reshape(B, N, H_PAD)

    # global_mean_pool as a lane-dense MXU dot: [B, 1, N] @ [B, N, Hp] (f32 operands)
    pooled = jnp.einsum('bqn,bnh->bqh', p_ref[...], h2,
                        preferred_element_type=jnp.float32)              # [B, 1, Hp]
    pooled = pooled.reshape(B, H_PAD)

    # final Linear (tiny; kept in f32 for accuracy); lane-dense 128-wide output slab
    out = jnp.dot(pooled, wfc_ref[...],
                  preferred_element_type=jnp.float32) + bfc_ref[...]    # [B, Op]
    out_ref[0] = out                                                    # block [1, B, Op]


# ----------------------------- wrapper -------------------------------------- #
def _round_up(v, m):
    return ((v + m - 1) // m) * m


def gnn_forward(a_hat, x, pool_w, w1, b1, w2, b2, wfc, bfc, graphs_per_step=4):
    G, NMAX, F_IN = x.shape
    HID = w1.shape[1]
    F_OUT = wfc.shape[1]
    F_PAD = _round_up(max(F_IN, 128), 128)
    H_PAD = _round_up(max(HID, 128), 128)
    O_PAD = _round_up(max(F_OUT, 128), 128)

    # Pick the per-step graph batch B (must divide G; keep grid >= 2 where possible so
    # the "parallel" grid axis can still shard across v7x's two TensorCores).
    B = min(graphs_per_step, G)
    while G % B != 0:
        B -= 1
    GB = G // B

    # Lane-pad parameters / inputs; cast MXU operands to bf16 (accumulation stays f32).
    a_bf = a_hat.astype(jnp.bfloat16)                                           # [G,N,N]
    x_p = jnp.zeros((G, NMAX, F_PAD), jnp.bfloat16).at[:, :, :F_IN].set(
        x.astype(jnp.bfloat16))
    p_p = pool_w.astype(jnp.float32)                                            # [G,1,N]
    w1_p = jnp.zeros((F_PAD, H_PAD), jnp.bfloat16).at[:F_IN, :HID].set(
        w1.astype(jnp.bfloat16))
    b1_p = jnp.zeros((1, H_PAD), jnp.float32).at[0, :HID].set(b1)
    w2_p = jnp.zeros((H_PAD, H_PAD), jnp.bfloat16).at[:HID, :HID].set(
        w2.astype(jnp.bfloat16))
    b2_p = jnp.zeros((1, H_PAD), jnp.float32).at[0, :HID].set(b2)
    wfc_p = jnp.zeros((H_PAD, O_PAD), jnp.float32).at[:HID, :F_OUT].set(wfc)
    bfc_p = jnp.zeros((1, O_PAD), jnp.float32).at[0, :F_OUT].set(bfc)

    flops = G * (2 * NMAX * NMAX * F_PAD        # A @ X
                 + 2 * NMAX * F_PAD * H_PAD     # (A X) @ W1
                 + 2 * NMAX * NMAX * H_PAD      # A @ H1
                 + 2 * NMAX * H_PAD * H_PAD     # (A H1) @ W2
                 + 2 * NMAX * H_PAD             # mean pool
                 + 2 * H_PAD * O_PAD)           # fc
    bytes_accessed = (a_bf.size * 2 + x_p.size * 2 + p_p.size * 4
                      + w1_p.size * 2 + w2_p.size * 2
                      + (b1_p.size + b2_p.size + wfc_p.size + bfc_p.size) * 4
                      + G * O_PAD * 4)

    kernel = functools.partial(_gnn_kernel, B=B, N=NMAX, F_PAD=F_PAD, H_PAD=H_PAD)

    out = pl.pallas_call(
        kernel,
        out_shape=jax.ShapeDtypeStruct((GB, B, O_PAD), jnp.float32),
        grid_spec=pltpu.PrefetchScalarGridSpec(
            num_scalar_prefetch=0,
            grid=(GB,),
            in_specs=[
                pl.BlockSpec((B, NMAX, NMAX), lambda g: (g, 0, 0)),    # A_hat (B graphs)
                pl.BlockSpec((B, NMAX, F_PAD), lambda g: (g, 0, 0)),   # X
                pl.BlockSpec((B, 1, NMAX), lambda g: (g, 0, 0)),       # pool weights
                pl.BlockSpec((F_PAD, H_PAD), lambda g: (0, 0)),        # W1
                pl.BlockSpec((1, H_PAD), lambda g: (0, 0)),            # b1
                pl.BlockSpec((H_PAD, H_PAD), lambda g: (0, 0)),        # W2
                pl.BlockSpec((1, H_PAD), lambda g: (0, 0)),            # b2
                pl.BlockSpec((H_PAD, O_PAD), lambda g: (0, 0)),        # Wfc
                pl.BlockSpec((1, O_PAD), lambda g: (0, 0)),            # bfc
            ],
            out_specs=pl.BlockSpec((1, B, O_PAD), lambda g: (g, 0, 0)),
        ),
        compiler_params=pltpu.CompilerParams(
            dimension_semantics=("parallel",),          # 2-TC sharding on v7x (grid >= 2)
            vmem_limit_bytes=32 * 1024 * 1024,
        ),
        cost_estimate=pl.CostEstimate(flops=flops, transcendentals=0,
                                      bytes_accessed=bytes_accessed),
    )(a_bf, x_p, p_p, w1_p, b1_p, w2_p, b2_p, wfc_p, bfc_p)
    return out.reshape(G, O_PAD)[:, :F_OUT]


# ----------------------------- JAX glue ------------------------------------- #
def build_norm_adj(src, dst, n_valid, nmax):
    """GCN-normalized dense adjacency with self-loops on the valid nodes (A[dst, src])."""
    # TODO(synk): sparse edge_index -> dense adjacency scatter has no clean Pallas
    #             equivalent; done in plain-JAX glue (long term: CSR + scalar prefetch).
    a = jnp.zeros((nmax, nmax), jnp.float32).at[dst, src].add(1.0)
    valid = (jnp.arange(nmax) < n_valid).astype(jnp.float32)
    a = a + jnp.diag(valid)     # add self-loops (edge lists here contain no self-loops)
    deg = a.sum(axis=1)
    dinv = jnp.where(deg > 0, jax.lax.rsqrt(deg), 0.0)
    return dinv[:, None] * a * dinv[None, :]


def reference_forward(a_hat, x, pool_w, w1, b1, w2, b2, wfc, bfc):
    h = jnp.maximum(jnp.einsum('gij,gjf->gif', a_hat, x) @ w1 + b1, 0.0)
    h = jnp.maximum(jnp.einsum('gij,gjh->gih', a_hat, h) @ w2 + b2, 0.0)
    pooled = jnp.einsum('gn,gnh->gh', pool_w[:, 0, :], h)
    return pooled @ wfc + bfc


# ----------------------------- Driver ---------------------------------------- #
if __name__ == "__main__":
    G, NMAX, F_IN, HID, F_OUT = 8, 128, 4, 64, 1

    key = jax.random.PRNGKey(0)
    kx, k1, k2, k3, kb3 = jax.random.split(key, 5)

    # Per-graph node counts (graphs padded to NMAX nodes).
    n_nodes = jnp.array([16, 24, 32, 40, 48, 64, 96, 128], jnp.int32)
    valid = jnp.arange(NMAX)[None, :] < n_nodes[:, None]                # [G, NMAX]

    # Node features (zeroed on padded nodes).
    x = jax.random.normal(kx, (G, NMAX, F_IN), jnp.float32)
    x = x * valid[:, :, None].astype(jnp.float32)

    # Undirected ring graph on the first n_g nodes of each graph.
    a_list = []
    for g in range(G):
        n = int(n_nodes[g])
        idx = jnp.arange(n)
        src = jnp.concatenate([idx, (idx + 1) % n])
        dst = jnp.concatenate([(idx + 1) % n, idx])
        a_list.append(build_norm_adj(src, dst, n, NMAX))
    a_hat = jnp.stack(a_list)                                           # [G, NMAX, NMAX]

    # Mean-pool weights, laid out lane-dense as [G, 1, NMAX]: 1/n_g on valid nodes, 0 on pad.
    pool_w = (valid.astype(jnp.float32)
              / n_nodes[:, None].astype(jnp.float32))[:, None, :]       # [G, 1, NMAX]

    # Deterministic parameter init (glorot-like weights, zero GCN biases).
    w1 = jax.random.normal(k1, (F_IN, HID), jnp.float32) * (1.0 / jnp.sqrt(F_IN))
    b1 = jnp.zeros((HID,), jnp.float32)
    w2 = jax.random.normal(k2, (HID, HID), jnp.float32) * (1.0 / jnp.sqrt(HID))
    b2 = jnp.zeros((HID,), jnp.float32)
    wfc = jax.random.normal(k3, (HID, F_OUT), jnp.float32) * (1.0 / jnp.sqrt(HID))
    bfc = jax.random.normal(kb3, (F_OUT,), jnp.float32) * 0.01

    out = gnn_forward(a_hat, x, pool_w, w1, b1, w2, b2, wfc, bfc, graphs_per_step=4)
    out = jax.block_until_ready(out)

    ref = reference_forward(a_hat, x, pool_w, w1, b1, w2, b2, wfc, bfc)
    assert out.shape == (G, F_OUT)
    assert bool(jnp.all(jnp.isfinite(out)))
    assert bool(jnp.allclose(out, ref, rtol=0.1, atol=0.1)), (out, ref)
    print("KERNEL_OK")
</pallas_src>

<mosaic_0001>
module attributes {stable_mosaic.version = 11 : i64} {
  func.func @_gnn_kernel(%arg0: i32, %arg1: memref<4x128x128xbf16, #tpu.memory_space<vmem>>, %arg2: memref<4x128x128xbf16, #tpu.memory_space<vmem>>, %arg3: memref<4x1x128xf32, #tpu.memory_space<vmem>>, %arg4: memref<128x128xbf16, #tpu.memory_space<vmem>>, %arg5: memref<1x128xf32, #tpu.memory_space<vmem>>, %arg6: memref<128x128xbf16, #tpu.memory_space<vmem>>, %arg7: memref<1x128xf32, #tpu.memory_space<vmem>>, %arg8: memref<128x128xf32, #tpu.memory_space<vmem>>, %arg9: memref<1x128xf32, #tpu.memory_space<vmem>>, %arg10: memref<1x4x128xf32, #tpu.memory_space<vmem>>) attributes {dimension_semantics = [#tpu.dimension_semantics<parallel>], iteration_bounds = array<i64: 2>, scalar_prefetch = 0 : i64, scratch_operands = 0 : i64, tpu.core_type = #tpu.core_type<tc>, window_params = [{transform_indices = @transform_0, window_bounds = array<i64: 4, 128, 128>}, {transform_indices = @transform_1, window_bounds = array<i64: 4, 128, 128>}, {transform_indices = @transform_2, window_bounds = array<i64: 4, 1, 128>}, {pipeline_mode = #tpu.pipeline_mode<synchronous>, transform_indices = @transform_3, window_bounds = array<i64: 128, 128>}, {pipeline_mode = #tpu.pipeline_mode<synchronous>, transform_indices = @transform_4, window_bounds = array<i64: 1, 128>}, {pipeline_mode = #tpu.pipeline_mode<synchronous>, transform_indices = @transform_5, window_bounds = array<i64: 128, 128>}, {pipeline_mode = #tpu.pipeline_mode<synchronous>, transform_indices = @transform_6, window_bounds = array<i64: 1, 128>}, {pipeline_mode = #tpu.pipeline_mode<synchronous>, transform_indices = @transform_7, window_bounds = array<i64: 128, 128>}, {pipeline_mode = #tpu.pipeline_mode<synchronous>, transform_indices = @transform_8, window_bounds = array<i64: 1, 128>}, {transform_indices = @transform_9, window_bounds = array<i64: 1, 4, 128>}]} {
    %c0 = arith.constant 0 : index
    %c0_0 = arith.constant 0 : index
    %c0_1 = arith.constant 0 : index
    %0 = vector.load %arg1[%c0, %c0_0, %c0_1] : memref<4x128x128xbf16, #tpu.memory_space<vmem>>, vector<4x128x128xbf16>
    %c0_2 = arith.constant 0 : index
    %c0_3 = arith.constant 0 : index
    %c0_4 = arith.constant 0 : index
    %1 = vector.load %arg2[%c0_2, %c0_3, %c0_4] : memref<4x128x128xbf16, #tpu.memory_space<vmem>>, vector<4x128x128xbf16>
    "tpu.trace_start"() <{level = 10 : i32, message = "bij,bjf->bif"}> : () -> ()
    %cst = arith.constant dense<0.000000e+00> : vector<4x128x128xf32>
    %2 = tpu.matmul %0, %1, %cst {dimension_numbers = #tpu.dot_dimension_numbers<[2], [1], [1], [2], [0, 0, 0, 1, 1, 2], [0], [0]>} : vector<4x128x128xbf16>, vector<4x128x128xbf16>, vector<4x128x128xf32> -> vector<4x128x128xf32>
    "tpu.trace_stop"() : () -> ()
    %3 = arith.truncf %2 : vector<4x128x128xf32> to vector<4x128x128xbf16>
    %4 = vector.shape_cast %3 : vector<4x128x128xbf16> to vector<512x128xbf16>
    %c0_5 = arith.constant 0 : index
    %c0_6 = arith.constant 0 : index
    %5 = vector.load %arg4[%c0_5, %c0_6] : memref<128x128xbf16, #tpu.memory_space<vmem>>, vector<128x128xbf16>
    %cst_7 = arith.constant dense<0.000000e+00> : vector<512x128xf32>
    %6 = tpu.matmul %4, %5, %cst_7 {dimension_numbers = #tpu.dot_dimension_numbers<[1], [0], [0], [1], [0, 0, 1, 1], [], []>} : vector<512x128xbf16>, vector<128x128xbf16>, vector<512x128xf32> -> vector<512x128xf32>
    %c0_8 = arith.constant 0 : index
    %c0_9 = arith.constant 0 : index
    %7 = vector.load %arg5[%c0_8, %c0_9] : memref<1x128xf32, #tpu.memory_space<vmem>>, vector<1x128xf32>
    %8 = vector.broadcast %7 : vector<1x128xf32> to vector<512x128xf32>
    %9 = arith.addf %6, %8 : vector<512x128xf32>
    %cst_10 = arith.constant 0.000000e+00 : f32
    %10 = vector.broadcast %cst_10 : f32 to vector<512x128xf32>
    %11 = arith.maximumf %9, %10 : vector<512x128xf32>
    %12 = arith.truncf %11 : vector<512x128xf32> to vector<512x128xbf16>
    %13 = vector.shape_cast %12 : vector<512x128xbf16> to vector<4x128x128xbf16>
    "tpu.trace_start"() <{level = 10 : i32, message = "bij,bjh->bih"}> : () -> ()
    %cst_11 = arith.constant dense<0.000000e+00> : vector<4x128x128xf32>
    %14 = tpu.matmul %0, %13, %cst_11 {dimension_numbers = #tpu.dot_dimension_numbers<[2], [1], [1], [2], [0, 0, 0, 1, 1, 2], [0], [0]>} : vector<4x128x128xbf16>, vector<4x128x128xbf16>, vector<4x128x128xf32> -> vector<4x128x128xf32>
    "tpu.trace_stop"() : () -> ()
    %15 = arith.truncf %14 : vector<4x128x128xf32> to vector<4x128x128xbf16>
    %16 = vector.shape_cast %15 : vector<4x128x128xbf16> to vector<512x128xbf16>
    %c0_12 = arith.constant 0 : index
    %c0_13 = arith.constant 0 : index
    %17 = vector.load %arg6[%c0_12, %c0_13] : memref<128x128xbf16, #tpu.memory_space<vmem>>, vector<128x128xbf16>
    %cst_14 = arith.constant dense<0.000000e+00> : vector<512x128xf32>
    %18 = tpu.matmul %16, %17, %cst_14 {dimension_numbers = #tpu.dot_dimension_numbers<[1], [0], [0], [1], [0, 0, 1, 1], [], []>} : vector<512x128xbf16>, vector<128x128xbf16>, vector<512x128xf32> -> vector<512x128xf32>
    %c0_15 = arith.constant 0 : index
    %c0_16 = arith.constant 0 : index
    %19 = vector.load %arg7[%c0_15, %c0_16] : memref<1x128xf32, #tpu.memory_space<vmem>>, vector<1x128xf32>
    %20 = vector.broadcast %19 : vector<1x128xf32> to vector<512x128xf32>
    %21 = arith.addf %18, %20 : vector<512x128xf32>
    %cst_17 = arith.constant 0.000000e+00 : f32
    %22 = vector.broadcast %cst_17 : f32 to vector<512x128xf32>
    %23 = arith.maximumf %21, %22 : vector<512x128xf32>
    %24 = vector.shape_cast %23 : vector<512x128xf32> to vector<4x128x128xf32>
    %c0_18 = arith.constant 0 : index
    %c0_19 = arith.constant 0 : index
    %c0_20 = arith.constant 0 : index
    %25 = vector.load %arg3[%c0_18, %c0_19, %c0_20] : memref<4x1x128xf32, #tpu.memory_space<vmem>>, vector<4x1x128xf32>
    "tpu.trace_start"() <{level = 10 : i32, message = "bqn,bnh->bqh"}> : () -> ()
    %cst_21 = arith.constant dense<0.000000e+00> : vector<4x1x128xf32>
    %26 = tpu.matmul %25, %24, %cst_21 {dimension_numbers = #tpu.dot_dimension_numbers<[2], [1], [1], [2], [0, 0, 0, 1, 1, 2], [0], [0]>} : vector<4x1x128xf32>, vector<4x128x128xf32>, vector<4x1x128xf32> -> vector<4x1x128xf32>
    "tpu.trace_stop"() : () -> ()
    %27 = vector.shape_cast %26 : vector<4x1x128xf32> to vector<4x128xf32>
    %c0_22 = arith.constant 0 : index
    %c0_23 = arith.constant 0 : index
    %28 = vector.load %arg8[%c0_22, %c0_23] : memref<128x128xf32, #tpu.memory_space<vmem>>, vector<128x128xf32>
    %cst_24 = arith.constant dense<0.000000e+00> : vector<4x128xf32>
    %29 = tpu.matmul %27, %28, %cst_24 {dimension_numbers = #tpu.dot_dimension_numbers<[1], [0], [0], [1], [0, 0, 1, 1], [], []>} : vector<4x128xf32>, vector<128x128xf32>, vector<4x128xf32> -> vector<4x128xf32>
    %c0_25 = arith.constant 0 : index
    %c0_26 = arith.constant 0 : index
    %30 = vector.load %arg9[%c0_25, %c0_26] : memref<1x128xf32, #tpu.memory_space<vmem>>, vector<1x128xf32>
    %31 = vector.broadcast %30 : vector<1x128xf32> to vector<4x128xf32>
    %32 = arith.addf %29, %31 : vector<4x128xf32>
    %c0_27 = arith.constant 0 : index
    %c0_28 = arith.constant 0 : index
    %c0_29 = arith.constant 0 : index
    %33 = vector.load %arg10[%c0_27, %c0_28, %c0_29] : memref<1x4x128xf32, #tpu.memory_space<vmem>>, vector<1x4x128xf32>
    %34 = vector.shape_cast %33 : vector<1x4x128xf32> to vector<4x128xf32>
    %35 = vector.shape_cast %32 : vector<4x128xf32> to vector<1x4x128xf32>
    tpu.vector_store %arg10[%c0_27, %c0_28, %c0_29], %35 {strides = array<i32>} : memref<1x4x128xf32, #tpu.memory_space<vmem>>, vector<1x4x128xf32>,
    return
  }
  func.func @transform_0(%arg0: i32) -> (i32, i32, i32) {
    %c0_i32 = arith.constant 0 : i32
    %c0_i32_0 = arith.constant 0 : i32
    %c0_i32_1 = arith.constant 0 : i32
    return %arg0, %c0_i32, %c0_i32_0 : i32, i32, i32
  }
  func.func @transform_1(%arg0: i32) -> (i32, i32, i32) {
    %c0_i32 = arith.constant 0 : i32
    %c0_i32_0 = arith.constant 0 : i32
    %c0_i32_1 = arith.constant 0 : i32
    return %arg0, %c0_i32, %c0_i32_0 : i32, i32, i32
  }
  func.func @transform_2(%arg0: i32) -> (i32, i32, i32) {
    %c0_i32 = arith.constant 0 : i32
    %c0_i32_0 = arith.constant 0 : i32
    %c0_i32_1 = arith.constant 0 : i32
    return %arg0, %c0_i32, %c0_i32_0 : i32, i32, i32
  }
  func.func @transform_3(%arg0: i32) -> (i32, i32) {
    %c0_i32 = arith.constant 0 : i32
    %c0_i32_0 = arith.constant 0 : i32
    %c0_i32_1 = arith.constant 0 : i32
    return %c0_i32, %c0_i32_0 : i32, i32
  }
  func.func @transform_4(%arg0: i32) -> (i32, i32) {
    %c0_i32 = arith.constant 0 : i32
    %c0_i32_0 = arith.constant 0 : i32
    %c0_i32_1 = arith.constant 0 : i32
    return %c0_i32, %c0_i32_0 : i32, i32
  }
  func.func @transform_5(%arg0: i32) -> (i32, i32) {
    %c0_i32 = arith.constant 0 : i32
    %c0_i32_0 = arith.constant 0 : i32
    %c0_i32_1 = arith.constant 0 : i32
    return %c0_i32, %c0_i32_0 : i32, i32
  }
  func.func @transform_6(%arg0: i32) -> (i32, i32) {
    %c0_i32 = arith.constant 0 : i32
    %c0_i32_0 = arith.constant 0 : i32
    %c0_i32_1 = arith.constant 0 : i32
    return %c0_i32, %c0_i32_0 : i32, i32
  }
  func.func @transform_7(%arg0: i32) -> (i32, i32) {
    %c0_i32 = arith.constant 0 : i32
    %c0_i32_0 = arith.constant 0 : i32
    %c0_i32_1 = arith.constant 0 : i32
    return %c0_i32, %c0_i32_0 : i32, i32
  }
  func.func @transform_8(%arg0: i32) -> (i32, i32) {
    %c0_i32 = arith.constant 0 : i32
    %c0_i32_0 = arith.constant 0 : i32
    %c0_i32_1 = arith.constant 0 : i32
    return %c0_i32, %c0_i32_0 : i32, i32
  }
  func.func @transform_9(%arg0: i32) -> (i32, i32, i32) {
    %c0_i32 = arith.constant 0 : i32
    %c0_i32_0 = arith.constant 0 : i32
    %c0_i32_1 = arith.constant 0 : i32
    return %arg0, %c0_i32, %c0_i32_0 : i32, i32, i32
  }
}

</mosaic_0001>

<llo_original>
// kernel: tpu_custom_call.1
$region0: #{tpu_custom_call.1}
  #allocation0 [shape = 'u32[]', space=smem, size = 0x4, offset = 0x4, fixed_abs, tag = 'smem constant byte address 0x4 - core index']
  #allocation1 [shape = 'u32[144,128]{1,0:T(1,128)}', space=vmem, size = 0x12000, scoped, tag = 'internal scratch']
  %s0 = inlined_call_operand.hbm [shape: bf16[8,128,128], index: 0, kind: input, shape index: {}]
  %s1 = inlined_call_operand.hbm [shape: bf16[8,128,128], index: 1, kind: input, shape index: {}]
  %s2 = inlined_call_operand.hbm [shape: f32[8,1,128], index: 2, kind: input, shape index: {}]
  %s3 = inlined_call_operand.hbm [shape: bf16[128,128], index: 3, kind: input, shape index: {}]
  %s4 = inlined_call_operand.vmem [shape: f32[1,128], index: 4, kind: input, shape index: {}]
  %s5 = inlined_call_operand.hbm [shape: bf16[128,128], index: 5, kind: input, shape index: {}]
  %s6 = inlined_call_operand.vmem [shape: f32[1,128], index: 6, kind: input, shape index: {}]
  %s7 = inlined_call_operand.hbm [shape: f32[128,128], index: 7, kind: input, shape index: {}]
  %s8 = inlined_call_operand.vmem [shape: f32[1,128], index: 8, kind: input, shape index: {}]
  %s9 = inlined_call_operand.hbm [shape: f32[2,4,128], index: 9, kind: output, shape index: {}]
  %s10 = sld [smem:[#allocation0]]
  $region93: #{tpu_custom_call.1} parent=0
    _
  %s12 = ssub.s32 1, %s10
  %s13 = scalar_select 0, %s12, %s10
  $region1: #{tpu_custom_call.1} parent=0
    #allocation2 [shape = 'u8[262144]{0}', space=vmem, size = 0x40000, scoped, tag = 'input window, operand 0']
    #allocation3 [shape = 's32[2]{0}', space=sflag, size = 0x8, scoped, tag = 'scoped memory for tpu_custom_call.1']
    #allocation4 [shape = 's32[2]{0}', space=sflag, size = 0x8, scoped, tag = 'scoped memory for tpu_custom_call.1']
    #allocation5 [shape = 'u8[262144]{0}', space=vmem, size = 0x40000, scoped, tag = 'input window, operand 1']
    #allocation6 [shape = 's32[2]{0}', space=sflag, size = 0x8, scoped, tag = 'scoped memory for tpu_custom_call.1']
    #allocation7 [shape = 'u8[4096]{0}', space=vmem, size = 0x1000, scoped, tag = 'input window, operand 2']
    #allocation8 [shape = 'u8[32768]{0}', space=vmem, size = 0x8000, scoped, tag = 'input window, operand 3, single buffered']
    #allocation9 [shape = 's32[1]{0}', space=sflag, size = 0x4, scoped, tag = 'scoped memory for tpu_custom_call.1']
    #allocation10 [shape = 'u8[32768]{0}', space=vmem, size = 0x8000, scoped, tag = 'input window, operand 5, single buffered']
    #allocation11 [shape = 'u8[65536]{0}', space=vmem, size = 0x10000, scoped, tag = 'input window, operand 7, single buffered']
    #allocation12 [shape = 's32[1]{0}', space=sflag, size = 0x4, scoped, tag = 'scoped memory for tpu_custom_call.1']
    #allocation13 [shape = 'u8[4096]{0}', space=vmem, size = 0x1000, scoped, tag = 'output window, operand 0']
    %14 = vsyncpa [#allocation3], 0
    %s15 = scalar_lea.sflag [#allocation3], 1
    %16 = vsyncpa %s15, 0
    %17 = vsyncpa [#allocation6], 0
    %s18 = scalar_lea.sflag [#allocation6], 1
    %19 = vsyncpa %s18, 0
    %20 = vsyncpa [#allocation9], 0
    %21 = vsyncpa [#allocation12], 0
    %22 = vsyncpa [#allocation4], 0
    %s23 = scalar_lea.sflag [#allocation4], 1
    %24 = vsyncpa %s23, 0
    loop: start=0, step=1, limit=4
    $region2: #{tpu_custom_call.1} parent=1 // loop_pre_header
      _
    $region3: #{tpu_custom_call.1} parent=1 // loop_header
      %s26 = sphi 0, %s30
      %p27 = scmp.ge.s32.totalorder %s26, 4
      %s36 = sphi 0, %s38
      %s39 = sphi 0, %s36
      %s40 = sphi 0, %s39
      %s56 = sphi 0, %s40
      %s62 = sphi 0, %s64
      %s65 = sphi 0, %s62
      %s66 = sphi 0, %s65
      %s82 = sphi 0, %s66
      %s88 = sphi 0, %s90
      %s91 = sphi 0, %s88
      %s92 = sphi 0, %s91
      %s108 = sphi 0, %s92
      %s112 = sphi 0, %s112
      %s114 = sphi 0, %s112
      %s115 = sphi 0, %s114
      %s129 = sphi 0, %s115
      %s133 = sphi 0, %s133
      %s135 = sphi 0, %s133
      %s136 = sphi 0, %s135
      %s150 = sphi 0, %s136
      %s154 = sphi 0, %s154
      %s156 = sphi 0, %s154
      %s157 = sphi 0, %s156
      %s171 = sphi 0, %s157
      %s175 = sphi 0, %s175
      %s177 = sphi 0, %s175
      %s178 = sphi 0, %s177
      %s192 = sphi 0, %s178
      %s196 = sphi 0, %s196
      %s198 = sphi 0, %s196
      %s199 = sphi 0, %s198
      %s213 = sphi 0, %s199
      %s217 = sphi 0, %s217
      %s219 = sphi 0, %s217
      %s220 = sphi 0, %s219
      %s234 = sphi 0, %s220
      %s240 = sphi 0, %s242
      %s243 = sphi 0, %s240
      %s244 = sphi 0, %s243
      %s260 = sphi 0, %s244
    $region4: #{tpu_custom_call.1} parent=1 // loop_header_branch
      %29 = sbr.rel (%p27) target = $region8
    $region5: #{tpu_custom_call.1} parent=1 // loop_body
      %s31 = ssub.s32 %s26, 1
      %s32 = ssub.s32 %s26, 2
      %s33 = sadd.s32 %s26, 1
      %s34 = ssub.s32 %s26, %s33
      %p35 = scmp.eq.s32.totalorder %s34, 0
      %s37 = sadd.s32 %s36, 1
      %s38 = scalar_select %p35, %s36, %s37
      %p41 = pneg %p35
      %p42 = scmp.eq.s32.totalorder %s26, 1
      %p43 = por %p41, %p42
      %p44 = scmp.ne.s32.totalorder %s36, %s39
      %p45 = scmp.eq.s32.totalorder %s26, 0
      %p46 = por %p44, %p45
      %p47 = scmp.ne.s32.totalorder %s36, %s39
      %p48 = scmp.eq.s32.totalorder %s31, 1
      %p49 = por %p47, %p48
      %p50 = scmp.ne.s32.totalorder %s39, %s40
      %p51 = scmp.eq.s32.totalorder %s31, 0
      %p52 = por %p50, %p51
      %p53 = scmp.ne.s32.totalorder %s39, %s40
      %p54 = scmp.eq.s32.totalorder %s32, 1
      %p55 = por %p53, %p54
      %p57 = scmp.ne.s32.totalorder %s40, %s56
      %p58 = scmp.eq.s32.totalorder %s32, 0
      %p59 = por %p57, %p58
      %s60 = ssub.s32 %s26, %s33
      %p61 = scmp.eq.s32.totalorder %s60, 0
      %s63 = sadd.s32 %s62, 1
      %s64 = scalar_select %p61, %s62, %s63
      %p67 = pneg %p61
      %p68 = scmp.eq.s32.totalorder %s26, 1
      %p69 = por %p67, %p68
      %p70 = scmp.ne.s32.totalorder %s62, %s65
      %p71 = scmp.eq.s32.totalorder %s26, 0
      %p72 = por %p70, %p71
      %p73 = scmp.ne.s32.totalorder %s62, %s65
      %p74 = scmp.eq.s32.totalorder %s31, 1
      %p75 = por %p73, %p74
      %p76 = scmp.ne.s32.totalorder %s65, %s66
      %p77 = scmp.eq.s32.totalorder %s31, 0
      %p78 = por %p76, %p77
      %p79 = scmp.ne.s32.totalorder %s65, %s66
      %p80 = scmp.eq.s32.totalorder %s32, 1
      %p81 = por %p79, %p80
      %p83 = scmp.ne.s32.totalorder %s66, %s82
      %p84 = scmp.eq.s32.totalorder %s32, 0
      %p85 = por %p83, %p84
      %s86 = ssub.s32 %s26, %s33
      %p87 = scmp.eq.s32.totalorder %s86, 0
      %s89 = sadd.s32 %s88, 1
      %s90 = scalar_select %p87, %s88, %s89
      %p93 = pneg %p87
      %p94 = scmp.eq.s32.totalorder %s26, 1
      %p95 = por %p93, %p94
      %p96 = scmp.ne.s32.totalorder %s88, %s91
      %p97 = scmp.eq.s32.totalorder %s26, 0
      %p98 = por %p96, %p97
      %p99 = scmp.ne.s32.totalorder %s88, %s91
      %p100 = scmp.eq.s32.totalorder %s31, 1
      %p101 = por %p99, %p100
      %p102 = scmp.ne.s32.totalorder %s91, %s92
      %p103 = scmp.eq.s32.totalorder %s31, 0
      %p104 = por %p102, %p103
      %p105 = scmp.ne.s32.totalorder %s91, %s92
      %p106 = scmp.eq.s32.totalorder %s32, 1
      %p107 = por %p105, %p106
      %p109 = scmp.ne.s32.totalorder %s92, %s108
      %p110 = scmp.eq.s32.totalorder %s32, 0
      %p111 = por %p109, %p110
      %s113 = sadd.s32 %s112, 1
      %p116 = scmp.eq.s32.totalorder %s26, 1
      %p117 = scmp.ne.s32.totalorder %s112, %s114
      %p118 = scmp.eq.s32.totalorder %s26, 0
      %p119 = por %p117, %p118
      %p120 = scmp.ne.s32.totalorder %s112, %s114
      %p121 = scmp.eq.s32.totalorder %s31, 1
      %p122 = por %p120, %p121
      %p123 = scmp.ne.s32.totalorder %s114, %s115
      %p124 = scmp.eq.s32.totalorder %s31, 0
      %p125 = por %p123, %p124
      %p126 = scmp.ne.s32.totalorder %s114, %s115
      %p127 = scmp.eq.s32.totalorder %s32, 1
      %p128 = por %p126, %p127
      %p130 = scmp.ne.s32.totalorder %s115, %s129
      %p131 = scmp.eq.s32.totalorder %s32, 0
      %p132 = por %p130, %p131
      %s134 = sadd.s32 %s133, 1
      %p137 = scmp.eq.s32.totalorder %s26, 1
      %p138 = scmp.ne.s32.totalorder %s133, %s135
      %p139 = scmp.eq.s32.totalorder %s26, 0
      %p140 = por %p138, %p139
      %p141 = scmp.ne.s32.totalorder %s133, %s135
      %p142 = scmp.eq.s32.totalorder %s31, 1
      %p143 = por %p141, %p142
      %p144 = scmp.ne.s32.totalorder %s135, %s136
      %p145 = scmp.eq.s32.totalorder %s31, 0
      %p146 = por %p144, %p145
      %p147 = scmp.ne.s32.totalorder %s135, %s136
      %p148 = scmp.eq.s32.totalorder %s32, 1
      %p149 = por %p147, %p148
      %p151 = scmp.ne.s32.totalorder %s136, %s150
      %p152 = scmp.eq.s32.totalorder %s32, 0
      %p153 = por %p151, %p152
      %s155 = sadd.s32 %s154, 1
      %p158 = scmp.eq.s32.totalorder %s26, 1
      %p159 = scmp.ne.s32.totalorder %s154, %s156
      %p160 = scmp.eq.s32.totalorder %s26, 0
      %p161 = por %p159, %p160
      %p162 = scmp.ne.s32.totalorder %s154, %s156
      %p163 = scmp.eq.s32.totalorder %s31, 1
      %p164 = por %p162, %p163
      %p165 = scmp.ne.s32.totalorder %s156, %s157
      %p166 = scmp.eq.s32.totalorder %s31, 0
      %p167 = por %p165, %p166
      %p168 = scmp.ne.s32.totalorder %s156, %s157
      %p169 = scmp.eq.s32.totalorder %s32, 1
      %p170 = por %p168, %p169
      %p172 = scmp.ne.s32.totalorder %s157, %s171
      %p173 = scmp.eq.s32.totalorder %s32, 0
      %p174 = por %p172, %p173
      %s176 = sadd.s32 %s175, 1
      %p179 = scmp.eq.s32.totalorder %s26, 1
      %p180 = scmp.ne.s32.totalorder %s175, %s177
      %p181 = scmp.eq.s32.totalorder %s26, 0
      %p182 = por %p180, %p181
      %p183 = scmp.ne.s32.totalorder %s175, %s177
      %p184 = scmp.eq.s32.totalorder %s31, 1
      %p185 = por %p183, %p184
      %p186 = scmp.ne.s32.totalorder %s177, %s178
      %p187 = scmp.eq.s32.totalorder %s31, 0
      %p188 = por %p186, %p187
      %p189 = scmp.ne.s32.totalorder %s177, %s178
      %p190 = scmp.eq.s32.totalorder %s32, 1
      %p191 = por %p189, %p190
      %p193 = scmp.ne.s32.totalorder %s178, %s192
      %p194 = scmp.eq.s32.totalorder %s32, 0
      %p195 = por %p193, %p194
      %s197 = sadd.s32 %s196, 1
      %p200 = scmp.eq.s32.totalorder %s26, 1
      %p201 = scmp.ne.s32.totalorder %s196, %s198
      %p202 = scmp.eq.s32.totalorder %s26, 0
      %p203 = por %p201, %p202
      %p204 = scmp.ne.s32.totalorder %s196, %s198
      %p205 = scmp.eq.s32.totalorder %s31, 1
      %p206 = por %p204, %p205
      %p207 = scmp.ne.s32.totalorder %s198, %s199
      %p208 = scmp.eq.s32.totalorder %s31, 0
      %p209 = por %p207, %p208
      %p210 = scmp.ne.s32.totalorder %s198, %s199
      %p211 = scmp.eq.s32.totalorder %s32, 1
      %p212 = por %p210, %p211
      %p214 = scmp.ne.s32.totalorder %s199, %s213
      %p215 = scmp.eq.s32.totalorder %s32, 0
      %p216 = por %p214, %p215
      %s218 = sadd.s32 %s217, 1
      %p221 = scmp.eq.s32.totalorder %s26, 1
      %p222 = scmp.ne.s32.totalorder %s217, %s219
      %p223 = scmp.eq.s32.totalorder %s26, 0
      %p224 = por %p222, %p223
      %p225 = scmp.ne.s32.totalorder %s217, %s219
      %p226 = scmp.eq.s32.totalorder %s31, 1
      %p227 = por %p225, %p226
      %p228 = scmp.ne.s32.totalorder %s219, %s220
      %p229 = scmp.eq.s32.totalorder %s31, 0
      %p230 = por %p228, %p229
      %p231 = scmp.ne.s32.totalorder %s219, %s220
      %p232 = scmp.eq.s32.totalorder %s32, 1
      %p233 = por %p231, %p232
      %p235 = scmp.ne.s32.totalorder %s220, %s234
      %p236 = scmp.eq.s32.totalorder %s32, 0
      %p237 = por %p235, %p236
      %s238 = ssub.s32 %s26, %s33
      %p239 = scmp.eq.s32.totalorder %s238, 0
      %s241 = sadd.s32 %s240, 1
      %s242 = scalar_select %p239, %s240, %s241
      %p245 = pneg %p239
      %p246 = scmp.eq.s32.totalorder %s26, 1
      %p247 = por %p245, %p246
      %p248 = scmp.ne.s32.totalorder %s240, %s243
      %p249 = scmp.eq.s32.totalorder %s26, 0
      %p250 = por %p248, %p249
      %p251 = scmp.ne.s32.totalorder %s240, %s243
      %p252 = scmp.eq.s32.totalorder %s31, 1
      %p253 = por %p251, %p252
      %p254 = scmp.ne.s32.totalorder %s243, %s244
      %p255 = scmp.eq.s32.totalorder %s31, 0
      %p256 = por %p254, %p255
      %p257 = scmp.ne.s32.totalorder %s243, %s244
      %p258 = scmp.eq.s32.totalorder %s32, 1
      %p259 = por %p257, %p258
      %p261 = scmp.ne.s32.totalorder %s244, %s260
      %p262 = scmp.eq.s32.totalorder %s32, 0
      %p263 = por %p261, %p262
      %p264 = scmp.le.s32.totalorder 1, %s26
      %p265 = scmp.lt.s32.totalorder %s26, 3
      %p266 = pnand %p264, %p265
      %p267 = pneg %p266
      // Predicated region
      $region9: #{tpu_custom_call.1} parent=5 // pred_check
        _
      $region10: #{tpu_custom_call.1} parent=5 // pred_check_branch
        %269 = sbr.rel (%p266) target = $region12
      $region11: #{tpu_custom_call.1} parent=5 // pred_region
        %s270 = ssub.s32 %s26, 1
        // Predicated region
        $region13: #{tpu_custom_call.1} parent=11 // pred_check
          %p271 = pneg %p125
        $region14: #{tpu_custom_call.1} parent=11 // pred_check_branch
          %273 = sbr.rel (%p271) target = $region16
        $region15: #{tpu_custom_call.1} parent=11 // pred_region
          %s275 = ssub.s32 1024, 1024
          %276 = vsyncadd [#allocation9], %s275
          %s277 = sshll.u32 [#allocation8], 4
          %s278 = int_to_ptr.vmem [resolvable:$true] %s277
          %283 = dma.hbm_to_vmem [thread:$0]  %s3, 1024, %s278, [#allocation9], 64, 64, 4
        $region16: #{tpu_custom_call.1} parent=11 // pred_fallthru
          _
        // Predicated region
        $region17: #{tpu_custom_call.1} parent=11 // pred_check
          %p284 = pneg %p146
        $region18: #{tpu_custom_call.1} parent=11 // pred_check_branch
          %286 = sbr.rel (%p284) target = $region20
        $region19: #{tpu_custom_call.1} parent=11 // pred_region
          _
        $region20: #{tpu_custom_call.1} parent=11 // pred_fallthru
          _
        // Predicated region
        $region21: #{tpu_custom_call.1} parent=11 // pred_check
          %p287 = pneg %p167
        $region22: #{tpu_custom_call.1} parent=11 // pred_check_branch
          %289 = sbr.rel (%p287) target = $region24
        $region23: #{tpu_custom_call.1} parent=11 // pred_region
          %s291 = ssub.s32 1024, 1024
          %292 = vsyncadd [#allocation9], %s291
          %s293 = sshll.u32 [#allocation10], 4
          %s294 = int_to_ptr.vmem [resolvable:$true] %s293
          %299 = dma.hbm_to_vmem [thread:$0]  %s5, 1024, %s294, [#allocation9], 64, 64, 4
        $region24: #{tpu_custom_call.1} parent=11 // pred_fallthru
          _
        // Predicated region
        $region25: #{tpu_custom_call.1} parent=11 // pred_check
          %p300 = pneg %p188
        $region26: #{tpu_custom_call.1} parent=11 // pred_check_branch
          %302 = sbr.rel (%p300) target = $region28
        $region27: #{tpu_custom_call.1} parent=11 // pred_region
          _
        $region28: #{tpu_custom_call.1} parent=11 // pred_fallthru
          _
        // Predicated region
        $region29: #{tpu_custom_call.1} parent=11 // pred_check
          %p303 = pneg %p209
        $region30: #{tpu_custom_call.1} parent=11 // pred_check_branch
          %305 = sbr.rel (%p303) target = $region32
        $region31: #{tpu_custom_call.1} parent=11 // pred_region
          %s307 = ssub.s32 2048, 2048
          %308 = vsyncadd [#allocation12], %s307
          %s309 = sshll.u32 [#allocation11], 4
          %s310 = int_to_ptr.vmem [resolvable:$true] %s309
          %315 = dma.hbm_to_vmem [thread:$0]  %s7, 2048, %s310, [#allocation12], 128, 128, 8
        $region32: #{tpu_custom_call.1} parent=11 // pred_fallthru
          _
        // Predicated region
        $region33: #{tpu_custom_call.1} parent=11 // pred_check
          %p316 = pneg %p230
        $region34: #{tpu_custom_call.1} parent=11 // pred_check_branch
          %318 = sbr.rel (%p316) target = $region36
        $region35: #{tpu_custom_call.1} parent=11 // pred_region
          _
        $region36: #{tpu_custom_call.1} parent=11 // pred_fallthru
          _
      $region12: #{tpu_custom_call.1} parent=5 // pred_fallthru
        _
      %p319 = scmp.lt.s32.totalorder %s26, 2
      // Predicated region
      $region37: #{tpu_custom_call.1} parent=5 // pred_check
        %p320 = pneg %p319
      $region38: #{tpu_custom_call.1} parent=5 // pred_check_branch
        %322 = sbr.rel (%p320) target = $region40
      $region39: #{tpu_custom_call.1} parent=5 // pred_region
        // Predicated region
        $region41: #{tpu_custom_call.1} parent=39 // pred_check
          %p323 = pneg %p46
        $region42: #{tpu_custom_call.1} parent=39 // pred_check_branch
          %325 = sbr.rel (%p323) target = $region44
        $region43: #{tpu_custom_call.1} parent=39 // pred_region
          %s326 = sand.u32 %s36, 1
          %s327 = scalar_lea.sflag [#allocation3], %s326
          %s328 = sand.u32 %s36, 1
          %s329 = smul.addr %s328, 256
          %s330 = scalar_lea.vmem [#allocation2], %s329
          %s331 = smul.u32 4, %s26
          %s333 = ssub.s32 4096, 4096
          %334 = vsyncadd %s327, %s333
          %s335 = smul.addr %s331, 16
          %s336 = smul.addr %s335, 64
          %s337 = scalar_lea.hbm %s0, %s336
          %s338 = sshll.u32 %s330, 4
          %s339 = int_to_ptr.vmem [resolvable:$true] %s338
          %344 = dma.hbm_to_vmem [thread:$0]  %s337, 4096, %s339, %s327, 64, 64, 4
        $region44: #{tpu_custom_call.1} parent=39 // pred_fallthru
          _
        // Predicated region
        $region45: #{tpu_custom_call.1} parent=39 // pred_check
          %p345 = pneg %p72
        $region46: #{tpu_custom_call.1} parent=39 // pred_check_branch
          %347 = sbr.rel (%p345) target = $region48
        $region47: #{tpu_custom_call.1} parent=39 // pred_region
          %s348 = sand.u32 %s26, 1
          %s349 = scalar_lea.sflag [#allocation6], %s348
          %s350 = sand.u32 %s62, 1
          %s351 = smul.addr %s350, 256
          %s352 = scalar_lea.vmem [#allocation5], %s351
          %s353 = smul.u32 4, %s26
          %s355 = ssub.s32 4096, 4096
          %356 = vsyncadd %s349, %s355
          %s357 = smul.addr %s353, 16
          %s358 = smul.addr %s357, 64
          %s359 = scalar_lea.hbm %s1, %s358
          %s360 = sshll.u32 %s352, 4
          %s361 = int_to_ptr.vmem [resolvable:$true] %s360
          %366 = dma.hbm_to_vmem [thread:$0]  %s359, 4096, %s361, %s349, 64, 64, 4
        $region48: #{tpu_custom_call.1} parent=39 // pred_fallthru
          _
        // Predicated region
        $region49: #{tpu_custom_call.1} parent=39 // pred_check
          %p367 = pneg %p98
        $region50: #{tpu_custom_call.1} parent=39 // pred_check_branch
          %369 = sbr.rel (%p367) target = $region52
        $region51: #{tpu_custom_call.1} parent=39 // pred_region
          %s370 = sand.u32 %s26, 1
          %s371 = scalar_lea.sflag [#allocation6], %s370
          %s372 = sand.u32 %s88, 1
          %s373 = smul.addr %s372, 4
          %s374 = scalar_lea.vmem [#allocation7], %s373
          %s375 = smul.u32 4, %s26
          %s377 = ssub.s32 64, 64
          %378 = vsyncadd %s371, %s377
          %s379 = smul.addr %s375, 16
          %s380 = scalar_lea.hbm %s2, %s379
          %s381 = sshll.u32 %s374, 4
          %s382 = int_to_ptr.vmem [resolvable:$true] %s381
          %387 = dma.hbm_to_vmem [thread:$0]  %s380, 64, %s382, %s371, 16, 16, 1
        $region52: #{tpu_custom_call.1} parent=39 // pred_fallthru
          _
      $region40: #{tpu_custom_call.1} parent=5 // pred_fallthru
        _
      %p388 = scmp.le.s32.totalorder 1, %s26
      %p389 = scmp.lt.s32.totalorder %s26, 3
      %p390 = pnand %p388, %p389
      %p391 = pneg %p390
      // Predicated region
      $region53: #{tpu_custom_call.1} parent=5 // pred_check
        _
      $region54: #{tpu_custom_call.1} parent=5 // pred_check_branch
        %393 = sbr.rel (%p390) target = $region56
      $region55: #{tpu_custom_call.1} parent=5 // pred_region
        %s394 = ssub.s32 %s26, 1
        %s395 = sand.u32 %s39, 1
        %s396 = scalar_lea.sflag [#allocation3], %s395
        %s397 = sand.u32 %s39, 1
        %s398 = smul.addr %s397, 256
        %s399 = scalar_lea.vmem [#allocation2], %s398
        // Predicated region
        $region57: #{tpu_custom_call.1} parent=55 // pred_check
          %p400 = pneg %p52
        $region58: #{tpu_custom_call.1} parent=55 // pred_check_branch
          %402 = sbr.rel (%p400) target = $region60
        $region59: #{tpu_custom_call.1} parent=55 // pred_region
          %403 = dma.done %s396, 4096
        $region60: #{tpu_custom_call.1} parent=55 // pred_fallthru
          _
        %s404 = sand.u32 %s31, 1
        %s405 = scalar_lea.sflag [#allocation6], %s404
        %s406 = sand.u32 %s65, 1
        %s407 = smul.addr %s406, 256
        %s408 = scalar_lea.vmem [#allocation5], %s407
        // Predicated region
        $region61: #{tpu_custom_call.1} parent=55 // pred_check
          %p409 = pneg %p78
        $region62: #{tpu_custom_call.1} parent=55 // pred_check_branch
          %411 = sbr.rel (%p409) target = $region64
        $region63: #{tpu_custom_call.1} parent=55 // pred_region
          %412 = dma.done %s405, 4096
        $region64: #{tpu_custom_call.1} parent=55 // pred_fallthru
          _
        %s413 = sand.u32 %s31, 1
        %s414 = scalar_lea.sflag [#allocation6], %s413
        %s415 = sand.u32 %s91, 1
        %s416 = smul.addr %s415, 4
        %s417 = scalar_lea.vmem [#allocation7], %s416
        // Predicated region
        $region65: #{tpu_custom_call.1} parent=55 // pred_check
          %p418 = pneg %p104
        $region66: #{tpu_custom_call.1} parent=55 // pred_check_branch
          %420 = sbr.rel (%p418) target = $region68
        $region67: #{tpu_custom_call.1} parent=55 // pred_region
          %421 = dma.done %s414, 64
        $region68: #{tpu_custom_call.1} parent=55 // pred_fallthru
          _
        // Predicated region
        $region69: #{tpu_custom_call.1} parent=55 // pred_check
          %p422 = pneg %p125
        $region70: #{tpu_custom_call.1} parent=55 // pred_check_branch
          %424 = sbr.rel (%p422) target = $region72
        $region71: #{tpu_custom_call.1} parent=55 // pred_region
          %425 = dma.done [#allocation9], 1024
        $region72: #{tpu_custom_call.1} parent=55 // pred_fallthru
          _
        // Predicated region
        $region73: #{tpu_custom_call.1} parent=55 // pred_check
          %p426 = pneg %p167
        $region74: #{tpu_custom_call.1} parent=55 // pred_check_branch
          %428 = sbr.rel (%p426) target = $region76
        $region75: #{tpu_custom_call.1} parent=55 // pred_region
          %429 = dma.done [#allocation9], 1024
        $region76: #{tpu_custom_call.1} parent=55 // pred_fallthru
          _
        // Predicated region
        $region77: #{tpu_custom_call.1} parent=55 // pred_check
          %p430 = pneg %p209
        $region78: #{tpu_custom_call.1} parent=55 // pred_check_branch
          %432 = sbr.rel (%p430) target = $region80
        $region79: #{tpu_custom_call.1} parent=55 // pred_region
          %433 = dma.done [#allocation12], 2048
        $region80: #{tpu_custom_call.1} parent=55 // pred_fallthru
          _
        %s434 = sand.u32 %s39, 1
        %s435 = scalar_lea.sflag [#allocation3], %s434
        %s436 = sand.u32 %s39, 1
        %s437 = smul.addr %s436, 256
        %s438 = scalar_lea.vmem [#allocation2], %s437
        %p439 = pneg %p52
        %p440 = pneg %p49
        %s441 = sand.u32 %s31, 1
        %s442 = scalar_lea.sflag [#allocation6], %s441
        %s443 = sand.u32 %s65, 1
        %s444 = smul.addr %s443, 256
        %s445 = scalar_lea.vmem [#allocation5], %s444
        %p446 = pneg %p78
        %p447 = pneg %p75
        %s448 = sand.u32 %s31, 1
        %s449 = scalar_lea.sflag [#allocation6], %s448
        %s450 = sand.u32 %s91, 1
        %s451 = smul.addr %s450, 4
        %s452 = scalar_lea.vmem [#allocation7], %s451
        %p453 = pneg %p104
        %p454 = pneg %p101
        %p455 = pneg %p125
        %p456 = pneg %p122
        %p457 = pneg %p146
        %p458 = pneg %p143
        %p459 = pneg %p167
        %p460 = pneg %p164
        %p461 = pneg %p188
        %p462 = pneg %p185
        %p463 = pneg %p209
        %p464 = pneg %p206
        %p465 = pneg %p230
        %p466 = pneg %p227
        %p467 = pneg %p256
        %p468 = pneg %p253
        %s469 = sand.u32 %s243, 1
        %s470 = scalar_lea.sflag [#allocation4], %s469
        %s471 = sand.u32 %s243, 1
        %s472 = smul.addr %s471, 4
        %s473 = scalar_lea.vmem [#allocation13], %s472
        %s474 = smul.u32 4, %s31
        %s475 = smul.u32 4, %s31
        %s476 = smul.u32 4, %s31
        %v478 = vld [vmem:[%s399] sm:$0xf]
        %v479 = vld [vmem:[%s399 + $0x4] sm:$0xf]
        %v480 = vld [vmem:[%s399 + $0x8] sm:$0xf]
        %v481 = vld [vmem:[%s399 + $0xc] sm:$0xf]
        %v482 = vld [vmem:[%s399 + $0x10] sm:$0xf]
        %v483 = vld [vmem:[%s399 + $0x14] sm:$0xf]
        %v484 = vld [vmem:[%s399 + $0x18] sm:$0xf]
        %v485 = vld [vmem:[%s399 + $0x1c] sm:$0xf]
        %v486 = vld [vmem:[%s399 + $0x20] sm:$0xf]
        %v487 = vld [vmem:[%s399 + $0x24] sm:$0xf]
        %v488 = vld [vmem:[%s399 + $0x28] sm:$0xf]
        %v489 = vld [vmem:[%s399 + $0x2c] sm:$0xf]
        %v490 = vld [vmem:[%s399 + $0x30] sm:$0xf]
        %v491 = vld [vmem:[%s399 + $0x34] sm:$0xf]
        %v492 = vld [vmem:[%s399 + $0x38] sm:$0xf]
        %v493 = vld [vmem:[%s399 + $0x3c] sm:$0xf]
        %v494 = vld [vmem:[%s399 + $0x40] sm:$0xf]
        %v495 = vld [vmem:[%s399 + $0x44] sm:$0xf]
        %v496 = vld [vmem:[%s399 + $0x48] sm:$0xf]
        %v497 = vld [vmem:[%s399 + $0x4c] sm:$0xf]
        %v498 = vld [vmem:[%s399 + $0x50] sm:$0xf]
        %v499 = vld [vmem:[%s399 + $0x54] sm:$0xf]
        %v500 = vld [vmem:[%s399 + $0x58] sm:$0xf]
        %v501 = vld [vmem:[%s399 + $0x5c] sm:$0xf]
        %v502 = vld [vmem:[%s399 + $0x60] sm:$0xf]
        %v503 = vld [vmem:[%s399 + $0x64] sm:$0xf]
        %v504 = vld [vmem:[%s399 + $0x68] sm:$0xf]
        %v505 = vld [vmem:[%s399 + $0x6c] sm:$0xf]
        %v506 = vld [vmem:[%s399 + $0x70] sm:$0xf]
        %v507 = vld [vmem:[%s399 + $0x74] sm:$0xf]
        %v508 = vld [vmem:[%s399 + $0x78] sm:$0xf]
        %v509 = vld [vmem:[%s399 + $0x7c] sm:$0xf]
        %v510 = vld [vmem:[%s399 + $0x80] sm:$0xf]
        %v511 = vld [vmem:[%s399 + $0x84] sm:$0xf]
        %v512 = vld [vmem:[%s399 + $0x88] sm:$0xf]
        %v513 = vld [vmem:[%s399 + $0x8c] sm:$0xf]
        %v514 = vld [vmem:[%s399 + $0x90] sm:$0xf]
        %v515 = vld [vmem:[%s399 + $0x94] sm:$0xf]
        %v516 = vld [vmem:[%s399 + $0x98] sm:$0xf]
        %v517 = vld [vmem:[%s399 + $0x9c] sm:$0xf]
        %v518 = vld [vmem:[%s399 + $0xa0] sm:$0xf]
        %v519 = vld [vmem:[%s399 + $0xa4] sm:$0xf]
        %v520 = vld [vmem:[%s399 + $0xa8] sm:$0xf]
        %v521 = vld [vmem:[%s399 + $0xac] sm:$0xf]
        %v522 = vld [vmem:[%s399 + $0xb0] sm:$0xf]
        %v523 = vld [vmem:[%s399 + $0xb4] sm:$0xf]
        %v524 = vld [vmem:[%s399 + $0xb8] sm:$0xf]
        %v525 = vld [vmem:[%s399 + $0xbc] sm:$0xf]
        %v526 = vld [vmem:[%s399 + $0xc0] sm:$0xf]
        %v527 = vld [vmem:[%s399 + $0xc4] sm:$0xf]
        %v528 = vld [vmem:[%s399 + $0xc8] sm:$0xf]
        %v529 = vld [vmem:[%s399 + $0xcc] sm:$0xf]
        %v530 = vld [vmem:[%s399 + $0xd0] sm:$0xf]
        %v531 = vld [vmem:[%s399 + $0xd4] sm:$0xf]
        %v532 = vld [vmem:[%s399 + $0xd8] sm:$0xf]
        %v533 = vld [vmem:[%s399 + $0xdc] sm:$0xf]
        %v534 = vld [vmem:[%s399 + $0xe0] sm:$0xf]
        %v535 = vld [vmem:[%s399 + $0xe4] sm:$0xf]
        %v536 = vld [vmem:[%s399 + $0xe8] sm:$0xf]
        %v537 = vld [vmem:[%s399 + $0xec] sm:$0xf]
        %v538 = vld [vmem:[%s399 + $0xf0] sm:$0xf]
        %v539 = vld [vmem:[%s399 + $0xf4] sm:$0xf]
        %v540 = vld [vmem:[%s399 + $0xf8] sm:$0xf]
        %v541 = vld [vmem:[%s399 + $0xfc] sm:$0xf]
        %v542 = vld [vmem:[%s408] sm:$0xf]
        %v543 = vld [vmem:[%s408 + $0x4] sm:$0xf]
        %v544 = vld [vmem:[%s408 + $0x8] sm:$0xf]
        %v545 = vld [vmem:[%s408 + $0xc] sm:$0xf]
        %v546 = vld [vmem:[%s408 + $0x10] sm:$0xf]
        %v547 = vld [vmem:[%s408 + $0x14] sm:$0xf]
        %v548 = vld [vmem:[%s408 + $0x18] sm:$0xf]
        %v549 = vld [vmem:[%s408 + $0x1c] sm:$0xf]
        %v550 = vld [vmem:[%s408 + $0x20] sm:$0xf]
        %v551 = vld [vmem:[%s408 + $0x24] sm:$0xf]
        %v552 = vld [vmem:[%s408 + $0x28] sm:$0xf]
        %v553 = vld [vmem:[%s408 + $0x2c] sm:$0xf]
        %v554 = vld [vmem:[%s408 + $0x30] sm:$0xf]
        %v555 = vld [vmem:[%s408 + $0x34] sm:$0xf]
        %v556 = vld [vmem:[%s408 + $0x38] sm:$0xf]
        %v557 = vld [vmem:[%s408 + $0x3c] sm:$0xf]
        %v558 = vld [vmem:[%s408 + $0x40] sm:$0xf]
        %v559 = vld [vmem:[%s408 + $0x44] sm:$0xf]
        %v560 = vld [vmem:[%s408 + $0x48] sm:$0xf]
        %v561 = vld [vmem:[%s408 + $0x4c] sm:$0xf]
        %v562 = vld [vmem:[%s408 + $0x50] sm:$0xf]
        %v563 = vld [vmem:[%s408 + $0x54] sm:$0xf]
        %v564 = vld [vmem:[%s408 + $0x58] sm:$0xf]
        %v565 = vld [vmem:[%s408 + $0x5c] sm:$0xf]
        %v566 = vld [vmem:[%s408 + $0x60] sm:$0xf]
        %v567 = vld [vmem:[%s408 + $0x64] sm:$0xf]
        %v568 = vld [vmem:[%s408 + $0x68] sm:$0xf]
        %v569 = vld [vmem:[%s408 + $0x6c] sm:$0xf]
        %v570 = vld [vmem:[%s408 + $0x70] sm:$0xf]
        %v571 = vld [vmem:[%s408 + $0x74] sm:$0xf]
        %v572 = vld [vmem:[%s408 + $0x78] sm:$0xf]
        %v573 = vld [vmem:[%s408 + $0x7c] sm:$0xf]
        %v574 = vld [vmem:[%s408 + $0x80] sm:$0xf]
        %v575 = vld [vmem:[%s408 + $0x84] sm:$0xf]
        %v576 = vld [vmem:[%s408 + $0x88] sm:$0xf]
        %v577 = vld [vmem:[%s408 + $0x8c] sm:$0xf]
        %v578 = vld [vmem:[%s408 + $0x90] sm:$0xf]
        %v579 = vld [vmem:[%s408 + $0x94] sm:$0xf]
        %v580 = vld [vmem:[%s408 + $0x98] sm:$0xf]
        %v581 = vld [vmem:[%s408 + $0x9c] sm:$0xf]
        %v582 = vld [vmem:[%s408 + $0xa0] sm:$0xf]
        %v583 = vld [vmem:[%s408 + $0xa4] sm:$0xf]
        %v584 = vld [vmem:[%s408 + $0xa8] sm:$0xf]
        %v585 = vld [vmem:[%s408 + $0xac] sm:$0xf]
        %v586 = vld [vmem:[%s408 + $0xb0] sm:$0xf]
        %v587 = vld [vmem:[%s408 + $0xb4] sm:$0xf]
        %v588 = vld [vmem:[%s408 + $0xb8] sm:$0xf]
        %v589 = vld [vmem:[%s408 + $0xbc] sm:$0xf]
        %v590 = vld [vmem:[%s408 + $0xc0] sm:$0xf]
        %v591 = vld [vmem:[%s408 + $0xc4] sm:$0xf]
        %v592 = vld [vmem:[%s408 + $0xc8] sm:$0xf]
        %v593 = vld [vmem:[%s408 + $0xcc] sm:$0xf]
        %v594 = vld [vmem:[%s408 + $0xd0] sm:$0xf]
        %v595 = vld [vmem:[%s408 + $0xd4] sm:$0xf]
        %v596 = vld [vmem:[%s408 + $0xd8] sm:$0xf]
        %v597 = vld [vmem:[%s408 + $0xdc] sm:$0xf]
        %v598 = vld [vmem:[%s408 + $0xe0] sm:$0xf]
        %v599 = vld [vmem:[%s408 + $0xe4] sm:$0xf]
        %v600 = vld [vmem:[%s408 + $0xe8] sm:$0xf]
        %v601 = vld [vmem:[%s408 + $0xec] sm:$0xf]
        %v602 = vld [vmem:[%s408 + $0xf0] sm:$0xf]
        %v603 = vld [vmem:[%s408 + $0xf4] sm:$0xf]
        %v604 = vld [vmem:[%s408 + $0xf8] sm:$0xf]
        %v605 = vld [vmem:[%s408 + $0xfc] sm:$0xf]
        %v622 = vunpack.c.l.b16 %v478
        %v623 = vunpack.c.l.b16 %v479
        %v624 = vunpack.c.l.b16 %v480
        %v625 = vunpack.c.l.b16 %v481
        %v626 = vunpack.c.l.b16 %v482
        %v627 = vunpack.c.l.b16 %v483
        %v628 = vunpack.c.l.b16 %v484
        %v629 = vunpack.c.l.b16 %v485
        %v630 = vunpack.c.l.b16 %v486
        %v631 = vunpack.c.l.b16 %v487
        %v632 = vunpack.c.l.b16 %v488
        %v633 = vunpack.c.l.b16 %v489
        %v634 = vunpack.c.l.b16 %v490
        %v635 = vunpack.c.l.b16 %v491
        %v636 = vunpack.c.l.b16 %v492
        %v637 = vunpack.c.l.b16 %v493
        %v638 = vpack.c.b16 %v623, %v622
        %v639 = vpack.c.b16 %v625, %v624
        %v640 = vpack.c.b16 %v627, %v626
        %v641 = vpack.c.b16 %v629, %v628
        %v642 = vpack.c.b16 %v631, %v630
        %v643 = vpack.c.b16 %v633, %v632
        %v644 = vpack.c.b16 %v635, %v634
        %v645 = vpack.c.b16 %v637, %v636
        %v670 = vunpack.c.l.b16 %v542
        %v671 = vunpack.c.l.b16 %v543
        %v672 = vunpack.c.l.b16 %v544
        %v673 = vunpack.c.l.b16 %v545
        %v674 = vunpack.c.l.b16 %v546
        %v675 = vunpack.c.l.b16 %v547
        %v676 = vunpack.c.l.b16 %v548
        %v677 = vunpack.c.l.b16 %v549
        %v678 = vunpack.c.l.b16 %v550
        %v679 = vunpack.c.l.b16 %v551
        %v680 = vunpack.c.l.b16 %v552
        %v681 = vunpack.c.l.b16 %v553
        %v682 = vunpack.c.l.b16 %v554
        %v683 = vunpack.c.l.b16 %v555
        %v684 = vunpack.c.l.b16 %v556
        %v685 = vunpack.c.l.b16 %v557
        %v686 = vpack.c.b16 %v671, %v670
        %v687 = vpack.c.b16 %v673, %v672
        %v688 = vpack.c.b16 %v675, %v674
        %v689 = vpack.c.b16 %v677, %v676
        %v690 = vpack.c.b16 %v679, %v678
        %v691 = vpack.c.b16 %v681, %v680
        %v692 = vpack.c.b16 %v683, %v682
        %v693 = vpack.c.b16 %v685, %v684
        %702 = vmatprep.subr.bf16.mxu0 0
        %703 = vmatpush1.bf16.msra.mxu0 %v686
        %704 = vmatprep.subr.bf16.mxu0 0
        %705 = vmatpush1.bf16.msra.mxu0 %v687
        %706 = vmatprep.subr.bf16.mxu0 0
        %707 = vmatpush1.bf16.msra.mxu0 %v688
        %708 = vmatprep.subr.bf16.mxu0 0
        %709 = vmatpush1.bf16.msra.mxu0 %v689
        %710 = vmatprep.subr.bf16.mxu0 0
        %711 = vmatpush1.bf16.msra.mxu0 %v690
        %712 = vmatprep.subr.bf16.mxu0 0
        %713 = vmatpush1.bf16.msra.mxu0 %v691
        %714 = vmatprep.subr.bf16.mxu0 0
        %715 = vmatpush1.bf16.msra.mxu0 %v692
        %716 = vmatprep.subr.bf16.mxu0 0
        %717 = vmatpush1.bf16.msra.mxu0 %v693
        %718 = vmatprep.subr.bf16.mxu0 0
        %719 = vmatpush1.bf16.msra.mxu0 0
        %720 = vmatprep.subr.bf16.mxu0 0
        %721 = vmatpush1.bf16.msra.mxu0 0
        %722 = vmatprep.subr.bf16.mxu0 0
        %723 = vmatpush1.bf16.msra.mxu0 0
        %724 = vmatprep.subr.bf16.mxu0 0
        %725 = vmatpush1.bf16.msra.mxu0 0
        %726 = vmatprep.subr.bf16.mxu0 0
        %727 = vmatpush1.bf16.msra.mxu0 0
        %728 = vmatprep.subr.bf16.mxu0 0
        %729 = vmatpush1.bf16.msra.mxu0 0
        %730 = vmatprep.subr.bf16.mxu0 0
        %731 = vmatpush1.bf16.msra.mxu0 0
        %732 = vmatprep.subr.bf16.mxu0 0
        %733 = vmatpush1.bf16.msra.mxu0 0
        %734 = vmatprep.mubr.bf16.mxu0 0
        %735 = vmatmul.mubr.bf16.gmra.mrb[0].mxu0 %v638
        %v736 = vpop.f32.mrb[0].mxu0
        %v737 = vadd.f32 0.0, %v736
        %v738 = vpop.f32.mrb[0].mxu0
        %v739 = vpop.f32.mrb[0].mxu0
        %v740 = vadd.f32 0.0, %v739
        %v741 = vpop.f32.mrb[0].mxu0
        %742 = vmatprep.mubr.bf16.mxu0 0
        %743 = vmatmul.mubr.bf16.gmra.mrb[0].mxu0 %v639
        %v744 = vpop.f32.mrb[0].mxu0
        %v745 = vadd.f32 0.0, %v744
        %v746 = vpop.f32.mrb[0].mxu0
        %v747 = vpop.f32.mrb[0].mxu0
        %v748 = vadd.f32 0.0, %v747
        %v749 = vpop.f32.mrb[0].mxu0
        %750 = vmatprep.mubr.bf16.mxu0 0
        %751 = vmatmul.mubr.bf16.gmra.mrb[0].mxu0 %v640
        %v752 = vpop.f32.mrb[0].mxu0
        %v753 = vadd.f32 0.0, %v752
        %v754 = vpop.f32.mrb[0].mxu0
        %v755 = vpop.f32.mrb[0].mxu0
        %v756 = vadd.f32 0.0, %v755
        %v757 = vpop.f32.mrb[0].mxu0
        %758 = vmatprep.mubr.bf16.mxu0 0
        %759 = vmatmul.mubr.bf16.gmra.mrb[0].mxu0 %v641
        %v760 = vpop.f32.mrb[0].mxu0
        %v761 = vadd.f32 0.0, %v760
        %v762 = vpop.f32.mrb[0].mxu0
        %v763 = vpop.f32.mrb[0].mxu0
        %v764 = vadd.f32 0.0, %v763
        %v765 = vpop.f32.mrb[0].mxu0
        %766 = vmatprep.mubr.bf16.mxu0 0
        %767 = vmatmul.mubr.bf16.gmra.mrb[0].mxu0 %v642
        %v768 = vpop.f32.mrb[0].mxu0
        %v769 = vadd.f32 0.0, %v768
        %v770 = vpop.f32.mrb[0].mxu0
        %v771 = vpop.f32.mrb[0].mxu0
        %v772 = vadd.f32 0.0, %v771
        %v773 = vpop.f32.mrb[0].mxu0
        %774 = vmatprep.mubr.bf16.mxu0 0
        %775 = vmatmul.mubr.bf16.gmra.mrb[0].mxu0 %v643
        %v776 = vpop.f32.mrb[0].mxu0
        %v777 = vadd.f32 0.0, %v776
        %v778 = vpop.f32.mrb[0].mxu0
        %v779 = vpop.f32.mrb[0].mxu0
        %v780 = vadd.f32 0.0, %v779
        %v781 = vpop.f32.mrb[0].mxu0
        %782 = vmatprep.mubr.bf16.mxu0 0
        %783 = vmatmul.mubr.bf16.gmra.mrb[0].mxu0 %v644
        %v784 = vpop.f32.mrb[0].mxu0
        %v785 = vadd.f32 0.0, %v784
        %v786 = vpop.f32.mrb[0].mxu0
        %v787 = vpop.f32.mrb[0].mxu0
        %v788 = vadd.f32 0.0, %v787
        %v789 = vpop.f32.mrb[0].mxu0
        %790 = vmatprep.mubr.bf16.mxu0 0
        %791 = vmatmul.mubr.bf16.gmra.mrb[0].mxu0 %v645
        %v792 = vpop.f32.mrb[0].mxu0
        %v793 = vadd.f32 0.0, %v792
        %v794 = vpop.f32.mrb[0].mxu0
        %v795 = vpop.f32.mrb[0].mxu0
        %v796 = vadd.f32 0.0, %v795
        %v797 = vpop.f32.mrb[0].mxu0
        %798 = vdwg.mxu0
        %v815 = vunpack.c.l.b16 %v494
        %v816 = vunpack.c.l.b16 %v495
        %v817 = vunpack.c.l.b16 %v496
        %v818 = vunpack.c.l.b16 %v497
        %v819 = vunpack.c.l.b16 %v498
        %v820 = vunpack.c.l.b16 %v499
        %v821 = vunpack.c.l.b16 %v500
        %v822 = vunpack.c.l.b16 %v501
        %v823 = vunpack.c.l.b16 %v502
        %v824 = vunpack.c.l.b16 %v503
        %v825 = vunpack.c.l.b16 %v504
        %v826 = vunpack.c.l.b16 %v505
        %v827 = vunpack.c.l.b16 %v506
        %v828 = vunpack.c.l.b16 %v507
        %v829 = vunpack.c.l.b16 %v508
        %v830 = vunpack.c.l.b16 %v509
        %v831 = vpack.c.b16 %v816, %v815
        %v832 = vpack.c.b16 %v818, %v817
        %v833 = vpack.c.b16 %v820, %v819
        %v834 = vpack.c.b16 %v822, %v821
        %v835 = vpack.c.b16 %v824, %v823
        %v836 = vpack.c.b16 %v826, %v825
        %v837 = vpack.c.b16 %v828, %v827
        %v838 = vpack.c.b16 %v830, %v829
        %v863 = vunpack.c.l.b16 %v558
        %v864 = vunpack.c.l.b16 %v559
        %v865 = vunpack.c.l.b16 %v560
        %v866 = vunpack.c.l.b16 %v561
        %v867 = vunpack.c.l.b16 %v562
        %v868 = vunpack.c.l.b16 %v563
        %v869 = vunpack.c.l.b16 %v564
        %v870 = vunpack.c.l.b16 %v565
        %v871 = vunpack.c.l.b16 %v566
        %v872 = vunpack.c.l.b16 %v567
        %v873 = vunpack.c.l.b16 %v568
        %v874 = vunpack.c.l.b16 %v569
        %v875 = vunpack.c.l.b16 %v570
        %v876 = vunpack.c.l.b16 %v571
        %v877 = vunpack.c.l.b16 %v572
        %v878 = vunpack.c.l.b16 %v573
        %v879 = vpack.c.b16 %v864, %v863
        %v880 = vpack.c.b16 %v866, %v865
        %v881 = vpack.c.b16 %v868, %v867
        %v882 = vpack.c.b16 %v870, %v869
        %v883 = vpack.c.b16 %v872, %v871
        %v884 = vpack.c.b16 %v874, %v873
        %v885 = vpack.c.b16 %v876, %v875
        %v886 = vpack.c.b16 %v878, %v877
        %895 = vmatprep.subr.bf16.mxu0 0
        %896 = vmatpush1.bf16.msra.mxu0 %v879
        %897 = vmatprep.subr.bf16.mxu0 0
        %898 = vmatpush1.bf16.msra.mxu0 %v880
        %899 = vmatprep.subr.bf16.mxu0 0
        %900 = vmatpush1.bf16.msra.mxu0 %v881
        %901 = vmatprep.subr.bf16.mxu0 0
        %902 = vmatpush1.bf16.msra.mxu0 %v882
        %903 = vmatprep.subr.bf16.mxu0 0
        %904 = vmatpush1.bf16.msra.mxu0 %v883
        %905 = vmatprep.subr.bf16.mxu0 0
        %906 = vmatpush1.bf16.msra.mxu0 %v884
        %907 = vmatprep.subr.bf16.mxu0 0
        %908 = vmatpush1.bf16.msra.mxu0 %v885
        %909 = vmatprep.subr.bf16.mxu0 0
        %910 = vmatpush1.bf16.msra.mxu0 %v886
        %911 = vmatprep.subr.bf16.mxu0 0
        %912 = vmatpush1.bf16.msra.mxu0 0
        %913 = vmatprep.subr.bf16.mxu0 0
        %914 = vmatpush1.bf16.msra.mxu0 0
        %915 = vmatprep.subr.bf16.mxu0 0
        %916 = vmatpush1.bf16.msra.mxu0 0
        %917 = vmatprep.subr.bf16.mxu0 0
        %918 = vmatpush1.bf16.msra.mxu0 0
        %919 = vmatprep.subr.bf16.mxu0 0
        %920 = vmatpush1.bf16.msra.mxu0 0
        %921 = vmatprep.subr.bf16.mxu0 0
        %922 = vmatpush1.bf16.msra.mxu0 0
        %923 = vmatprep.subr.bf16.mxu0 0
        %924 = vmatpush1.bf16.msra.mxu0 0
        %925 = vmatprep.subr.bf16.mxu0 0
        %926 = vmatpush1.bf16.msra.mxu0 0
        %927 = vmatprep.mubr.bf16.mxu0 0
        %928 = vmatmul.mubr.bf16.gmra.mrb[0].mxu0 %v831
        %v929 = vpop.f32.mrb[0].mxu0
        %v930 = vadd.f32 0.0, %v929
        %v931 = vpop.f32.mrb[0].mxu0
        %v932 = vpop.f32.mrb[0].mxu0
        %v933 = vadd.f32 0.0, %v932
        %v934 = vpop.f32.mrb[0].mxu0
        %935 = vmatprep.mubr.bf16.mxu0 0
        %936 = vmatmul.mubr.bf16.gmra.mrb[0].mxu0 %v832
        %v937 = vpop.f32.mrb[0].mxu0
        %v938 = vadd.f32 0.0, %v937
        %v939 = vpop.f32.mrb[0].mxu0
        %v940 = vpop.f32.mrb[0].mxu0
        %v941 = vadd.f32 0.0, %v940
        %v942 = vpop.f32.mrb[0].mxu0
        %943 = vmatprep.mubr.bf16.mxu0 0
        %944 = vmatmul.mubr.bf16.gmra.mrb[0].mxu0 %v833
        %v945 = vpop.f32.mrb[0].mxu0
        %v946 = vadd.f32 0.0, %v945
        %v947 = vpop.f32.mrb[0].mxu0
        %v948 = vpop.f32.mrb[0].mxu0
        %v949 = vadd.f32 0.0, %v948
        %v950 = vpop.f32.mrb[0].mxu0
        %951 = vmatprep.mubr.bf16.mxu0 0
        %952 = vmatmul.mubr.bf16.gmra.mrb[0].mxu0 %v834
        %v953 = vpop.f32.mrb[0].mxu0
        %v954 = vadd.f32 0.0, %v953
        %v955 = vpop.f32.mrb[0].mxu0
        %v956 = vpop.f32.mrb[0].mxu0
        %v957 = vadd.f32 0.0, %v956
        %v958 = vpop.f32.mrb[0].mxu0
        %959 = vmatprep.mubr.bf16.mxu0 0
        %960 = vmatmul.mubr.bf16.gmra.mrb[0].mxu0 %v835
        %v961 = vpop.f32.mrb[0].mxu0
        %v962 = vadd.f32 0.0, %v961
        %v963 = vpop.f32.mrb[0].mxu0
        %v964 = vpop.f32.mrb[0].mxu0
        %v965 = vadd.f32 0.0, %v964
        %v966 = vpop.f32.mrb[0].mxu0
        %967 = vmatprep.mubr.bf16.mxu0 0
        %968 = vmatmul.mubr.bf16.gmra.mrb[0].mxu0 %v836
        %v969 = vpop.f32.mrb[0].mxu0
        %v970 = vadd.f32 0.0, %v969
        %v971 = vpop.f32.mrb[0].mxu0
        %v972 = vpop.f32.mrb[0].mxu0
        %v973 = vadd.f32 0.0, %v972
        %v974 = vpop.f32.mrb[0].mxu0
        %975 = vmatprep.mubr.bf16.mxu0 0
        %976 = vmatmul.mubr.bf16.gmra.mrb[0].mxu0 %v837
        %v977 = vpop.f32.mrb[0].mxu0
        %v978 = vadd.f32 0.0, %v977
        %v979 = vpop.f32.mrb[0].mxu0
        %v980 = vpop.f32.mrb[0].mxu0
        %v981 = vadd.f32 0.0, %v980
        %v982 = vpop.f32.mrb[0].mxu0
        %983 = vmatprep.mubr.bf16.mxu0 0
        %984 = vmatmul.mubr.bf16.gmra.mrb[0].mxu0 %v838
        %v985 = vpop.f32.mrb[0].mxu0
        %v986 = vadd.f32 0.0, %v985
        %v987 = vpop.f32.mrb[0].mxu0
        %v988 = vpop.f32.mrb[0].mxu0
        %v989 = vadd.f32 0.0, %v988
        %v990 = vpop.f32.mrb[0].mxu0
        %991 = vdwg.mxu0
        %v1008 = vunpack.c.l.b16 %v510
        %v1009 = vunpack.c.l.b16 %v511
        %v1010 = vunpack.c.l.b16 %v512
        %v1011 = vunpack.c.l.b16 %v513
        %v1012 = vunpack.c.l.b16 %v514
        %v1013 = vunpack.c.l.b16 %v515
        %v1014 = vunpack.c.l.b16 %v516
        %v1015 = vunpack.c.l.b16 %v517
        %v1016 = vunpack.c.l.b16 %v518
        %v1017 = vunpack.c.l.b16 %v519
        %v1018 = vunpack.c.l.b16 %v520
        %v1019 = vunpack.c.l.b16 %v521
        %v1020 = vunpack.c.l.b16 %v522
        %v1021 = vunpack.c.l.b16 %v523
        %v1022 = vunpack.c.l.b16 %v524
        %v1023 = vunpack.c.l.b16 %v525
        %v1024 = vpack.c.b16 %v1009, %v1008
        %v1025 = vpack.c.b16 %v1011, %v1010
        %v1026 = vpack.c.b16 %v1013, %v1012
        %v1027 = vpack.c.b16 %v1015, %v1014
        %v1028 = vpack.c.b16 %v1017, %v1016
        %v1029 = vpack.c.b16 %v1019, %v1018
        %v1030 = vpack.c.b16 %v1021, %v1020
        %v1031 = vpack.c.b16 %v1023, %v1022
        %v1056 = vunpack.c.l.b16 %v574
        %v1057 = vunpack.c.l.b16 %v575
        %v1058 = vunpack.c.l.b16 %v576
        %v1059 = vunpack.c.l.b16 %v577
        %v1060 = vunpack.c.l.b16 %v578
        %v1061 = vunpack.c.l.b16 %v579
        %v1062 = vunpack.c.l.b16 %v580
        %v1063 = vunpack.c.l.b16 %v581
        %v1064 = vunpack.c.l.b16 %v582
        %v1065 = vunpack.c.l.b16 %v583
        %v1066 = vunpack.c.l.b16 %v584
        %v1067 = vunpack.c.l.b16 %v585
        %v1068 = vunpack.c.l.b16 %v586
        %v1069 = vunpack.c.l.b16 %v587
        %v1070 = vunpack.c.l.b16 %v588
        %v1071 = vunpack.c.l.b16 %v589
        %v1072 = vpack.c.b16 %v1057, %v1056
        %v1073 = vpack.c.b16 %v1059, %v1058
        %v1074 = vpack.c.b16 %v1061, %v1060
        %v1075 = vpack.c.b16 %v1063, %v1062
        %v1076 = vpack.c.b16 %v1065, %v1064
        %v1077 = vpack.c.b16 %v1067, %v1066
        %v1078 = vpack.c.b16 %v1069, %v1068
        %v1079 = vpack.c.b16 %v1071, %v1070
        %1088 = vmatprep.subr.bf16.mxu0 0
        %1089 = vmatpush1.bf16.msra.mxu0 %v1072
        %1090 = vmatprep.subr.bf16.mxu0 0
        %1091 = vmatpush1.bf16.msra.mxu0 %v1073
        %1092 = vmatprep.subr.bf16.mxu0 0
        %1093 = vmatpush1.bf16.msra.mxu0 %v1074
        %1094 = vmatprep.subr.bf16.mxu0 0
        %1095 = vmatpush1.bf16.msra.mxu0 %v1075
        %1096 = vmatprep.subr.bf16.mxu0 0
        %1097 = vmatpush1.bf16.msra.mxu0 %v1076
        %1098 = vmatprep.subr.bf16.mxu0 0
        %1099 = vmatpush1.bf16.msra.mxu0 %v1077
        %1100 = vmatprep.subr.bf16.mxu0 0
        %1101 = vmatpush1.bf16.msra.mxu0 %v1078
        %1102 = vmatprep.subr.bf16.mxu0 0
        %1103 = vmatpush1.bf16.msra.mxu0 %v1079
        %1104 = vmatprep.subr.bf16.mxu0 0
        %1105 = vmatpush1.bf16.msra.mxu0 0
        %1106 = vmatprep.subr.bf16.mxu0 0
        %1107 = vmatpush1.bf16.msra.mxu0 0
        %1108 = vmatprep.subr.bf16.mxu0 0
        %1109 = vmatpush1.bf16.msra.mxu0 0
        %1110 = vmatprep.subr.bf16.mxu0 0
        %1111 = vmatpush1.bf16.msra.mxu0 0
        %1112 = vmatprep.subr.bf16.mxu0 0
        %1113 = vmatpush1.bf16.msra.mxu0 0
        %1114 = vmatprep.subr.bf16.mxu0 0
        %1115 = vmatpush1.bf16.msra.mxu0 0
        %1116 = vmatprep.subr.bf16.mxu0 0
        %1117 = vmatpush1.bf16.msra.mxu0 0
        %1118 = vmatprep.subr.bf16.mxu0 0
        %1119 = vmatpush1.bf16.msra.mxu0 0
        %1120 = vmatprep.mubr.bf16.mxu0 0
        %1121 = vmatmul.mubr.bf16.gmra.mrb[0].mxu0 %v1024
        %v1122 = vpop.f32.mrb[0].mxu0
        %v1123 = vadd.f32 0.0, %v1122
        %v1124 = vpop.f32.mrb[0].mxu0
        %v1125 = vpop.f32.mrb[0].mxu0
        %v1126 = vadd.f32 0.0, %v1125
        %v1127 = vpop.f32.mrb[0].mxu0
        %1128 = vmatprep.mubr.bf16.mxu0 0
        %1129 = vmatmul.mubr.bf16.gmra.mrb[0].mxu0 %v1025
        %v1130 = vpop.f32.mrb[0].mxu0
        %v1131 = vadd.f32 0.0, %v1130
        %v1132 = vpop.f32.mrb[0].mxu0
        %v1133 = vpop.f32.mrb[0].mxu0
        %v1134 = vadd.f32 0.0, %v1133
        %v1135 = vpop.f32.mrb[0].mxu0
        %1136 = vmatprep.mubr.bf16.mxu0 0
        %1137 = vmatmul.mubr.bf16.gmra.mrb[0].mxu0 %v1026
        %v1138 = vpop.f32.mrb[0].mxu0
        %v1139 = vadd.f32 0.0, %v1138
        %v1140 = vpop.f32.mrb[0].mxu0
        %v1141 = vpop.f32.mrb[0].mxu0
        %v1142 = vadd.f32 0.0, %v1141
        %v1143 = vpop.f32.mrb[0].mxu0
        %1144 = vmatprep.mubr.bf16.mxu0 0
        %1145 = vmatmul.mubr.bf16.gmra.mrb[0].mxu0 %v1027
        %v1146 = vpop.f32.mrb[0].mxu0
        %v1147 = vadd.f32 0.0, %v1146
        %v1148 = vpop.f32.mrb[0].mxu0
        %v1149 = vpop.f32.mrb[0].mxu0
        %v1150 = vadd.f32 0.0, %v1149
        %v1151 = vpop.f32.mrb[0].mxu0
        %1152 = vmatprep.mubr.bf16.mxu0 0
        %1153 = vmatmul.mubr.bf16.gmra.mrb[0].mxu0 %v1028
        %v1154 = vpop.f32.mrb[0].mxu0
        %v1155 = vadd.f32 0.0, %v1154
        %v1156 = vpop.f32.mrb[0].mxu0
        %v1157 = vpop.f32.mrb[0].mxu0
        %v1158 = vadd.f32 0.0, %v1157
        %v1159 = vpop.f32.mrb[0].mxu0
        %1160 = vmatprep.mubr.bf16.mxu0 0
        %1161 = vmatmul.mubr.bf16.gmra.mrb[0].mxu0 %v1029
        %v1162 = vpop.f32.mrb[0].mxu0
        %v1163 = vadd.f32 0.0, %v1162
        %v1164 = vpop.f32.mrb[0].mxu0
        %v1165 = vpop.f32.mrb[0].mxu0
        %v1166 = vadd.f32 0.0, %v1165
        %v1167 = vpop.f32.mrb[0].mxu0
        %1168 = vmatprep.mubr.bf16.mxu0 0
        %1169 = vmatmul.mubr.bf16.gmra.mrb[0].mxu0 %v1030
        %v1170 = vpop.f32.mrb[0].mxu0
        %v1171 = vadd.f32 0.0, %v1170
        %v1172 = vpop.f32.mrb[0].mxu0
        %v1173 = vpop.f32.mrb[0].mxu0
        %v1174 = vadd.f32 0.0, %v1173
        %v1175 = vpop.f32.mrb[0].mxu0
        %1176 = vmatprep.mubr.bf16.mxu0 0
        %1177 = vmatmul.mubr.bf16.gmra.mrb[0].mxu0 %v1031
        %v1178 = vpop.f32.mrb[0].mxu0
        %v1179 = vadd.f32 0.0, %v1178
        %v1180 = vpop.f32.mrb[0].mxu0
        %v1181 = vpop.f32.mrb[0].mxu0
        %v1182 = vadd.f32 0.0, %v1181
        %v1183 = vpop.f32.mrb[0].mxu0
        %1184 = vdwg.mxu0
        %v1201 = vunpack.c.l.b16 %v526
        %v1202 = vunpack.c.l.b16 %v527
        %v1203 = vunpack.c.l.b16 %v528
        %v1204 = vunpack.c.l.b16 %v529
        %v1205 = vunpack.c.l.b16 %v530
        %v1206 = vunpack.c.l.b16 %v531
        %v1207 = vunpack.c.l.b16 %v532
        %v1208 = vunpack.c.l.b16 %v533
        %v1209 = vunpack.c.l.b16 %v534
        %v1210 = vunpack.c.l.b16 %v535
        %v1211 = vunpack.c.l.b16 %v536
        %v1212 = vunpack.c.l.b16 %v537
        %v1213 = vunpack.c.l.b16 %v538
        %v1214 = vunpack.c.l.b16 %v539
        %v1215 = vunpack.c.l.b16 %v540
        %v1216 = vunpack.c.l.b16 %v541
        %v1217 = vpack.c.b16 %v1202, %v1201
        %v1218 = vpack.c.b16 %v1204, %v1203
        %v1219 = vpack.c.b16 %v1206, %v1205
        %v1220 = vpack.c.b16 %v1208, %v1207
        %v1221 = vpack.c.b16 %v1210, %v1209
        %v1222 = vpack.c.b16 %v1212, %v1211
        %v1223 = vpack.c.b16 %v1214, %v1213
        %v1224 = vpack.c.b16 %v1216, %v1215
        %v1249 = vunpack.c.l.b16 %v590
        %v1250 = vunpack.c.l.b16 %v591
        %v1251 = vunpack.c.l.b16 %v592
        %v1252 = vunpack.c.l.b16 %v593
        %v1253 = vunpack.c.l.b16 %v594
        %v1254 = vunpack.c.l.b16 %v595
        %v1255 = vunpack.c.l.b16 %v596
        %v1256 = vunpack.c.l.b16 %v597
        %v1257 = vunpack.c.l.b16 %v598
        %v1258 = vunpack.c.l.b16 %v599
        %v1259 = vunpack.c.l.b16 %v600
        %v1260 = vunpack.c.l.b16 %v601
        %v1261 = vunpack.c.l.b16 %v602
        %v1262 = vunpack.c.l.b16 %v603
        %v1263 = vunpack.c.l.b16 %v604
        %v1264 = vunpack.c.l.b16 %v605
        %v1265 = vpack.c.b16 %v1250, %v1249
        %v1266 = vpack.c.b16 %v1252, %v1251
        %v1267 = vpack.c.b16 %v1254, %v1253
        %v1268 = vpack.c.b16 %v1256, %v1255
        %v1269 = vpack.c.b16 %v1258, %v1257
        %v1270 = vpack.c.b16 %v1260, %v1259
        %v1271 = vpack.c.b16 %v1262, %v1261
        %v1272 = vpack.c.b16 %v1264, %v1263
        %1281 = vmatprep.subr.bf16.mxu0 0
        %1282 = vmatpush1.bf16.msra.mxu0 %v1265
        %1283 = vmatprep.subr.bf16.mxu0 0
        %1284 = vmatpush1.bf16.msra.mxu0 %v1266
        %1285 = vmatprep.subr.bf16.mxu0 0
        %1286 = vmatpush1.bf16.msra.mxu0 %v1267
        %1287 = vmatprep.subr.bf16.mxu0 0
        %1288 = vmatpush1.bf16.msra.mxu0 %v1268
        %1289 = vmatprep.subr.bf16.mxu0 0
        %1290 = vmatpush1.bf16.msra.mxu0 %v1269
        %1291 = vmatprep.subr.bf16.mxu0 0
        %1292 = vmatpush1.bf16.msra.mxu0 %v1270
        %1293 = vmatprep.subr.bf16.mxu0 0
        %1294 = vmatpush1.bf16.msra.mxu0 %v1271
        %1295 = vmatprep.subr.bf16.mxu0 0
        %1296 = vmatpush1.bf16.msra.mxu0 %v1272
        %1297 = vmatprep.subr.bf16.mxu0 0
        %1298 = vmatpush1.bf16.msra.mxu0 0
        %1299 = vmatprep.subr.bf16.mxu0 0
        %1300 = vmatpush1.bf16.msra.mxu0 0
        %1301 = vmatprep.subr.bf16.mxu0 0
        %1302 = vmatpush1.bf16.msra.mxu0 0
        %1303 = vmatprep.subr.bf16.mxu0 0
        %1304 = vmatpush1.bf16.msra.mxu0 0
        %1305 = vmatprep.subr.bf16.mxu0 0
        %1306 = vmatpush1.bf16.msra.mxu0 0
        %1307 = vmatprep.subr.bf16.mxu0 0
        %1308 = vmatpush1.bf16.msra.mxu0 0
        %1309 = vmatprep.subr.bf16.mxu0 0
        %1310 = vmatpush1.bf16.msra.mxu0 0
        %1311 = vmatprep.subr.bf16.mxu0 0
        %1312 = vmatpush1.bf16.msra.mxu0 0
        %1313 = vmatprep.mubr.bf16.mxu0 0
        %1314 = vmatmul.mubr.bf16.gmra.mrb[0].mxu0 %v1217
        %v1315 = vpop.f32.mrb[0].mxu0
        %v1316 = vadd.f32 0.0, %v1315
        %v1317 = vpop.f32.mrb[0].mxu0
        %v1318 = vpop.f32.mrb[0].mxu0
        %v1319 = vadd.f32 0.0, %v1318
        %v1320 = vpop.f32.mrb[0].mxu0
        %1321 = vmatprep.mubr.bf16.mxu0 0
        %1322 = vmatmul.mubr.bf16.gmra.mrb[0].mxu0 %v1218
        %v1323 = vpop.f32.mrb[0].mxu0
        %v1324 = vadd.f32 0.0, %v1323
        %v1325 = vpop.f32.mrb[0].mxu0
        %v1326 = vpop.f32.mrb[0].mxu0
        %v1327 = vadd.f32 0.0, %v1326
        %v1328 = vpop.f32.mrb[0].mxu0
        %1329 = vmatprep.mubr.bf16.mxu0 0
        %1330 = vmatmul.mubr.bf16.gmra.mrb[0].mxu0 %v1219
        %v1331 = vpop.f32.mrb[0].mxu0
        %v1332 = vadd.f32 0.0, %v1331
        %v1333 = vpop.f32.mrb[0].mxu0
        %v1334 = vpop.f32.mrb[0].mxu0
        %v1335 = vadd.f32 0.0, %v1334
        %v1336 = vpop.f32.mrb[0].mxu0
        %1337 = vmatprep.mubr.bf16.mxu0 0
        %1338 = vmatmul.mubr.bf16.gmra.mrb[0].mxu0 %v1220
        %v1339 = vpop.f32.mrb[0].mxu0
        %v1340 = vadd.f32 0.0, %v1339
        %v1341 = vpop.f32.mrb[0].mxu0
        %v1342 = vpop.f32.mrb[0].mxu0
        %v1343 = vadd.f32 0.0, %v1342
        %v1344 = vpop.f32.mrb[0].mxu0
        %1345 = vmatprep.mubr.bf16.mxu0 0
        %1346 = vmatmul.mubr.bf16.gmra.mrb[0].mxu0 %v1221
        %v1347 = vpop.f32.mrb[0].mxu0
        %v1348 = vadd.f32 0.0, %v1347
        %v1349 = vpop.f32.mrb[0].mxu0
        %v1350 = vpop.f32.mrb[0].mxu0
        %v1351 = vadd.f32 0.0, %v1350
        %v1352 = vpop.f32.mrb[0].mxu0
        %1353 = vmatprep.mubr.bf16.mxu0 0
        %1354 = vmatmul.mubr.bf16.gmra.mrb[0].mxu0 %v1222
        %v1355 = vpop.f32.mrb[0].mxu0
        %v1356 = vadd.f32 0.0, %v1355
        %v1357 = vpop.f32.mrb[0].mxu0
        %v1358 = vpop.f32.mrb[0].mxu0
        %v1359 = vadd.f32 0.0, %v1358
        %v1360 = vpop.f32.mrb[0].mxu0
        %1361 = vmatprep.mubr.bf16.mxu0 0
        %1362 = vmatmul.mubr.bf16.gmra.mrb[0].mxu0 %v1223
        %v1363 = vpop.f32.mrb[0].mxu0
        %v1364 = vadd.f32 0.0, %v1363
        %v1365 = vpop.f32.mrb[0].mxu0
        %v1366 = vpop.f32.mrb[0].mxu0
        %v1367 = vadd.f32 0.0, %v1366
        %v1368 = vpop.f32.mrb[0].mxu0
        %1369 = vmatprep.mubr.bf16.mxu0 0
        %1370 = vmatmul.mubr.bf16.gmra.mrb[0].mxu0 %v1224
        %v1371 = vpop.f32.mrb[0].mxu0
        %v1372 = vadd.f32 0.0, %v1371
        %v1373 = vpop.f32.mrb[0].mxu0
        %v1374 = vpop.f32.mrb[0].mxu0
        %v1375 = vadd.f32 0.0, %v1374
        %v1376 = vpop.f32.mrb[0].mxu0
        %1377 = vdwg.mxu0
        %v1378 = vpack.c.bf16 %v740, %v737
        %v1379 = vpack.c.bf16 %v748, %v745
        %v1380 = vpack.c.bf16 %v756, %v753
        %v1381 = vpack.c.bf16 %v764, %v761
        %v1382 = vpack.c.bf16 %v772, %v769
        %v1383 = vpack.c.bf16 %v780, %v777
        %v1384 = vpack.c.bf16 %v788, %v785
        %v1385 = vpack.c.bf16 %v796, %v793
        %v1386 = vpack.c.bf16 %v933, %v930
        %v1387 = vpack.c.bf16 %v941, %v938
        %v1388 = vpack.c.bf16 %v949, %v946
        %v1389 = vpack.c.bf16 %v957, %v954
        %v1390 = vpack.c.bf16 %v965, %v962
        %v1391 = vpack.c.bf16 %v973, %v970
        %v1392 = vpack.c.bf16 %v981, %v978
        %v1393 = vpack.c.bf16 %v989, %v986
        %v1394 = vpack.c.bf16 %v1126, %v1123
        %v1395 = vpack.c.bf16 %v1134, %v1131
        %v1396 = vpack.c.bf16 %v1142, %v1139
        %v1397 = vpack.c.bf16 %v1150, %v1147
        %v1398 = vpack.c.bf16 %v1158, %v1155
        %v1399 = vpack.c.bf16 %v1166, %v1163
        %v1400 = vpack.c.bf16 %v1174, %v1171
        %v1401 = vpack.c.bf16 %v1182, %v1179
        %v1402 = vpack.c.bf16 %v1319, %v1316
        %v1403 = vpack.c.bf16 %v1327, %v1324
        %v1404 = vpack.c.bf16 %v1335, %v1332
        %v1405 = vpack.c.bf16 %v1343, %v1340
        %v1406 = vpack.c.bf16 %v1351, %v1348
        %v1407 = vpack.c.bf16 %v1359, %v1356
        %v1408 = vpack.c.bf16 %v1367, %v1364
        %v1409 = vpack.c.bf16 %v1375, %v1372
        %v1410 = vld [vmem:[#allocation8] sm:$0xf]
        %v1411 = vld [vmem:[#allocation8 + $0x4] sm:$0xf]
        %v1412 = vld [vmem:[#allocation8 + $0x8] sm:$0xf]
        %v1413 = vld [vmem:[#allocation8 + $0xc] sm:$0xf]
        %v1414 = vld [vmem:[#allocation8 + $0x10] sm:$0xf]
        %v1415 = vld [vmem:[#allocation8 + $0x14] sm:$0xf]
        %v1416 = vld [vmem:[#allocation8 + $0x18] sm:$0xf]
        %v1417 = vld [vmem:[#allocation8 + $0x1c] sm:$0xf]
        %v1418 = vld [vmem:[#allocation8 + $0x20] sm:$0xf]
        %v1419 = vld [vmem:[#allocation8 + $0x24] sm:$0xf]
        %v1420 = vld [vmem:[#allocation8 + $0x28] sm:$0xf]
        %v1421 = vld [vmem:[#allocation8 + $0x2c] sm:$0xf]
        %v1422 = vld [vmem:[#allocation8 + $0x30] sm:$0xf]
        %v1423 = vld [vmem:[#allocation8 + $0x34] sm:$0xf]
        %v1424 = vld [vmem:[#allocation8 + $0x38] sm:$0xf]
        %v1425 = vld [vmem:[#allocation8 + $0x3c] sm:$0xf]
        %v1426 = vld [vmem:[%s4] sm:$0x1]
        %v1428 = vlaneseq
        %v1429 = vshrl.u32 %v1428, 7
        %v1430 = vsub.s32 0, %v1429
        %v1431 = vrot.slane %v1426, %v1430
        %v1449 = vunpack.c.l.b16 %v1410
        %v1450 = vunpack.c.l.b16 %v1411
        %v1451 = vunpack.c.l.b16 %v1412
        %v1452 = vunpack.c.l.b16 %v1413
        %v1453 = vunpack.c.l.b16 %v1414
        %v1454 = vunpack.c.l.b16 %v1415
        %v1455 = vunpack.c.l.b16 %v1416
        %v1456 = vunpack.c.l.b16 %v1417
        %v1457 = vunpack.c.l.b16 %v1418
        %v1458 = vunpack.c.l.b16 %v1419
        %v1459 = vunpack.c.l.b16 %v1420
        %v1460 = vunpack.c.l.b16 %v1421
        %v1461 = vunpack.c.l.b16 %v1422
        %v1462 = vunpack.c.l.b16 %v1423
        %v1463 = vunpack.c.l.b16 %v1424
        %v1464 = vunpack.c.l.b16 %v1425
        %v1465 = vpack.c.b16 %v1450, %v1449
        %v1466 = vpack.c.b16 %v1452, %v1451
        %v1467 = vpack.c.b16 %v1454, %v1453
        %v1468 = vpack.c.b16 %v1456, %v1455
        %v1469 = vpack.c.b16 %v1458, %v1457
        %v1470 = vpack.c.b16 %v1460, %v1459
        %v1471 = vpack.c.b16 %v1462, %v1461
        %v1472 = vpack.c.b16 %v1464, %v1463
        %1481 = vmatprep.subr.bf16.mxu0 0
        %1482 = vmatpush1.bf16.msra.mxu0 %v1465
        %1483 = vmatprep.subr.bf16.mxu0 0
        %1484 = vmatpush1.bf16.msra.mxu0 %v1466
        %1485 = vmatprep.subr.bf16.mxu0 0
        %1486 = vmatpush1.bf16.msra.mxu0 %v1467
        %1487 = vmatprep.subr.bf16.mxu0 0
        %1488 = vmatpush1.bf16.msra.mxu0 %v1468
        %1489 = vmatprep.subr.bf16.mxu0 0
        %1490 = vmatpush1.bf16.msra.mxu0 %v1469
        %1491 = vmatprep.subr.bf16.mxu0 0
        %1492 = vmatpush1.bf16.msra.mxu0 %v1470
        %1493 = vmatprep.subr.bf16.mxu0 0
        %1494 = vmatpush1.bf16.msra.mxu0 %v1471
        %1495 = vmatprep.subr.bf16.mxu0 0
        %1496 = vmatpush1.bf16.msra.mxu0 %v1472
        %1497 = vmatprep.subr.bf16.mxu0 0
        %1498 = vmatpush1.bf16.msra.mxu0 0
        %1499 = vmatprep.subr.bf16.mxu0 0
        %1500 = vmatpush1.bf16.msra.mxu0 0
        %1501 = vmatprep.subr.bf16.mxu0 0
        %1502 = vmatpush1.bf16.msra.mxu0 0
        %1503 = vmatprep.subr.bf16.mxu0 0
        %1504 = vmatpush1.bf16.msra.mxu0 0
        %1505 = vmatprep.subr.bf16.mxu0 0
        %1506 = vmatpush1.bf16.msra.mxu0 0
        %1507 = vmatprep.subr.bf16.mxu0 0
        %1508 = vmatpush1.bf16.msra.mxu0 0
        %1509 = vmatprep.subr.bf16.mxu0 0
        %1510 = vmatpush1.bf16.msra.mxu0 0
        %1511 = vmatprep.subr.bf16.mxu0 0
        %1512 = vmatpush1.bf16.msra.mxu0 0
        %1513 = vmatprep.mubr.bf16.mxu0 0
        %1514 = vmatmul.mubr.bf16.gmra.mrb[0].mxu0 %v1378
        %v1515 = vpop.f32.mrb[0].mxu0
        %v1516 = vadd.f32 %v1431, %v1515
        %v1517 = vpop.f32.mrb[0].mxu0
        %v1518 = vpop.f32.mrb[0].mxu0
        %v1519 = vadd.f32 %v1431, %v1518
        %v1520 = vpop.f32.mrb[0].mxu0
        %1521 = vmatprep.mubr.bf16.mxu0 0
        %1522 = vmatmul.mubr.bf16.gmra.mrb[0].mxu0 %v1379
        %v1523 = vpop.f32.mrb[0].mxu0
        %v1524 = vadd.f32 %v1431, %v1523
        %v1525 = vpop.f32.mrb[0].mxu0
        %v1526 = vpop.f32.mrb[0].mxu0
        %v1527 = vadd.f32 %v1431, %v1526
        %v1528 = vpop.f32.mrb[0].mxu0
        %1529 = vmatprep.mubr.bf16.mxu0 0
        %1530 = vmatmul.mubr.bf16.gmra.mrb[0].mxu0 %v1380
        %v1531 = vpop.f32.mrb[0].mxu0
        %v1532 = vadd.f32 %v1431, %v1531
        %v1533 = vpop.f32.mrb[0].mxu0
        %v1534 = vpop.f32.mrb[0].mxu0
        %v1535 = vadd.f32 %v1431, %v1534
        %v1536 = vpop.f32.mrb[0].mxu0
        %1537 = vmatprep.mubr.bf16.mxu0 0
        %1538 = vmatmul.mubr.bf16.gmra.mrb[0].mxu0 %v1381
        %v1539 = vpop.f32.mrb[0].mxu0
        %v1540 = vadd.f32 %v1431, %v1539
        %v1541 = vpop.f32.mrb[0].mxu0
        %v1542 = vpop.f32.mrb[0].mxu0
        %v1543 = vadd.f32 %v1431, %v1542
        %v1544 = vpop.f32.mrb[0].mxu0
        %1545 = vmatprep.mubr.bf16.mxu0 0
        %1546 = vmatmul.mubr.bf16.gmra.mrb[0].mxu0 %v1382
        %v1547 = vpop.f32.mrb[0].mxu0
        %v1548 = vadd.f32 %v1431, %v1547
        %v1549 = vpop.f32.mrb[0].mxu0
        %v1550 = vpop.f32.mrb[0].mxu0
        %v1551 = vadd.f32 %v1431, %v1550
        %v1552 = vpop.f32.mrb[0].mxu0
        %1553 = vmatprep.mubr.bf16.mxu0 0
        %1554 = vmatmul.mubr.bf16.gmra.mrb[0].mxu0 %v1383
        %v1555 = vpop.f32.mrb[0].mxu0
        %v1556 = vadd.f32 %v1431, %v1555
        %v1557 = vpop.f32.mrb[0].mxu0
        %v1558 = vpop.f32.mrb[0].mxu0
        %v1559 = vadd.f32 %v1431, %v1558
        %v1560 = vpop.f32.mrb[0].mxu0
        %1561 = vmatprep.mubr.bf16.mxu0 0
        %1562 = vmatmul.mubr.bf16.gmra.mrb[0].mxu0 %v1384
        %v1563 = vpop.f32.mrb[0].mxu0
        %v1564 = vadd.f32 %v1431, %v1563
        %v1565 = vpop.f32.mrb[0].mxu0
        %v1566 = vpop.f32.mrb[0].mxu0
        %v1567 = vadd.f32 %v1431, %v1566
        %v1568 = vpop.f32.mrb[0].mxu0
        %1569 = vmatprep.mubr.bf16.mxu0 0
        %1570 = vmatmul.mubr.bf16.gmra.mrb[0].mxu0 %v1385
        %v1571 = vpop.f32.mrb[0].mxu0
        %v1572 = vadd.f32 %v1431, %v1571
        %v1573 = vpop.f32.mrb[0].mxu0
        %v1574 = vpop.f32.mrb[0].mxu0
        %v1575 = vadd.f32 %v1431, %v1574
        %v1576 = vpop.f32.mrb[0].mxu0
        %1577 = vmatprep.mubr.bf16.mxu0 0
        %1578 = vmatmul.mubr.bf16.gmra.mrb[0].mxu0 %v1386
        %v1579 = vpop.f32.mrb[0].mxu0
        %v1580 = vadd.f32 %v1431, %v1579
        %v1581 = vpop.f32.mrb[0].mxu0
        %v1582 = vpop.f32.mrb[0].mxu0
        %v1583 = vadd.f32 %v1431, %v1582
        %v1584 = vpop.f32.mrb[0].mxu0
        %1585 = vmatprep.mubr.bf16.mxu0 0
        %1586 = vmatmul.mubr.bf16.gmra.mrb[0].mxu0 %v1387
        %v1587 = vpop.f32.mrb[0].mxu0
        %v1588 = vadd.f32 %v1431, %v1587
        %v1589 = vpop.f32.mrb[0].mxu0
        %v1590 = vpop.f32.mrb[0].mxu0
        %v1591 = vadd.f32 %v1431, %v1590
        %v1592 = vpop.f32.mrb[0].mxu0
        %1593 = vmatprep.mubr.bf16.mxu0 0
        %1594 = vmatmul.mubr.bf16.gmra.mrb[0].mxu0 %v1388
        %v1595 = vpop.f32.mrb[0].mxu0
        %v1596 = vadd.f32 %v1431, %v1595
        %v1597 = vpop.f32.mrb[0].mxu0
        %v1598 = vpop.f32.mrb[0].mxu0
        %v1599 = vadd.f32 %v1431, %v1598
        %v1600 = vpop.f32.mrb[0].mxu0
        %1601 = vmatprep.mubr.bf16.mxu0 0
        %1602 = vmatmul.mubr.bf16.gmra.mrb[0].mxu0 %v1389
        %v1603 = vpop.f32.mrb[0].mxu0
        %v1604 = vadd.f32 %v1431, %v1603
        %v1605 = vpop.f32.mrb[0].mxu0
        %v1606 = vpop.f32.mrb[0].mxu0
        %v1607 = vadd.f32 %v1431, %v1606
        %v1608 = vpop.f32.mrb[0].mxu0
        %1609 = vmatprep.mubr.bf16.mxu0 0
        %1610 = vmatmul.mubr.bf16.gmra.mrb[0].mxu0 %v1390
        %v1611 = vpop.f32.mrb[0].mxu0
        %v1612 = vadd.f32 %v1431, %v1611
        %v1613 = vpop.f32.mrb[0].mxu0
        %v1614 = vpop.f32.mrb[0].mxu0
        %v1615 = vadd.f32 %v1431, %v1614
        %v1616 = vpop.f32.mrb[0].mxu0
        %1617 = vmatprep.mubr.bf16.mxu0 0
        %1618 = vmatmul.mubr.bf16.gmra.mrb[0].mxu0 %v1391
        %v1619 = vpop.f32.mrb[0].mxu0
        %v1620 = vadd.f32 %v1431, %v1619
        %v1621 = vpop.f32.mrb[0].mxu0
        %v1622 = vpop.f32.mrb[0].mxu0
        %v1623 = vadd.f32 %v1431, %v1622
        %v1624 = vpop.f32.mrb[0].mxu0
        %1625 = vmatprep.mubr.bf16.mxu0 0
        %1626 = vmatmul.mubr.bf16.gmra.mrb[0].mxu0 %v1392
        %v1627 = vpop.f32.mrb[0].mxu0
        %v1628 = vadd.f32 %v1431, %v1627
        %v1629 = vpop.f32.mrb[0].mxu0
        %v1630 = vpop.f32.mrb[0].mxu0
        %v1631 = vadd.f32 %v1431, %v1630
        %v1632 = vpop.f32.mrb[0].mxu0
        %1633 = vmatprep.mubr.bf16.mxu0 0
        %1634 = vmatmul.mubr.bf16.gmra.mrb[0].mxu0 %v1393
        %v1635 = vpop.f32.mrb[0].mxu0
        %v1636 = vadd.f32 %v1431, %v1635
        %v1637 = vpop.f32.mrb[0].mxu0
        %v1638 = vpop.f32.mrb[0].mxu0
        %v1639 = vadd.f32 %v1431, %v1638
        %v1640 = vpop.f32.mrb[0].mxu0
        %1641 = vmatprep.mubr.bf16.mxu0 0
        %1642 = vmatmul.mubr.bf16.gmra.mrb[0].mxu0 %v1394
        %v1643 = vpop.f32.mrb[0].mxu0
        %v1644 = vadd.f32 %v1431, %v1643
        %v1645 = vpop.f32.mrb[0].mxu0
        %v1646 = vpop.f32.mrb[0].mxu0
        %v1647 = vadd.f32 %v1431, %v1646
        %v1648 = vpop.f32.mrb[0].mxu0
        %1649 = vmatprep.mubr.bf16.mxu0 0
        %1650 = vmatmul.mubr.bf16.gmra.mrb[0].mxu0 %v1395
        %v1651 = vpop.f32.mrb[0].mxu0
        %v1652 = vadd.f32 %v1431, %v1651
        %v1653 = vpop.f32.mrb[0].mxu0
        %v1654 = vpop.f32.mrb[0].mxu0
        %v1655 = vadd.f32 %v1431, %v1654
        %v1656 = vpop.f32.mrb[0].mxu0
        %1657 = vmatprep.mubr.bf16.mxu0 0
        %1658 = vmatmul.mubr.bf16.gmra.mrb[0].mxu0 %v1396
        %v1659 = vpop.f32.mrb[0].mxu0
        %v1660 = vadd.f32 %v1431, %v1659
        %v1661 = vpop.f32.mrb[0].mxu0
        %v1662 = vpop.f32.mrb[0].mxu0
        %v1663 = vadd.f32 %v1431, %v1662
        %v1664 = vpop.f32.mrb[0].mxu0
        %1665 = vmatprep.mubr.bf16.mxu0 0
        %1666 = vmatmul.mubr.bf16.gmra.mrb[0].mxu0 %v1397
        %v1667 = vpop.f32.mrb[0].mxu0
        %v1668 = vadd.f32 %v1431, %v1667
        %v1669 = vpop.f32.mrb[0].mxu0
        %v1670 = vpop.f32.mrb[0].mxu0
        %v1671 = vadd.f32 %v1431, %v1670
        %v1672 = vpop.f32.mrb[0].mxu0
        %1673 = vmatprep.mubr.bf16.mxu0 0
        %1674 = vmatmul.mubr.bf16.gmra.mrb[0].mxu0 %v1398
        %v1675 = vpop.f32.mrb[0].mxu0
        %v1676 = vadd.f32 %v1431, %v1675
        %v1677 = vpop.f32.mrb[0].mxu0
        %v1678 = vpop.f32.mrb[0].mxu0
        %v1679 = vadd.f32 %v1431, %v1678
        %v1680 = vpop.f32.mrb[0].mxu0
        %1681 = vmatprep.mubr.bf16.mxu0 0
        %1682 = vmatmul.mubr.bf16.gmra.mrb[0].mxu0 %v1399
        %v1683 = vpop.f32.mrb[0].mxu0
        %v1684 = vadd.f32 %v1431, %v1683
        %v1685 = vpop.f32.mrb[0].mxu0
        %v1686 = vpop.f32.mrb[0].mxu0
        %v1687 = vadd.f32 %v1431, %v1686
        %v1688 = vpop.f32.mrb[0].mxu0
        %1689 = vmatprep.mubr.bf16.mxu0 0
        %1690 = vmatmul.mubr.bf16.gmra.mrb[0].mxu0 %v1400
        %v1691 = vpop.f32.mrb[0].mxu0
        %v1692 = vadd.f32 %v1431, %v1691
        %v1693 = vpop.f32.mrb[0].mxu0
        %v1694 = vpop.f32.mrb[0].mxu0
        %v1695 = vadd.f32 %v1431, %v1694
        %v1696 = vpop.f32.mrb[0].mxu0
        %1697 = vmatprep.mubr.bf16.mxu0 0
        %1698 = vmatmul.mubr.bf16.gmra.mrb[0].mxu0 %v1401
        %v1699 = vpop.f32.mrb[0].mxu0
        %v1700 = vadd.f32 %v1431, %v1699
        %v1701 = vpop.f32.mrb[0].mxu0
        %v1702 = vpop.f32.mrb[0].mxu0
        %v1703 = vadd.f32 %v1431, %v1702
        %v1704 = vpop.f32.mrb[0].mxu0
        %1705 = vmatprep.mubr.bf16.mxu0 0
        %1706 = vmatmul.mubr.bf16.gmra.mrb[0].mxu0 %v1402
        %v1707 = vpop.f32.mrb[0].mxu0
        %v1708 = vadd.f32 %v1431, %v1707
        %v1709 = vpop.f32.mrb[0].mxu0
        %v1710 = vpop.f32.mrb[0].mxu0
        %v1711 = vadd.f32 %v1431, %v1710
        %v1712 = vpop.f32.mrb[0].mxu0
        %1713 = vmatprep.mubr.bf16.mxu0 0
        %1714 = vmatmul.mubr.bf16.gmra.mrb[0].mxu0 %v1403
        %v1715 = vpop.f32.mrb[0].mxu0
        %v1716 = vadd.f32 %v1431, %v1715
        %v1717 = vpop.f32.mrb[0].mxu0
        %v1718 = vpop.f32.mrb[0].mxu0
        %v1719 = vadd.f32 %v1431, %v1718
        %v1720 = vpop.f32.mrb[0].mxu0
        %1721 = vmatprep.mubr.bf16.mxu0 0
        %1722 = vmatmul.mubr.bf16.gmra.mrb[0].mxu0 %v1404
        %v1723 = vpop.f32.mrb[0].mxu0
        %v1724 = vadd.f32 %v1431, %v1723
        %v1725 = vpop.f32.mrb[0].mxu0
        %v1726 = vpop.f32.mrb[0].mxu0
        %v1727 = vadd.f32 %v1431, %v1726
        %v1728 = vpop.f32.mrb[0].mxu0
        %1729 = vmatprep.mubr.bf16.mxu0 0
        %1730 = vmatmul.mubr.bf16.gmra.mrb[0].mxu0 %v1405
        %v1731 = vpop.f32.mrb[0].mxu0
        %v1732 = vadd.f32 %v1431, %v1731
        %v1733 = vpop.f32.mrb[0].mxu0
        %v1734 = vpop.f32.mrb[0].mxu0
        %v1735 = vadd.f32 %v1431, %v1734
        %v1736 = vpop.f32.mrb[0].mxu0
        %1737 = vmatprep.mubr.bf16.mxu0 0
        %1738 = vmatmul.mubr.bf16.gmra.mrb[0].mxu0 %v1406
        %v1739 = vpop.f32.mrb[0].mxu0
        %v1740 = vadd.f32 %v1431, %v1739
        %v1741 = vpop.f32.mrb[0].mxu0
        %v1742 = vpop.f32.mrb[0].mxu0
        %v1743 = vadd.f32 %v1431, %v1742
        %v1744 = vpop.f32.mrb[0].mxu0
        %1745 = vmatprep.mubr.bf16.mxu0 0
        %1746 = vmatmul.mubr.bf16.gmra.mrb[0].mxu0 %v1407
        %v1747 = vpop.f32.mrb[0].mxu0
        %v1748 = vadd.f32 %v1431, %v1747
        %v1749 = vpop.f32.mrb[0].mxu0
        %v1750 = vpop.f32.mrb[0].mxu0
        %v1751 = vadd.f32 %v1431, %v1750
        %v1752 = vpop.f32.mrb[0].mxu0
        %1753 = vmatprep.mubr.bf16.mxu0 0
        %1754 = vmatmul.mubr.bf16.gmra.mrb[0].mxu0 %v1408
        %v1755 = vpop.f32.mrb[0].mxu0
        %v1756 = vadd.f32 %v1431, %v1755
        %v1757 = vpop.f32.mrb[0].mxu0
        %v1758 = vpop.f32.mrb[0].mxu0
        %v1759 = vadd.f32 %v1431, %v1758
        %v1760 = vpop.f32.mrb[0].mxu0
        %1761 = vmatprep.mubr.bf16.mxu0 0
        %1762 = vmatmul.mubr.bf16.gmra.mrb[0].mxu0 %v1409
        %v1763 = vpop.f32.mrb[0].mxu0
        %v1764 = vadd.f32 %v1431, %v1763
        %v1765 = vpop.f32.mrb[0].mxu0
        %v1766 = vpop.f32.mrb[0].mxu0
        %v1767 = vadd.f32 %v1431, %v1766
        %v1768 = vpop.f32.mrb[0].mxu0
        %1769 = vdwg.mxu0
        %v1770 = vmax.f32 %v1516, 0.0
        %v1771 = vmax.f32 %v1519, 0.0
        %v1772 = vmax.f32 %v1524, 0.0
        %v1773 = vmax.f32 %v1527, 0.0
        %v1774 = vmax.f32 %v1532, 0.0
        %v1775 = vmax.f32 %v1535, 0.0
        %v1776 = vmax.f32 %v1540, 0.0
        %v1777 = vmax.f32 %v1543, 0.0
        %v1778 = vmax.f32 %v1548, 0.0
        %v1779 = vmax.f32 %v1551, 0.0
        %v1780 = vmax.f32 %v1556, 0.0
        %v1781 = vmax.f32 %v1559, 0.0
        %v1782 = vmax.f32 %v1564, 0.0
        %v1783 = vmax.f32 %v1567, 0.0
        %v1784 = vmax.f32 %v1572, 0.0
        %v1785 = vmax.f32 %v1575, 0.0
        %v1786 = vmax.f32 %v1580, 0.0
        %v1787 = vmax.f32 %v1583, 0.0
        %v1788 = vmax.f32 %v1588, 0.0
        %v1789 = vmax.f32 %v1591, 0.0
        %v1790 = vmax.f32 %v1596, 0.0
        %v1791 = vmax.f32 %v1599, 0.0
        %v1792 = vmax.f32 %v1604, 0.0
        %v1793 = vmax.f32 %v1607, 0.0
        %v1794 = vmax.f32 %v1612, 0.0
        %v1795 = vmax.f32 %v1615, 0.0
        %v1796 = vmax.f32 %v1620, 0.0
        %v1797 = vmax.f32 %v1623, 0.0
        %v1798 = vmax.f32 %v1628, 0.0
        %v1799 = vmax.f32 %v1631, 0.0
        %v1800 = vmax.f32 %v1636, 0.0
        %v1801 = vmax.f32 %v1639, 0.0
        %v1802 = vmax.f32 %v1644, 0.0
        %v1803 = vmax.f32 %v1647, 0.0
        %v1804 = vmax.f32 %v1652, 0.0
        %v1805 = vmax.f32 %v1655, 0.0
        %v1806 = vmax.f32 %v1660, 0.0
        %v1807 = vmax.f32 %v1663, 0.0
        %v1808 = vmax.f32 %v1668, 0.0
        %v1809 = vmax.f32 %v1671, 0.0
        %v1810 = vmax.f32 %v1676, 0.0
        %v1811 = vmax.f32 %v1679, 0.0
        %v1812 = vmax.f32 %v1684, 0.0
        %v1813 = vmax.f32 %v1687, 0.0
        %v1814 = vmax.f32 %v1692, 0.0
        %v1815 = vmax.f32 %v1695, 0.0
        %v1816 = vmax.f32 %v1700, 0.0
        %v1817 = vmax.f32 %v1703, 0.0
        %v1818 = vmax.f32 %v1708, 0.0
        %v1819 = vmax.f32 %v1711, 0.0
        %v1820 = vmax.f32 %v1716, 0.0
        %v1821 = vmax.f32 %v1719, 0.0
        %v1822 = vmax.f32 %v1724, 0.0
        %v1823 = vmax.f32 %v1727, 0.0
        %v1824 = vmax.f32 %v1732, 0.0
        %v1825 = vmax.f32 %v1735, 0.0
        %v1826 = vmax.f32 %v1740, 0.0
        %v1827 = vmax.f32 %v1743, 0.0
        %v1828 = vmax.f32 %v1748, 0.0
        %v1829 = vmax.f32 %v1751, 0.0
        %v1830 = vmax.f32 %v1756, 0.0
        %v1831 = vmax.f32 %v1759, 0.0
        %v1832 = vmax.f32 %v1764, 0.0
        %v1833 = vmax.f32 %v1767, 0.0
        %v1834 = vpack.c.bf16 %v1771, %v1770
        %v1835 = vpack.c.bf16 %v1773, %v1772
        %v1836 = vpack.c.bf16 %v1775, %v1774
        %v1837 = vpack.c.bf16 %v1777, %v1776
        %v1838 = vpack.c.bf16 %v1779, %v1778
        %v1839 = vpack.c.bf16 %v1781, %v1780
        %v1840 = vpack.c.bf16 %v1783, %v1782
        %v1841 = vpack.c.bf16 %v1785, %v1784
        %v1842 = vpack.c.bf16 %v1787, %v1786
        %v1843 = vpack.c.bf16 %v1789, %v1788
        %v1844 = vpack.c.bf16 %v1791, %v1790
        %v1845 = vpack.c.bf16 %v1793, %v1792
        %v1846 = vpack.c.bf16 %v1795, %v1794
        %v1847 = vpack.c.bf16 %v1797, %v1796
        %v1848 = vpack.c.bf16 %v1799, %v1798
        %v1849 = vpack.c.bf16 %v1801, %v1800
        %v1850 = vpack.c.bf16 %v1803, %v1802
        %v1851 = vpack.c.bf16 %v1805, %v1804
        %v1852 = vpack.c.bf16 %v1807, %v1806
        %v1853 = vpack.c.bf16 %v1809, %v1808
        %v1854 = vpack.c.bf16 %v1811, %v1810
        %v1855 = vpack.c.bf16 %v1813, %v1812
        %v1856 = vpack.c.bf16 %v1815, %v1814
        %v1857 = vpack.c.bf16 %v1817, %v1816
        %v1858 = vpack.c.bf16 %v1819, %v1818
        %v1859 = vpack.c.bf16 %v1821, %v1820
        %v1860 = vpack.c.bf16 %v1823, %v1822
        %v1861 = vpack.c.bf16 %v1825, %v1824
        %v1862 = vpack.c.bf16 %v1827, %v1826
        %v1863 = vpack.c.bf16 %v1829, %v1828
        %v1864 = vpack.c.bf16 %v1831, %v1830
        %v1865 = vpack.c.bf16 %v1833, %v1832
        %1866 = vmatprep.subr.bf16.mxu0 0
        %1867 = vmatpush1.bf16.msra.mxu0 %v1834
        %1868 = vmatprep.subr.bf16.mxu0 0
        %1869 = vmatpush1.bf16.msra.mxu0 %v1835
        %1870 = vmatprep.subr.bf16.mxu0 0
        %1871 = vmatpush1.bf16.msra.mxu0 %v1836
        %1872 = vmatprep.subr.bf16.mxu0 0
        %1873 = vmatpush1.bf16.msra.mxu0 %v1837
        %1874 = vmatprep.subr.bf16.mxu0 0
        %1875 = vmatpush1.bf16.msra.mxu0 %v1838
        %1876 = vmatprep.subr.bf16.mxu0 0
        %1877 = vmatpush1.bf16.msra.mxu0 %v1839
        %1878 = vmatprep.subr.bf16.mxu0 0
        %1879 = vmatpush1.bf16.msra.mxu0 %v1840
        %1880 = vmatprep.subr.bf16.mxu0 0
        %1881 = vmatpush1.bf16.msra.mxu0 %v1841
        %1882 = vmatprep.subr.bf16.mxu0 0
        %1883 = vmatpush1.bf16.msra.mxu0 0
        %1884 = vmatprep.subr.bf16.mxu0 0
        %1885 = vmatpush1.bf16.msra.mxu0 0
        %1886 = vmatprep.subr.bf16.mxu0 0
        %1887 = vmatpush1.bf16.msra.mxu0 0
        %1888 = vmatprep.subr.bf16.mxu0 0
        %1889 = vmatpush1.bf16.msra.mxu0 0
        %1890 = vmatprep.subr.bf16.mxu0 0
        %1891 = vmatpush1.bf16.msra.mxu0 0
        %1892 = vmatprep.subr.bf16.mxu0 0
        %1893 = vmatpush1.bf16.msra.mxu0 0
        %1894 = vmatprep.subr.bf16.mxu0 0
        %1895 = vmatpush1.bf16.msra.mxu0 0
        %1896 = vmatprep.subr.bf16.mxu0 0
        %1897 = vmatpush1.bf16.msra.mxu0 0
        %1898 = vmatprep.mubr.bf16.mxu0 0
        %1899 = vmatmul.mubr.bf16.gmra.mrb[0].mxu0 %v638
        %v1900 = vpop.f32.mrb[0].mxu0
        %v1901 = vadd.f32 0.0, %v1900
        %v1902 = vpop.f32.mrb[0].mxu0
        %v1903 = vpop.f32.mrb[0].mxu0
        %v1904 = vadd.f32 0.0, %v1903
        %v1905 = vpop.f32.mrb[0].mxu0
        %1906 = vmatprep.mubr.bf16.mxu0 0
        %1907 = vmatmul.mubr.bf16.gmra.mrb[0].mxu0 %v639
        %v1908 = vpop.f32.mrb[0].mxu0
        %v1909 = vadd.f32 0.0, %v1908
        %v1910 = vpop.f32.mrb[0].mxu0
        %v1911 = vpop.f32.mrb[0].mxu0
        %v1912 = vadd.f32 0.0, %v1911
        %v1913 = vpop.f32.mrb[0].mxu0
        %1914 = vmatprep.mubr.bf16.mxu0 0
        %1915 = vmatmul.mubr.bf16.gmra.mrb[0].mxu0 %v640
        %v1916 = vpop.f32.mrb[0].mxu0
        %v1917 = vadd.f32 0.0, %v1916
        %v1918 = vpop.f32.mrb[0].mxu0
        %v1919 = vpop.f32.mrb[0].mxu0
        %v1920 = vadd.f32 0.0, %v1919
        %v1921 = vpop.f32.mrb[0].mxu0
        %1922 = vmatprep.mubr.bf16.mxu0 0
        %1923 = vmatmul.mubr.bf16.gmra.mrb[0].mxu0 %v641
        %v1924 = vpop.f32.mrb[0].mxu0
        %v1925 = vadd.f32 0.0, %v1924
        %v1926 = vpop.f32.mrb[0].mxu0
        %v1927 = vpop.f32.mrb[0].mxu0
        %v1928 = vadd.f32 0.0, %v1927
        %v1929 = vpop.f32.mrb[0].mxu0
        %1930 = vmatprep.mubr.bf16.mxu0 0
        %1931 = vmatmul.mubr.bf16.gmra.mrb[0].mxu0 %v642
        %v1932 = vpop.f32.mrb[0].mxu0
        %v1933 = vadd.f32 0.0, %v1932
        %v1934 = vpop.f32.mrb[0].mxu0
        %v1935 = vpop.f32.mrb[0].mxu0
        %v1936 = vadd.f32 0.0, %v1935
        %v1937 = vpop.f32.mrb[0].mxu0
        %1938 = vmatprep.mubr.bf16.mxu0 0
        %1939 = vmatmul.mubr.bf16.gmra.mrb[0].mxu0 %v643
        %v1940 = vpop.f32.mrb[0].mxu0
        %v1941 = vadd.f32 0.0, %v1940
        %v1942 = vpop.f32.mrb[0].mxu0
        %v1943 = vpop.f32.mrb[0].mxu0
        %v1944 = vadd.f32 0.0, %v1943
        %v1945 = vpop.f32.mrb[0].mxu0
        %1946 = vmatprep.mubr.bf16.mxu0 0
        %1947 = vmatmul.mubr.bf16.gmra.mrb[0].mxu0 %v644
        %v1948 = vpop.f32.mrb[0].mxu0
        %v1949 = vadd.f32 0.0, %v1948
        %v1950 = vpop.f32.mrb[0].mxu0
        %v1951 = vpop.f32.mrb[0].mxu0
        %v1952 = vadd.f32 0.0, %v1951
        %v1953 = vpop.f32.mrb[0].mxu0
        %1954 = vmatprep.mubr.bf16.mxu0 0
        %1955 = vmatmul.mubr.bf16.gmra.mrb[0].mxu0 %v645
        %v1956 = vpop.f32.mrb[0].mxu0
        %v1957 = vadd.f32 0.0, %v1956
        %v1958 = vpop.f32.mrb[0].mxu0
        %v1959 = vpop.f32.mrb[0].mxu0
        %v1960 = vadd.f32 0.0, %v1959
        %v1961 = vpop.f32.mrb[0].mxu0
        %1962 = vdwg.mxu0
        %1963 = vmatprep.subr.bf16.mxu0 0
        %1964 = vmatpush1.bf16.msra.mxu0 %v1842
        %1965 = vmatprep.subr.bf16.mxu0 0
        %1966 = vmatpush1.bf16.msra.mxu0 %v1843
        %1967 = vmatprep.subr.bf16.mxu0 0
        %1968 = vmatpush1.bf16.msra.mxu0 %v1844
        %1969 = vmatprep.subr.bf16.mxu0 0
        %1970 = vmatpush1.bf16.msra.mxu0 %v1845
        %1971 = vmatprep.subr.bf16.mxu0 0
        %1972 = vmatpush1.bf16.msra.mxu0 %v1846
        %1973 = vmatprep.subr.bf16.mxu0 0
        %1974 = vmatpush1.bf16.msra.mxu0 %v1847
        %1975 = vmatprep.subr.bf16.mxu0 0
        %1976 = vmatpush1.bf16.msra.mxu0 %v1848
        %1977 = vmatprep.subr.bf16.mxu0 0
        %1978 = vmatpush1.bf16.msra.mxu0 %v1849
        %1979 = vmatprep.subr.bf16.mxu0 0
        %1980 = vmatpush1.bf16.msra.mxu0 0
        %1981 = vmatprep.subr.bf16.mxu0 0
        %1982 = vmatpush1.bf16.msra.mxu0 0
        %1983 = vmatprep.subr.bf16.mxu0 0
        %1984 = vmatpush1.bf16.msra.mxu0 0
        %1985 = vmatprep.subr.bf16.mxu0 0
        %1986 = vmatpush1.bf16.msra.mxu0 0
        %1987 = vmatprep.subr.bf16.mxu0 0
        %1988 = vmatpush1.bf16.msra.mxu0 0
        %1989 = vmatprep.subr.bf16.mxu0 0
        %1990 = vmatpush1.bf16.msra.mxu0 0
        %1991 = vmatprep.subr.bf16.mxu0 0
        %1992 = vmatpush1.bf16.msra.mxu0 0
        %1993 = vmatprep.subr.bf16.mxu0 0
        %1994 = vmatpush1.bf16.msra.mxu0 0
        %1995 = vmatprep.mubr.bf16.mxu0 0
        %1996 = vmatmul.mubr.bf16.gmra.mrb[0].mxu0 %v831
        %v1997 = vpop.f32.mrb[0].mxu0
        %v1998 = vadd.f32 0.0, %v1997
        %v1999 = vpop.f32.mrb[0].mxu0
        %v2000 = vpop.f32.mrb[0].mxu0
        %v2001 = vadd.f32 0.0, %v2000
        %v2002 = vpop.f32.mrb[0].mxu0
        %2003 = vmatprep.mubr.bf16.mxu0 0
        %2004 = vmatmul.mubr.bf16.gmra.mrb[0].mxu0 %v832
        %v2005 = vpop.f32.mrb[0].mxu0
        %v2006 = vadd.f32 0.0, %v2005
        %v2007 = vpop.f32.mrb[0].mxu0
        %v2008 = vpop.f32.mrb[0].mxu0
        %v2009 = vadd.f32 0.0, %v2008
        %v2010 = vpop.f32.mrb[0].mxu0
        %2011 = vmatprep.mubr.bf16.mxu0 0
        %2012 = vmatmul.mubr.bf16.gmra.mrb[0].mxu0 %v833
        %v2013 = vpop.f32.mrb[0].mxu0
        %v2014 = vadd.f32 0.0, %v2013
        %v2015 = vpop.f32.mrb[0].mxu0
        %v2016 = vpop.f32.mrb[0].mxu0
        %v2017 = vadd.f32 0.0, %v2016
        %v2018 = vpop.f32.mrb[0].mxu0
        %2019 = vmatprep.mubr.bf16.mxu0 0
        %2020 = vmatmul.mubr.bf16.gmra.mrb[0].mxu0 %v834
        %v2021 = vpop.f32.mrb[0].mxu0
        %v2022 = vadd.f32 0.0, %v2021
        %v2023 = vpop.f32.mrb[0].mxu0
        %v2024 = vpop.f32.mrb[0].mxu0
        %v2025 = vadd.f32 0.0, %v2024
        %v2026 = vpop.f32.mrb[0].mxu0
        %2027 = vmatprep.mubr.bf16.mxu0 0
        %2028 = vmatmul.mubr.bf16.gmra.mrb[0].mxu0 %v835
        %v2029 = vpop.f32.mrb[0].mxu0
        %v2030 = vadd.f32 0.0, %v2029
        %v2031 = vpop.f32.mrb[0].mxu0
        %v2032 = vpop.f32.mrb[0].mxu0
        %v2033 = vadd.f32 0.0, %v2032
        %v2034 = vpop.f32.mrb[0].mxu0
        %2035 = vmatprep.mubr.bf16.mxu0 0
        %2036 = vmatmul.mubr.bf16.gmra.mrb[0].mxu0 %v836
        %v2037 = vpop.f32.mrb[0].mxu0
        %v2038 = vadd.f32 0.0, %v2037
        %v2039 = vpop.f32.mrb[0].mxu0
        %v2040 = vpop.f32.mrb[0].mxu0
        %v2041 = vadd.f32 0.0, %v2040
        %v2042 = vpop.f32.mrb[0].mxu0
        %2043 = vmatprep.mubr.bf16.mxu0 0
        %2044 = vmatmul.mubr.bf16.gmra.mrb[0].mxu0 %v837
        %v2045 = vpop.f32.mrb[0].mxu0
        %v2046 = vadd.f32 0.0, %v2045
        %v2047 = vpop.f32.mrb[0].mxu0
        %v2048 = vpop.f32.mrb[0].mxu0
        %v2049 = vadd.f32 0.0, %v2048
        %v2050 = vpop.f32.mrb[0].mxu0
        %2051 = vmatprep.mubr.bf16.mxu0 0
        %2052 = vmatmul.mubr.bf16.gmra.mrb[0].mxu0 %v838
        %v2053 = vpop.f32.mrb[0].mxu0
        %v2054 = vadd.f32 0.0, %v2053
        %v2055 = vpop.f32.mrb[0].mxu0
        %v2056 = vpop.f32.mrb[0].mxu0
        %v2057 = vadd.f32 0.0, %v2056
        %v2058 = vpop.f32.mrb[0].mxu0
        %2059 = vdwg.mxu0
        %2060 = vmatprep.subr.bf16.mxu0 0
        %2061 = vmatpush1.bf16.msra.mxu0 %v1850
        %2062 = vmatprep.subr.bf16.mxu0 0
        %2063 = vmatpush1.bf16.msra.mxu0 %v1851
        %2064 = vmatprep.subr.bf16.mxu0 0
        %2065 = vmatpush1.bf16.msra.mxu0 %v1852
        %2066 = vmatprep.subr.bf16.mxu0 0
        %2067 = vmatpush1.bf16.msra.mxu0 %v1853
        %2068 = vmatprep.subr.bf16.mxu0 0
        %2069 = vmatpush1.bf16.msra.mxu0 %v1854
        %2070 = vmatprep.subr.bf16.mxu0 0
        %2071 = vmatpush1.bf16.msra.mxu0 %v1855
        %2072 = vmatprep.subr.bf16.mxu0 0
        %2073 = vmatpush1.bf16.msra.mxu0 %v1856
        %2074 = vmatprep.subr.bf16.mxu0 0
        %2075 = vmatpush1.bf16.msra.mxu0 %v1857
        %2076 = vmatprep.subr.bf16.mxu0 0
        %2077 = vmatpush1.bf16.msra.mxu0 0
        %2078 = vmatprep.subr.bf16.mxu0 0
        %2079 = vmatpush1.bf16.msra.mxu0 0
        %2080 = vmatprep.subr.bf16.mxu0 0
        %2081 = vmatpush1.bf16.msra.mxu0 0
        %2082 = vmatprep.subr.bf16.mxu0 0
        %2083 = vmatpush1.bf16.msra.mxu0 0
        %2084 = vmatprep.subr.bf16.mxu0 0
        %2085 = vmatpush1.bf16.msra.mxu0 0
        %2086 = vmatprep.subr.bf16.mxu0 0
        %2087 = vmatpush1.bf16.msra.mxu0 0
        %2088 = vmatprep.subr.bf16.mxu0 0
        %2089 = vmatpush1.bf16.msra.mxu0 0
        %2090 = vmatprep.subr.bf16.mxu0 0
        %2091 = vmatpush1.bf16.msra.mxu0 0
        %2092 = vmatprep.mubr.bf16.mxu0 0
        %2093 = vmatmul.mubr.bf16.gmra.mrb[0].mxu0 %v1024
        %v2094 = vpop.f32.mrb[0].mxu0
        %v2095 = vadd.f32 0.0, %v2094
        %v2096 = vpop.f32.mrb[0].mxu0
        %v2097 = vpop.f32.mrb[0].mxu0
        %v2098 = vadd.f32 0.0, %v2097
        %v2099 = vpop.f32.mrb[0].mxu0
        %2100 = vmatprep.mubr.bf16.mxu0 0
        %2101 = vmatmul.mubr.bf16.gmra.mrb[0].mxu0 %v1025
        %v2102 = vpop.f32.mrb[0].mxu0
        %v2103 = vadd.f32 0.0, %v2102
        %v2104 = vpop.f32.mrb[0].mxu0
        %v2105 = vpop.f32.mrb[0].mxu0
        %v2106 = vadd.f32 0.0, %v2105
        %v2107 = vpop.f32.mrb[0].mxu0
        %2108 = vmatprep.mubr.bf16.mxu0 0
        %2109 = vmatmul.mubr.bf16.gmra.mrb[0].mxu0 %v1026
        %v2110 = vpop.f32.mrb[0].mxu0
        %v2111 = vadd.f32 0.0, %v2110
        %v2112 = vpop.f32.mrb[0].mxu0
        %v2113 = vpop.f32.mrb[0].mxu0
        %v2114 = vadd.f32 0.0, %v2113
        %v2115 = vpop.f32.mrb[0].mxu0
        %2116 = vmatprep.mubr.bf16.mxu0 0
        %2117 = vmatmul.mubr.bf16.gmra.mrb[0].mxu0 %v1027
        %v2118 = vpop.f32.mrb[0].mxu0
        %v2119 = vadd.f32 0.0, %v2118
        %v2120 = vpop.f32.mrb[0].mxu0
        %v2121 = vpop.f32.mrb[0].mxu0
        %v2122 = vadd.f32 0.0, %v2121
        %v2123 = vpop.f32.mrb[0].mxu0
        %2124 = vmatprep.mubr.bf16.mxu0 0
        %2125 = vmatmul.mubr.bf16.gmra.mrb[0].mxu0 %v1028
        %v2126 = vpop.f32.mrb[0].mxu0
        %v2127 = vadd.f32 0.0, %v2126
        %v2128 = vpop.f32.mrb[0].mxu0
        %v2129 = vpop.f32.mrb[0].mxu0
        %v2130 = vadd.f32 0.0, %v2129
        %v2131 = vpop.f32.mrb[0].mxu0
        %2132 = vmatprep.mubr.bf16.mxu0 0
        %2133 = vmatmul.mubr.bf16.gmra.mrb[0].mxu0 %v1029
        %v2134 = vpop.f32.mrb[0].mxu0
        %v2135 = vadd.f32 0.0, %v2134
        %v2136 = vpop.f32.mrb[0].mxu0
        %v2137 = vpop.f32.mrb[0].mxu0
        %v2138 = vadd.f32 0.0, %v2137
        %v2139 = vpop.f32.mrb[0].mxu0
        %2140 = vmatprep.mubr.bf16.mxu0 0
        %2141 = vmatmul.mubr.bf16.gmra.mrb[0].mxu0 %v1030
        %v2142 = vpop.f32.mrb[0].mxu0
        %v2143 = vadd.f32 0.0, %v2142
        %v2144 = vpop.f32.mrb[0].mxu0
        %v2145 = vpop.f32.mrb[0].mxu0
        %v2146 = vadd.f32 0.0, %v2145
        %v2147 = vpop.f32.mrb[0].mxu0
        %2148 = vmatprep.mubr.bf16.mxu0 0
        %2149 = vmatmul.mubr.bf16.gmra.mrb[0].mxu0 %v1031
        %v2150 = vpop.f32.mrb[0].mxu0
        %v2151 = vadd.f32 0.0, %v2150
        %v2152 = vpop.f32.mrb[0].mxu0
        %v2153 = vpop.f32.mrb[0].mxu0
        %v2154 = vadd.f32 0.0, %v2153
        %v2155 = vpop.f32.mrb[0].mxu0
        %2156 = vdwg.mxu0
        %2157 = vmatprep.subr.bf16.mxu0 0
        %2158 = vmatpush1.bf16.msra.mxu0 %v1858
        %2159 = vmatprep.subr.bf16.mxu0 0
        %2160 = vmatpush1.bf16.msra.mxu0 %v1859
        %2161 = vmatprep.subr.bf16.mxu0 0
        %2162 = vmatpush1.bf16.msra.mxu0 %v1860
        %2163 = vmatprep.subr.bf16.mxu0 0
        %2164 = vmatpush1.bf16.msra.mxu0 %v1861
        %2165 = vmatprep.subr.bf16.mxu0 0
        %2166 = vmatpush1.bf16.msra.mxu0 %v1862
        %2167 = vmatprep.subr.bf16.mxu0 0
        %2168 = vmatpush1.bf16.msra.mxu0 %v1863
        %2169 = vmatprep.subr.bf16.mxu0 0
        %2170 = vmatpush1.bf16.msra.mxu0 %v1864
        %2171 = vmatprep.subr.bf16.mxu0 0
        %2172 = vmatpush1.bf16.msra.mxu0 %v1865
        %2173 = vmatprep.subr.bf16.mxu0 0
        %2174 = vmatpush1.bf16.msra.mxu0 0
        %2175 = vmatprep.subr.bf16.mxu0 0
        %2176 = vmatpush1.bf16.msra.mxu0 0
        %2177 = vmatprep.subr.bf16.mxu0 0
        %2178 = vmatpush1.bf16.msra.mxu0 0
        %2179 = vmatprep.subr.bf16.mxu0 0
        %2180 = vmatpush1.bf16.msra.mxu0 0
        %2181 = vmatprep.subr.bf16.mxu0 0
        %2182 = vmatpush1.bf16.msra.mxu0 0
        %2183 = vmatprep.subr.bf16.mxu0 0
        %2184 = vmatpush1.bf16.msra.mxu0 0
        %2185 = vmatprep.subr.bf16.mxu0 0
        %2186 = vmatpush1.bf16.msra.mxu0 0
        %2187 = vmatprep.subr.bf16.mxu0 0
        %2188 = vmatpush1.bf16.msra.mxu0 0
        %2189 = vmatprep.mubr.bf16.mxu0 0
        %2190 = vmatmul.mubr.bf16.gmra.mrb[0].mxu0 %v1217
        %v2191 = vpop.f32.mrb[0].mxu0
        %v2192 = vadd.f32 0.0, %v2191
        %v2193 = vpop.f32.mrb[0].mxu0
        %v2194 = vpop.f32.mrb[0].mxu0
        %v2195 = vadd.f32 0.0, %v2194
        %v2196 = vpop.f32.mrb[0].mxu0
        %2197 = vmatprep.mubr.bf16.mxu0 0
        %2198 = vmatmul.mubr.bf16.gmra.mrb[0].mxu0 %v1218
        %v2199 = vpop.f32.mrb[0].mxu0
        %v2200 = vadd.f32 0.0, %v2199
        %v2201 = vpop.f32.mrb[0].mxu0
        %v2202 = vpop.f32.mrb[0].mxu0
        %v2203 = vadd.f32 0.0, %v2202
        %v2204 = vpop.f32.mrb[0].mxu0
        %2205 = vmatprep.mubr.bf16.mxu0 0
        %2206 = vmatmul.mubr.bf16.gmra.mrb[0].mxu0 %v1219
        %v2207 = vpop.f32.mrb[0].mxu0
        %v2208 = vadd.f32 0.0, %v2207
        %v2209 = vpop.f32.mrb[0].mxu0
        %v2210 = vpop.f32.mrb[0].mxu0
        %v2211 = vadd.f32 0.0, %v2210
        %v2212 = vpop.f32.mrb[0].mxu0
        %2213 = vmatprep.mubr.bf16.mxu0 0
        %2214 = vmatmul.mubr.bf16.gmra.mrb[0].mxu0 %v1220
        %v2215 = vpop.f32.mrb[0].mxu0
        %v2216 = vadd.f32 0.0, %v2215
        %v2217 = vpop.f32.mrb[0].mxu0
        %v2218 = vpop.f32.mrb[0].mxu0
        %v2219 = vadd.f32 0.0, %v2218
        %v2220 = vpop.f32.mrb[0].mxu0
        %2221 = vmatprep.mubr.bf16.mxu0 0
        %2222 = vmatmul.mubr.bf16.gmra.mrb[0].mxu0 %v1221
        %v2223 = vpop.f32.mrb[0].mxu0
        %v2224 = vadd.f32 0.0, %v2223
        %v2225 = vpop.f32.mrb[0].mxu0
        %v2226 = vpop.f32.mrb[0].mxu0
        %v2227 = vadd.f32 0.0, %v2226
        %v2228 = vpop.f32.mrb[0].mxu0
        %2229 = vmatprep.mubr.bf16.mxu0 0
        %2230 = vmatmul.mubr.bf16.gmra.mrb[0].mxu0 %v1222
        %v2231 = vpop.f32.mrb[0].mxu0
        %v2232 = vadd.f32 0.0, %v2231
        %v2233 = vpop.f32.mrb[0].mxu0
        %v2234 = vpop.f32.mrb[0].mxu0
        %v2235 = vadd.f32 0.0, %v2234
        %v2236 = vpop.f32.mrb[0].mxu0
        %2237 = vmatprep.mubr.bf16.mxu0 0
        %2238 = vmatmul.mubr.bf16.gmra.mrb[0].mxu0 %v1223
        %v2239 = vpop.f32.mrb[0].mxu0
        %v2240 = vadd.f32 0.0, %v2239
        %v2241 = vpop.f32.mrb[0].mxu0
        %v2242 = vpop.f32.mrb[0].mxu0
        %v2243 = vadd.f32 0.0, %v2242
        %v2244 = vpop.f32.mrb[0].mxu0
        %2245 = vmatprep.mubr.bf16.mxu0 0
        %2246 = vmatmul.mubr.bf16.gmra.mrb[0].mxu0 %v1224
        %v2247 = vpop.f32.mrb[0].mxu0
        %v2248 = vadd.f32 0.0, %v2247
        %v2249 = vpop.f32.mrb[0].mxu0
        %v2250 = vpop.f32.mrb[0].mxu0
        %v2251 = vadd.f32 0.0, %v2250
        %v2252 = vpop.f32.mrb[0].mxu0
        %2253 = vdwg.mxu0
        %v2254 = vpack.c.bf16 %v1904, %v1901
        %v2255 = vpack.c.bf16 %v1912, %v1909
        %v2256 = vpack.c.bf16 %v1920, %v1917
        %v2257 = vpack.c.bf16 %v1928, %v1925
        %v2258 = vpack.c.bf16 %v1936, %v1933
        %v2259 = vpack.c.bf16 %v1944, %v1941
        %v2260 = vpack.c.bf16 %v1952, %v1949
        %v2261 = vpack.c.bf16 %v1960, %v1957
        %v2262 = vpack.c.bf16 %v2001, %v1998
        %v2263 = vpack.c.bf16 %v2009, %v2006
        %v2264 = vpack.c.bf16 %v2017, %v2014
        %v2265 = vpack.c.bf16 %v2025, %v2022
        %v2266 = vpack.c.bf16 %v2033, %v2030
        %v2267 = vpack.c.bf16 %v2041, %v2038
        %v2268 = vpack.c.bf16 %v2049, %v2046
        %v2269 = vpack.c.bf16 %v2057, %v2054
        %v2270 = vpack.c.bf16 %v2098, %v2095
        %v2271 = vpack.c.bf16 %v2106, %v2103
        %v2272 = vpack.c.bf16 %v2114, %v2111
        %v2273 = vpack.c.bf16 %v2122, %v2119
        %v2274 = vpack.c.bf16 %v2130, %v2127
        %v2275 = vpack.c.bf16 %v2138, %v2135
        %v2276 = vpack.c.bf16 %v2146, %v2143
        %v2277 = vpack.c.bf16 %v2154, %v2151
        %v2278 = vpack.c.bf16 %v2195, %v2192
        %v2279 = vpack.c.bf16 %v2203, %v2200
        %v2280 = vpack.c.bf16 %v2211, %v2208
        %v2281 = vpack.c.bf16 %v2219, %v2216
        %v2282 = vpack.c.bf16 %v2227, %v2224
        %v2283 = vpack.c.bf16 %v2235, %v2232
        %v2284 = vpack.c.bf16 %v2243, %v2240
        %v2285 = vpack.c.bf16 %v2251, %v2248
        %v2286 = vld [vmem:[#allocation10] sm:$0xf]
        %v2287 = vld [vmem:[#allocation10 + $0x4] sm:$0xf]
        %v2288 = vld [vmem:[#allocation10 + $0x8] sm:$0xf]
        %v2289 = vld [vmem:[#allocation10 + $0xc] sm:$0xf]
        %v2290 = vld [vmem:[#allocation10 + $0x10] sm:$0xf]
        %v2291 = vld [vmem:[#allocation10 + $0x14] sm:$0xf]
        %v2292 = vld [vmem:[#allocation10 + $0x18] sm:$0xf]
        %v2293 = vld [vmem:[#allocation10 + $0x1c] sm:$0xf]
        %v2294 = vld [vmem:[#allocation10 + $0x20] sm:$0xf]
        %v2295 = vld [vmem:[#allocation10 + $0x24] sm:$0xf]
        %v2296 = vld [vmem:[#allocation10 + $0x28] sm:$0xf]
        %v2297 = vld [vmem:[#allocation10 + $0x2c] sm:$0xf]
        %v2298 = vld [vmem:[#allocation10 + $0x30] sm:$0xf]
        %v2299 = vld [vmem:[#allocation10 + $0x34] sm:$0xf]
        %v2300 = vld [vmem:[#allocation10 + $0x38] sm:$0xf]
        %v2301 = vld [vmem:[#allocation10 + $0x3c] sm:$0xf]
        %v2302 = vld [vmem:[%s6] sm:$0x1]
        %v2304 = vlaneseq
        %v2305 = vshrl.u32 %v2304, 7
        %v2306 = vsub.s32 0, %v2305
        %v2307 = vrot.slane %v2302, %v2306
        %v2325 = vunpack.c.l.b16 %v2286
        %v2326 = vunpack.c.l.b16 %v2287
        %v2327 = vunpack.c.l.b16 %v2288
        %v2328 = vunpack.c.l.b16 %v2289
        %v2329 = vunpack.c.l.b16 %v2290
        %v2330 = vunpack.c.l.b16 %v2291
        %v2331 = vunpack.c.l.b16 %v2292
        %v2332 = vunpack.c.l.b16 %v2293
        %v2333 = vunpack.c.l.b16 %v2294
        %v2334 = vunpack.c.l.b16 %v2295
        %v2335 = vunpack.c.l.b16 %v2296
        %v2336 = vunpack.c.l.b16 %v2297
        %v2337 = vunpack.c.l.b16 %v2298
        %v2338 = vunpack.c.l.b16 %v2299
        %v2339 = vunpack.c.l.b16 %v2300
        %v2340 = vunpack.c.l.b16 %v2301
        %v2341 = vpack.c.b16 %v2326, %v2325
        %v2342 = vpack.c.b16 %v2328, %v2327
        %v2343 = vpack.c.b16 %v2330, %v2329
        %v2344 = vpack.c.b16 %v2332, %v2331
        %v2345 = vpack.c.b16 %v2334, %v2333
        %v2346 = vpack.c.b16 %v2336, %v2335
        %v2347 = vpack.c.b16 %v2338, %v2337
        %v2348 = vpack.c.b16 %v2340, %v2339
        %2357 = vmatprep.subr.bf16.mxu0 0
        %2358 = vmatpush1.bf16.msra.mxu0 %v2341
        %2359 = vmatprep.subr.bf16.mxu0 0
        %2360 = vmatpush1.bf16.msra.mxu0 %v2342
        %2361 = vmatprep.subr.bf16.mxu0 0
        %2362 = vmatpush1.bf16.msra.mxu0 %v2343
        %2363 = vmatprep.subr.bf16.mxu0 0
        %2364 = vmatpush1.bf16.msra.mxu0 %v2344
        %2365 = vmatprep.subr.bf16.mxu0 0
        %2366 = vmatpush1.bf16.msra.mxu0 %v2345
        %2367 = vmatprep.subr.bf16.mxu0 0
        %2368 = vmatpush1.bf16.msra.mxu0 %v2346
        %2369 = vmatprep.subr.bf16.mxu0 0
        %2370 = vmatpush1.bf16.msra.mxu0 %v2347
        %2371 = vmatprep.subr.bf16.mxu0 0
        %2372 = vmatpush1.bf16.msra.mxu0 %v2348
        %2373 = vmatprep.subr.bf16.mxu0 0
        %2374 = vmatpush1.bf16.msra.mxu0 0
        %2375 = vmatprep.subr.bf16.mxu0 0
        %2376 = vmatpush1.bf16.msra.mxu0 0
        %2377 = vmatprep.subr.bf16.mxu0 0
        %2378 = vmatpush1.bf16.msra.mxu0 0
        %2379 = vmatprep.subr.bf16.mxu0 0
        %2380 = vmatpush1.bf16.msra.mxu0 0
        %2381 = vmatprep.subr.bf16.mxu0 0
        %2382 = vmatpush1.bf16.msra.mxu0 0
        %2383 = vmatprep.subr.bf16.mxu0 0
        %2384 = vmatpush1.bf16.msra.mxu0 0
        %2385 = vmatprep.subr.bf16.mxu0 0
        %2386 = vmatpush1.bf16.msra.mxu0 0
        %2387 = vmatprep.subr.bf16.mxu0 0
        %2388 = vmatpush1.bf16.msra.mxu0 0
        %2389 = vmatprep.mubr.bf16.mxu0 0
        %2390 = vmatmul.mubr.bf16.gmra.mrb[0].mxu0 %v2254
        %v2391 = vpop.f32.mrb[0].mxu0
        %v2392 = vadd.f32 %v2307, %v2391
        %v2393 = vpop.f32.mrb[0].mxu0
        %v2394 = vpop.f32.mrb[0].mxu0
        %v2395 = vadd.f32 %v2307, %v2394
        %v2396 = vpop.f32.mrb[0].mxu0
        %2397 = vmatprep.mubr.bf16.mxu0 0
        %2398 = vmatmul.mubr.bf16.gmra.mrb[0].mxu0 %v2255
        %v2399 = vpop.f32.mrb[0].mxu0
        %v2400 = vadd.f32 %v2307, %v2399
        %v2401 = vpop.f32.mrb[0].mxu0
        %v2402 = vpop.f32.mrb[0].mxu0
        %v2403 = vadd.f32 %v2307, %v2402
        %v2404 = vpop.f32.mrb[0].mxu0
        %2405 = vmatprep.mubr.bf16.mxu0 0
        %2406 = vmatmul.mubr.bf16.gmra.mrb[0].mxu0 %v2256
        %v2407 = vpop.f32.mrb[0].mxu0
        %v2408 = vadd.f32 %v2307, %v2407
        %v2409 = vpop.f32.mrb[0].mxu0
        %v2410 = vpop.f32.mrb[0].mxu0
        %v2411 = vadd.f32 %v2307, %v2410
        %v2412 = vpop.f32.mrb[0].mxu0
        %2413 = vmatprep.mubr.bf16.mxu0 0
        %2414 = vmatmul.mubr.bf16.gmra.mrb[0].mxu0 %v2257
        %v2415 = vpop.f32.mrb[0].mxu0
        %v2416 = vadd.f32 %v2307, %v2415
        %v2417 = vpop.f32.mrb[0].mxu0
        %v2418 = vpop.f32.mrb[0].mxu0
        %v2419 = vadd.f32 %v2307, %v2418
        %v2420 = vpop.f32.mrb[0].mxu0
        %2421 = vmatprep.mubr.bf16.mxu0 0
        %2422 = vmatmul.mubr.bf16.gmra.mrb[0].mxu0 %v2258
        %v2423 = vpop.f32.mrb[0].mxu0
        %v2424 = vadd.f32 %v2307, %v2423
        %v2425 = vpop.f32.mrb[0].mxu0
        %v2426 = vpop.f32.mrb[0].mxu0
        %v2427 = vadd.f32 %v2307, %v2426
        %v2428 = vpop.f32.mrb[0].mxu0
        %2429 = vmatprep.mubr.bf16.mxu0 0
        %2430 = vmatmul.mubr.bf16.gmra.mrb[0].mxu0 %v2259
        %v2431 = vpop.f32.mrb[0].mxu0
        %v2432 = vadd.f32 %v2307, %v2431
        %v2433 = vpop.f32.mrb[0].mxu0
        %v2434 = vpop.f32.mrb[0].mxu0
        %v2435 = vadd.f32 %v2307, %v2434
        %v2436 = vpop.f32.mrb[0].mxu0
        %2437 = vmatprep.mubr.bf16.mxu0 0
        %2438 = vmatmul.mubr.bf16.gmra.mrb[0].mxu0 %v2260
        %v2439 = vpop.f32.mrb[0].mxu0
        %v2440 = vadd.f32 %v2307, %v2439
        %v2441 = vpop.f32.mrb[0].mxu0
        %v2442 = vpop.f32.mrb[0].mxu0
        %v2443 = vadd.f32 %v2307, %v2442
        %v2444 = vpop.f32.mrb[0].mxu0
        %2445 = vmatprep.mubr.bf16.mxu0 0
        %2446 = vmatmul.mubr.bf16.gmra.mrb[0].mxu0 %v2261
        %v2447 = vpop.f32.mrb[0].mxu0
        %v2448 = vadd.f32 %v2307, %v2447
        %v2449 = vpop.f32.mrb[0].mxu0
        %v2450 = vpop.f32.mrb[0].mxu0
        %v2451 = vadd.f32 %v2307, %v2450
        %v2452 = vpop.f32.mrb[0].mxu0
        %2453 = vmatprep.mubr.bf16.mxu0 0
        %2454 = vmatmul.mubr.bf16.gmra.mrb[0].mxu0 %v2262
        %v2455 = vpop.f32.mrb[0].mxu0
        %v2456 = vadd.f32 %v2307, %v2455
        %v2457 = vpop.f32.mrb[0].mxu0
        %v2458 = vpop.f32.mrb[0].mxu0
        %v2459 = vadd.f32 %v2307, %v2458
        %v2460 = vpop.f32.mrb[0].mxu0
        %2461 = vmatprep.mubr.bf16.mxu0 0
        %2462 = vmatmul.mubr.bf16.gmra.mrb[0].mxu0 %v2263
        %v2463 = vpop.f32.mrb[0].mxu0
        %v2464 = vadd.f32 %v2307, %v2463
        %v2465 = vpop.f32.mrb[0].mxu0
        %v2466 = vpop.f32.mrb[0].mxu0
        %v2467 = vadd.f32 %v2307, %v2466
        %v2468 = vpop.f32.mrb[0].mxu0
        %2469 = vmatprep.mubr.bf16.mxu0 0
        %2470 = vmatmul.mubr.bf16.gmra.mrb[0].mxu0 %v2264
        %v2471 = vpop.f32.mrb[0].mxu0
        %v2472 = vadd.f32 %v2307, %v2471
        %v2473 = vpop.f32.mrb[0].mxu0
        %v2474 = vpop.f32.mrb[0].mxu0
        %v2475 = vadd.f32 %v2307, %v2474
        %v2476 = vpop.f32.mrb[0].mxu0
        %2477 = vmatprep.mubr.bf16.mxu0 0
        %2478 = vmatmul.mubr.bf16.gmra.mrb[0].mxu0 %v2265
        %v2479 = vpop.f32.mrb[0].mxu0
        %v2480 = vadd.f32 %v2307, %v2479
        %v2481 = vpop.f32.mrb[0].mxu0
        %v2482 = vpop.f32.mrb[0].mxu0
        %v2483 = vadd.f32 %v2307, %v2482
        %v2484 = vpop.f32.mrb[0].mxu0
        %2485 = vmatprep.mubr.bf16.mxu0 0
        %2486 = vmatmul.mubr.bf16.gmra.mrb[0].mxu0 %v2266
        %v2487 = vpop.f32.mrb[0].mxu0
        %v2488 = vadd.f32 %v2307, %v2487
        %v2489 = vpop.f32.mrb[0].mxu0
        %v2490 = vpop.f32.mrb[0].mxu0
        %v2491 = vadd.f32 %v2307, %v2490
        %v2492 = vpop.f32.mrb[0].mxu0
        %2493 = vmatprep.mubr.bf16.mxu0 0
        %2494 = vmatmul.mubr.bf16.gmra.mrb[0].mxu0 %v2267
        %v2495 = vpop.f32.mrb[0].mxu0
        %v2496 = vadd.f32 %v2307, %v2495
        %v2497 = vpop.f32.mrb[0].mxu0
        %v2498 = vpop.f32.mrb[0].mxu0
        %v2499 = vadd.f32 %v2307, %v2498
        %v2500 = vpop.f32.mrb[0].mxu0
        %2501 = vmatprep.mubr.bf16.mxu0 0
        %2502 = vmatmul.mubr.bf16.gmra.mrb[0].mxu0 %v2268
        %v2503 = vpop.f32.mrb[0].mxu0
        %v2504 = vadd.f32 %v2307, %v2503
        %v2505 = vpop.f32.mrb[0].mxu0
        %v2506 = vpop.f32.mrb[0].mxu0
        %v2507 = vadd.f32 %v2307, %v2506
        %v2508 = vpop.f32.mrb[0].mxu0
        %2509 = vmatprep.mubr.bf16.mxu0 0
        %2510 = vmatmul.mubr.bf16.gmra.mrb[0].mxu0 %v2269
        %v2511 = vpop.f32.mrb[0].mxu0
        %v2512 = vadd.f32 %v2307, %v2511
        %v2513 = vpop.f32.mrb[0].mxu0
        %v2514 = vpop.f32.mrb[0].mxu0
        %v2515 = vadd.f32 %v2307, %v2514
        %v2516 = vpop.f32.mrb[0].mxu0
        %2517 = vmatprep.mubr.bf16.mxu0 0
        %2518 = vmatmul.mubr.bf16.gmra.mrb[0].mxu0 %v2270
        %v2519 = vpop.f32.mrb[0].mxu0
        %v2520 = vadd.f32 %v2307, %v2519
        %v2521 = vpop.f32.mrb[0].mxu0
        %v2522 = vpop.f32.mrb[0].mxu0
        %v2523 = vadd.f32 %v2307, %v2522
        %v2524 = vpop.f32.mrb[0].mxu0
        %2525 = vmatprep.mubr.bf16.mxu0 0
        %2526 = vmatmul.mubr.bf16.gmra.mrb[0].mxu0 %v2271
        %v2527 = vpop.f32.mrb[0].mxu0
        %v2528 = vadd.f32 %v2307, %v2527
        %v2529 = vpop.f32.mrb[0].mxu0
        %v2530 = vpop.f32.mrb[0].mxu0
        %v2531 = vadd.f32 %v2307, %v2530
        %v2532 = vpop.f32.mrb[0].mxu0
        %2533 = vmatprep.mubr.bf16.mxu0 0
        %2534 = vmatmul.mubr.bf16.gmra.mrb[0].mxu0 %v2272
        %v2535 = vpop.f32.mrb[0].mxu0
        %v2536 = vadd.f32 %v2307, %v2535
        %v2537 = vpop.f32.mrb[0].mxu0
        %v2538 = vpop.f32.mrb[0].mxu0
        %v2539 = vadd.f32 %v2307, %v2538
        %v2540 = vpop.f32.mrb[0].mxu0
        %2541 = vmatprep.mubr.bf16.mxu0 0
        %2542 = vmatmul.mubr.bf16.gmra.mrb[0].mxu0 %v2273
        %v2543 = vpop.f32.mrb[0].mxu0
        %v2544 = vadd.f32 %v2307, %v2543
        %v2545 = vpop.f32.mrb[0].mxu0
        %v2546 = vpop.f32.mrb[0].mxu0
        %v2547 = vadd.f32 %v2307, %v2546
        %v2548 = vpop.f32.mrb[0].mxu0
        %2549 = vmatprep.mubr.bf16.mxu0 0
        %2550 = vmatmul.mubr.bf16.gmra.mrb[0].mxu0 %v2274
        %v2551 = vpop.f32.mrb[0].mxu0
        %v2552 = vadd.f32 %v2307, %v2551
        %v2553 = vpop.f32.mrb[0].mxu0
        %v2554 = vpop.f32.mrb[0].mxu0
        %v2555 = vadd.f32 %v2307, %v2554
        %v2556 = vpop.f32.mrb[0].mxu0
        %2557 = vmatprep.mubr.bf16.mxu0 0
        %2558 = vmatmul.mubr.bf16.gmra.mrb[0].mxu0 %v2275
        %v2559 = vpop.f32.mrb[0].mxu0
        %v2560 = vadd.f32 %v2307, %v2559
        %v2561 = vpop.f32.mrb[0].mxu0
        %v2562 = vpop.f32.mrb[0].mxu0
        %v2563 = vadd.f32 %v2307, %v2562
        %v2564 = vpop.f32.mrb[0].mxu0
        %2565 = vmatprep.mubr.bf16.mxu0 0
        %2566 = vmatmul.mubr.bf16.gmra.mrb[0].mxu0 %v2276
        %v2567 = vpop.f32.mrb[0].mxu0
        %v2568 = vadd.f32 %v2307, %v2567
        %v2569 = vpop.f32.mrb[0].mxu0
        %v2570 = vpop.f32.mrb[0].mxu0
        %v2571 = vadd.f32 %v2307, %v2570
        %v2572 = vpop.f32.mrb[0].mxu0
        %2573 = vmatprep.mubr.bf16.mxu0 0
        %2574 = vmatmul.mubr.bf16.gmra.mrb[0].mxu0 %v2277
        %v2575 = vpop.f32.mrb[0].mxu0
        %v2576 = vadd.f32 %v2307, %v2575
        %v2577 = vpop.f32.mrb[0].mxu0
        %v2578 = vpop.f32.mrb[0].mxu0
        %v2579 = vadd.f32 %v2307, %v2578
        %v2580 = vpop.f32.mrb[0].mxu0
        %2581 = vmatprep.mubr.bf16.mxu0 0
        %2582 = vmatmul.mubr.bf16.gmra.mrb[0].mxu0 %v2278
        %v2583 = vpop.f32.mrb[0].mxu0
        %v2584 = vadd.f32 %v2307, %v2583
        %v2585 = vpop.f32.mrb[0].mxu0
        %v2586 = vpop.f32.mrb[0].mxu0
        %v2587 = vadd.f32 %v2307, %v2586
        %v2588 = vpop.f32.mrb[0].mxu0
        %2589 = vmatprep.mubr.bf16.mxu0 0
        %2590 = vmatmul.mubr.bf16.gmra.mrb[0].mxu0 %v2279
        %v2591 = vpop.f32.mrb[0].mxu0
        %v2592 = vadd.f32 %v2307, %v2591
        %v2593 = vpop.f32.mrb[0].mxu0
        %v2594 = vpop.f32.mrb[0].mxu0
        %v2595 = vadd.f32 %v2307, %v2594
        %v2596 = vpop.f32.mrb[0].mxu0
        %2597 = vmatprep.mubr.bf16.mxu0 0
        %2598 = vmatmul.mubr.bf16.gmra.mrb[0].mxu0 %v2280
        %v2599 = vpop.f32.mrb[0].mxu0
        %v2600 = vadd.f32 %v2307, %v2599
        %v2601 = vpop.f32.mrb[0].mxu0
        %v2602 = vpop.f32.mrb[0].mxu0
        %v2603 = vadd.f32 %v2307, %v2602
        %v2604 = vpop.f32.mrb[0].mxu0
        %2605 = vmatprep.mubr.bf16.mxu0 0
        %2606 = vmatmul.mubr.bf16.gmra.mrb[0].mxu0 %v2281
        %v2607 = vpop.f32.mrb[0].mxu0
        %v2608 = vadd.f32 %v2307, %v2607
        %v2609 = vpop.f32.mrb[0].mxu0
        %v2610 = vpop.f32.mrb[0].mxu0
        %v2611 = vadd.f32 %v2307, %v2610
        %v2612 = vpop.f32.mrb[0].mxu0
        %2613 = vmatprep.mubr.bf16.mxu0 0
        %2614 = vmatmul.mubr.bf16.gmra.mrb[0].mxu0 %v2282
        %v2615 = vpop.f32.mrb[0].mxu0
        %v2616 = vadd.f32 %v2307, %v2615
        %v2617 = vpop.f32.mrb[0].mxu0
        %v2618 = vpop.f32.mrb[0].mxu0
        %v2619 = vadd.f32 %v2307, %v2618
        %v2620 = vpop.f32.mrb[0].mxu0
        %2621 = vmatprep.mubr.bf16.mxu0 0
        %2622 = vmatmul.mubr.bf16.gmra.mrb[0].mxu0 %v2283
        %v2623 = vpop.f32.mrb[0].mxu0
        %v2624 = vadd.f32 %v2307, %v2623
        %v2625 = vpop.f32.mrb[0].mxu0
        %v2626 = vpop.f32.mrb[0].mxu0
        %v2627 = vadd.f32 %v2307, %v2626
        %v2628 = vpop.f32.mrb[0].mxu0
        %2629 = vmatprep.mubr.bf16.mxu0 0
        %2630 = vmatmul.mubr.bf16.gmra.mrb[0].mxu0 %v2284
        %v2631 = vpop.f32.mrb[0].mxu0
        %v2632 = vadd.f32 %v2307, %v2631
        %v2633 = vpop.f32.mrb[0].mxu0
        %v2634 = vpop.f32.mrb[0].mxu0
        %v2635 = vadd.f32 %v2307, %v2634
        %v2636 = vpop.f32.mrb[0].mxu0
        %2637 = vmatprep.mubr.bf16.mxu0 0
        %2638 = vmatmul.mubr.bf16.gmra.mrb[0].mxu0 %v2285
        %v2639 = vpop.f32.mrb[0].mxu0
        %v2640 = vadd.f32 %v2307, %v2639
        %v2641 = vpop.f32.mrb[0].mxu0
        %v2642 = vpop.f32.mrb[0].mxu0
        %v2643 = vadd.f32 %v2307, %v2642
        %v2644 = vpop.f32.mrb[0].mxu0
        %2645 = vdwg.mxu0
        %v2646 = vmax.f32 %v2392, 0.0
        %v2647 = vmax.f32 %v2395, 0.0
        %v2648 = vmax.f32 %v2400, 0.0
        %v2649 = vmax.f32 %v2403, 0.0
        %v2650 = vmax.f32 %v2408, 0.0
        %v2651 = vmax.f32 %v2411, 0.0
        %v2652 = vmax.f32 %v2416, 0.0
        %v2653 = vmax.f32 %v2419, 0.0
        %v2654 = vmax.f32 %v2424, 0.0
        %v2655 = vmax.f32 %v2427, 0.0
        %v2656 = vmax.f32 %v2432, 0.0
        %v2657 = vmax.f32 %v2435, 0.0
        %v2658 = vmax.f32 %v2440, 0.0
        %v2659 = vmax.f32 %v2443, 0.0
        %v2660 = vmax.f32 %v2448, 0.0
        %v2661 = vmax.f32 %v2451, 0.0
        %v2662 = vmax.f32 %v2456, 0.0
        %v2663 = vmax.f32 %v2459, 0.0
        %v2664 = vmax.f32 %v2464, 0.0
        %v2665 = vmax.f32 %v2467, 0.0
        %v2666 = vmax.f32 %v2472, 0.0
        %v2667 = vmax.f32 %v2475, 0.0
        %v2668 = vmax.f32 %v2480, 0.0
        %v2669 = vmax.f32 %v2483, 0.0
        %v2670 = vmax.f32 %v2488, 0.0
        %v2671 = vmax.f32 %v2491, 0.0
        %v2672 = vmax.f32 %v2496, 0.0
        %v2673 = vmax.f32 %v2499, 0.0
        %v2674 = vmax.f32 %v2504, 0.0
        %v2675 = vmax.f32 %v2507, 0.0
        %v2676 = vmax.f32 %v2512, 0.0
        %v2677 = vmax.f32 %v2515, 0.0
        %v2678 = vmax.f32 %v2520, 0.0
        %v2679 = vmax.f32 %v2523, 0.0
        %v2680 = vmax.f32 %v2528, 0.0
        %v2681 = vmax.f32 %v2531, 0.0
        %v2682 = vmax.f32 %v2536, 0.0
        %v2683 = vmax.f32 %v2539, 0.0
        %v2684 = vmax.f32 %v2544, 0.0
        %v2685 = vmax.f32 %v2547, 0.0
        %v2686 = vmax.f32 %v2552, 0.0
        %v2687 = vmax.f32 %v2555, 0.0
        %v2688 = vmax.f32 %v2560, 0.0
        %v2689 = vmax.f32 %v2563, 0.0
        %v2690 = vmax.f32 %v2568, 0.0
        %v2691 = vmax.f32 %v2571, 0.0
        %v2692 = vmax.f32 %v2576, 0.0
        %v2693 = vmax.f32 %v2579, 0.0
        %v2694 = vmax.f32 %v2584, 0.0
        %v2695 = vmax.f32 %v2587, 0.0
        %v2696 = vmax.f32 %v2592, 0.0
        %v2697 = vmax.f32 %v2595, 0.0
        %v2698 = vmax.f32 %v2600, 0.0
        %v2699 = vmax.f32 %v2603, 0.0
        %v2700 = vmax.f32 %v2608, 0.0
        %v2701 = vmax.f32 %v2611, 0.0
        %v2702 = vmax.f32 %v2616, 0.0
        %v2703 = vmax.f32 %v2619, 0.0
        %v2704 = vmax.f32 %v2624, 0.0
        %v2705 = vmax.f32 %v2627, 0.0
        %v2706 = vmax.f32 %v2632, 0.0
        %v2707 = vmax.f32 %v2635, 0.0
        %v2708 = vmax.f32 %v2640, 0.0
        %v2709 = vmax.f32 %v2643, 0.0
        %v2710 = vld [vmem:[%s417] sm:$0x1]
        %v2711 = vld [vmem:[%s417 + $0x1] sm:$0x1]
        %v2712 = vld [vmem:[%s417 + $0x2] sm:$0x1]
        %v2713 = vld [vmem:[%s417 + $0x3] sm:$0x1]
        %2714 = vmatprep.subr.mxu0 0.0
        %2715 = vmatpush1.msra.mxu0 %v2646
        %2716 = vmatprep.subr.mxu0 0.0
        %2717 = vmatpush1.msra.mxu0 %v2647
        %2718 = vmatprep.subr.mxu0 0.0
        %2719 = vmatpush1.msra.mxu0 %v2648
        %2720 = vmatprep.subr.mxu0 0.0
        %2721 = vmatpush1.msra.mxu0 %v2649
        %2722 = vmatprep.subr.mxu0 0.0
        %2723 = vmatpush1.msra.mxu0 %v2650
        %2724 = vmatprep.subr.mxu0 0.0
        %2725 = vmatpush1.msra.mxu0 %v2651
        %2726 = vmatprep.subr.mxu0 0.0
        %2727 = vmatpush1.msra.mxu0 %v2652
        %2728 = vmatprep.subr.mxu0 0.0
        %2729 = vmatpush1.msra.mxu0 %v2653
        %2730 = vmatprep.subr.mxu0 0.0
        %2731 = vmatpush1.msra.mxu0 %v2654
        %2732 = vmatprep.subr.mxu0 0.0
        %2733 = vmatpush1.msra.mxu0 %v2655
        %2734 = vmatprep.subr.mxu0 0.0
        %2735 = vmatpush1.msra.mxu0 %v2656
        %2736 = vmatprep.subr.mxu0 0.0
        %2737 = vmatpush1.msra.mxu0 %v2657
        %2738 = vmatprep.subr.mxu0 0.0
        %2739 = vmatpush1.msra.mxu0 %v2658
        %2740 = vmatprep.subr.mxu0 0.0
        %2741 = vmatpush1.msra.mxu0 %v2659
        %2742 = vmatprep.subr.mxu0 0.0
        %2743 = vmatpush1.msra.mxu0 %v2660
        %2744 = vmatprep.subr.mxu0 0.0
        %2745 = vmatpush1.msra.mxu0 %v2661
        %2746 = vmatprep.subr.mxu0 0.0
        %2747 = vmatpush1.msra.mxu0 0.0
        %2748 = vmatprep.subr.mxu0 0.0
        %2749 = vmatpush1.msra.mxu0 0.0
        %2750 = vmatprep.subr.mxu0 0.0
        %2751 = vmatpush1.msra.mxu0 0.0
        %2752 = vmatprep.subr.mxu0 0.0
        %2753 = vmatpush1.msra.mxu0 0.0
        %2754 = vmatprep.subr.mxu0 0.0
        %2755 = vmatpush1.msra.mxu0 0.0
        %2756 = vmatprep.subr.mxu0 0.0
        %2757 = vmatpush1.msra.mxu0 0.0
        %2758 = vmatprep.subr.mxu0 0.0
        %2759 = vmatpush1.msra.mxu0 0.0
        %2760 = vmatprep.subr.mxu0 0.0
        %2761 = vmatpush1.msra.mxu0 0.0
        %2762 = vmatprep.subr.mxu0 0.0
        %2763 = vmatpush1.msra.mxu0 0.0
        %2764 = vmatprep.subr.mxu0 0.0
        %2765 = vmatpush1.msra.mxu0 0.0
        %2766 = vmatprep.subr.mxu0 0.0
        %2767 = vmatpush1.msra.mxu0 0.0
        %2768 = vmatprep.subr.mxu0 0.0
        %2769 = vmatpush1.msra.mxu0 0.0
        %2770 = vmatprep.subr.mxu0 0.0
        %2771 = vmatpush1.msra.mxu0 0.0
        %2772 = vmatprep.subr.mxu0 0.0
        %2773 = vmatpush1.msra.mxu0 0.0
        %2774 = vmatprep.subr.mxu0 0.0
        %2775 = vmatpush1.msra.mxu0 0.0
        %2776 = vmatprep.subr.mxu0 0.0
        %2777 = vmatpush1.msra.mxu0 0.0
        %2778 = vmatprep.mubr.f32.mxu0 0.0
        %2779 = vmatmul.mubr.f32.gmra.mrb[0].mxu0 %v2710
        %v2780 = vpop.f32.mrb[0].mxu0
        %v2781 = vadd.f32 0.0, %v2780
        %v2782 = vpop.f32.mrb[0].mxu0
        %2783 = vdwg.mxu0
        %2784 = vmatprep.subr.mxu0 0.0
        %2785 = vmatpush1.msra.mxu0 %v2662
        %2786 = vmatprep.subr.mxu0 0.0
        %2787 = vmatpush1.msra.mxu0 %v2663
        %2788 = vmatprep.subr.mxu0 0.0
        %2789 = vmatpush1.msra.mxu0 %v2664
        %2790 = vmatprep.subr.mxu0 0.0
        %2791 = vmatpush1.msra.mxu0 %v2665
        %2792 = vmatprep.subr.mxu0 0.0
        %2793 = vmatpush1.msra.mxu0 %v2666
        %2794 = vmatprep.subr.mxu0 0.0
        %2795 = vmatpush1.msra.mxu0 %v2667
        %2796 = vmatprep.subr.mxu0 0.0
        %2797 = vmatpush1.msra.mxu0 %v2668
        %2798 = vmatprep.subr.mxu0 0.0
        %2799 = vmatpush1.msra.mxu0 %v2669
        %2800 = vmatprep.subr.mxu0 0.0
        %2801 = vmatpush1.msra.mxu0 %v2670
        %2802 = vmatprep.subr.mxu0 0.0
        %2803 = vmatpush1.msra.mxu0 %v2671
        %2804 = vmatprep.subr.mxu0 0.0
        %2805 = vmatpush1.msra.mxu0 %v2672
        %2806 = vmatprep.subr.mxu0 0.0
        %2807 = vmatpush1.msra.mxu0 %v2673
        %2808 = vmatprep.subr.mxu0 0.0
        %2809 = vmatpush1.msra.mxu0 %v2674
        %2810 = vmatprep.subr.mxu0 0.0
        %2811 = vmatpush1.msra.mxu0 %v2675
        %2812 = vmatprep.subr.mxu0 0.0
        %2813 = vmatpush1.msra.mxu0 %v2676
        %2814 = vmatprep.subr.mxu0 0.0
        %2815 = vmatpush1.msra.mxu0 %v2677
        %2816 = vmatprep.subr.mxu0 0.0
        %2817 = vmatpush1.msra.mxu0 0.0
        %2818 = vmatprep.subr.mxu0 0.0
        %2819 = vmatpush1.msra.mxu0 0.0
        %2820 = vmatprep.subr.mxu0 0.0
        %2821 = vmatpush1.msra.mxu0 0.0
        %2822 = vmatprep.subr.mxu0 0.0
        %2823 = vmatpush1.msra.mxu0 0.0
        %2824 = vmatprep.subr.mxu0 0.0
        %2825 = vmatpush1.msra.mxu0 0.0
        %2826 = vmatprep.subr.mxu0 0.0
        %2827 = vmatpush1.msra.mxu0 0.0
        %2828 = vmatprep.subr.mxu0 0.0
        %2829 = vmatpush1.msra.mxu0 0.0
        %2830 = vmatprep.subr.mxu0 0.0
        %2831 = vmatpush1.msra.mxu0 0.0
        %2832 = vmatprep.subr.mxu0 0.0
        %2833 = vmatpush1.msra.mxu0 0.0
        %2834 = vmatprep.subr.mxu0 0.0
        %2835 = vmatpush1.msra.mxu0 0.0
        %2836 = vmatprep.subr.mxu0 0.0
        %2837 = vmatpush1.msra.mxu0 0.0
        %2838 = vmatprep.subr.mxu0 0.0
        %2839 = vmatpush1.msra.mxu0 0.0
        %2840 = vmatprep.subr.mxu0 0.0
        %2841 = vmatpush1.msra.mxu0 0.0
        %2842 = vmatprep.subr.mxu0 0.0
        %2843 = vmatpush1.msra.mxu0 0.0
        %2844 = vmatprep.subr.mxu0 0.0
        %2845 = vmatpush1.msra.mxu0 0.0
        %2846 = vmatprep.subr.mxu0 0.0
        %2847 = vmatpush1.msra.mxu0 0.0
        %2848 = vmatprep.mubr.f32.mxu0 0.0
        %2849 = vmatmul.mubr.f32.gmra.mrb[0].mxu0 %v2711
        %v2850 = vpop.f32.mrb[0].mxu0
        %v2851 = vadd.f32 0.0, %v2850
        %v2852 = vpop.f32.mrb[0].mxu0
        %2853 = vdwg.mxu0
        %2854 = vmatprep.subr.mxu0 0.0
        %2855 = vmatpush1.msra.mxu0 %v2678
        %2856 = vmatprep.subr.mxu0 0.0
        %2857 = vmatpush1.msra.mxu0 %v2679
        %2858 = vmatprep.subr.mxu0 0.0
        %2859 = vmatpush1.msra.mxu0 %v2680
        %2860 = vmatprep.subr.mxu0 0.0
        %2861 = vmatpush1.msra.mxu0 %v2681
        %2862 = vmatprep.subr.mxu0 0.0
        %2863 = vmatpush1.msra.mxu0 %v2682
        %2864 = vmatprep.subr.mxu0 0.0
        %2865 = vmatpush1.msra.mxu0 %v2683
        %2866 = vmatprep.subr.mxu0 0.0
        %2867 = vmatpush1.msra.mxu0 %v2684
        %2868 = vmatprep.subr.mxu0 0.0
        %2869 = vmatpush1.msra.mxu0 %v2685
        %2870 = vmatprep.subr.mxu0 0.0
        %2871 = vmatpush1.msra.mxu0 %v2686
        %2872 = vmatprep.subr.mxu0 0.0
        %2873 = vmatpush1.msra.mxu0 %v2687
        %2874 = vmatprep.subr.mxu0 0.0
        %2875 = vmatpush1.msra.mxu0 %v2688
        %2876 = vmatprep.subr.mxu0 0.0
        %2877 = vmatpush1.msra.mxu0 %v2689
        %2878 = vmatprep.subr.mxu0 0.0
        %2879 = vmatpush1.msra.mxu0 %v2690
        %2880 = vmatprep.subr.mxu0 0.0
        %2881 = vmatpush1.msra.mxu0 %v2691
        %2882 = vmatprep.subr.mxu0 0.0
        %2883 = vmatpush1.msra.mxu0 %v2692
        %2884 = vmatprep.subr.mxu0 0.0
        %2885 = vmatpush1.msra.mxu0 %v2693
        %2886 = vmatprep.subr.mxu0 0.0
        %2887 = vmatpush1.msra.mxu0 0.0
        %2888 = vmatprep.subr.mxu0 0.0
        %2889 = vmatpush1.msra.mxu0 0.0
        %2890 = vmatprep.subr.mxu0 0.0
        %2891 = vmatpush1.msra.mxu0 0.0
        %2892 = vmatprep.subr.mxu0 0.0
        %2893 = vmatpush1.msra.mxu0 0.0
        %2894 = vmatprep.subr.mxu0 0.0
        %2895 = vmatpush1.msra.mxu0 0.0
        %2896 = vmatprep.subr.mxu0 0.0
        %2897 = vmatpush1.msra.mxu0 0.0
        %2898 = vmatprep.subr.mxu0 0.0
        %2899 = vmatpush1.msra.mxu0 0.0
        %2900 = vmatprep.subr.mxu0 0.0
        %2901 = vmatpush1.msra.mxu0 0.0
        %2902 = vmatprep.subr.mxu0 0.0
        %2903 = vmatpush1.msra.mxu0 0.0
        %2904 = vmatprep.subr.mxu0 0.0
        %2905 = vmatpush1.msra.mxu0 0.0
        %2906 = vmatprep.subr.mxu0 0.0
        %2907 = vmatpush1.msra.mxu0 0.0
        %2908 = vmatprep.subr.mxu0 0.0
        %2909 = vmatpush1.msra.mxu0 0.0
        %2910 = vmatprep.subr.mxu0 0.0
        %2911 = vmatpush1.msra.mxu0 0.0
        %2912 = vmatprep.subr.mxu0 0.0
        %2913 = vmatpush1.msra.mxu0 0.0
        %2914 = vmatprep.subr.mxu0 0.0
        %2915 = vmatpush1.msra.mxu0 0.0
        %2916 = vmatprep.subr.mxu0 0.0
        %2917 = vmatpush1.msra.mxu0 0.0
        %2918 = vmatprep.mubr.f32.mxu0 0.0
        %2919 = vmatmul.mubr.f32.gmra.mrb[0].mxu0 %v2712
        %v2920 = vpop.f32.mrb[0].mxu0
        %v2921 = vadd.f32 0.0, %v2920
        %v2922 = vpop.f32.mrb[0].mxu0
        %2923 = vdwg.mxu0
        %2924 = vmatprep.subr.mxu0 0.0
        %2925 = vmatpush1.msra.mxu0 %v2694
        %2926 = vmatprep.subr.mxu0 0.0
        %2927 = vmatpush1.msra.mxu0 %v2695
        %2928 = vmatprep.subr.mxu0 0.0
        %2929 = vmatpush1.msra.mxu0 %v2696
        %2930 = vmatprep.subr.mxu0 0.0
        %2931 = vmatpush1.msra.mxu0 %v2697
        %2932 = vmatprep.subr.mxu0 0.0
        %2933 = vmatpush1.msra.mxu0 %v2698
        %2934 = vmatprep.subr.mxu0 0.0
        %2935 = vmatpush1.msra.mxu0 %v2699
        %2936 = vmatprep.subr.mxu0 0.0
        %2937 = vmatpush1.msra.mxu0 %v2700
        %2938 = vmatprep.subr.mxu0 0.0
        %2939 = vmatpush1.msra.mxu0 %v2701
        %2940 = vmatprep.subr.mxu0 0.0
        %2941 = vmatpush1.msra.mxu0 %v2702
        %2942 = vmatprep.subr.mxu0 0.0
        %2943 = vmatpush1.msra.mxu0 %v2703
        %2944 = vmatprep.subr.mxu0 0.0
        %2945 = vmatpush1.msra.mxu0 %v2704
        %2946 = vmatprep.subr.mxu0 0.0
        %2947 = vmatpush1.msra.mxu0 %v2705
        %2948 = vmatprep.subr.mxu0 0.0
        %2949 = vmatpush1.msra.mxu0 %v2706
        %2950 = vmatprep.subr.mxu0 0.0
        %2951 = vmatpush1.msra.mxu0 %v2707
        %2952 = vmatprep.subr.mxu0 0.0
        %2953 = vmatpush1.msra.mxu0 %v2708
        %2954 = vmatprep.subr.mxu0 0.0
        %2955 = vmatpush1.msra.mxu0 %v2709
        %2956 = vmatprep.subr.mxu0 0.0
        %2957 = vmatpush1.msra.mxu0 0.0
        %2958 = vmatprep.subr.mxu0 0.0
        %2959 = vmatpush1.msra.mxu0 0.0
        %2960 = vmatprep.subr.mxu0 0.0
        %2961 = vmatpush1.msra.mxu0 0.0
        %2962 = vmatprep.subr.mxu0 0.0
        %2963 = vmatpush1.msra.mxu0 0.0
        %2964 = vmatprep.subr.mxu0 0.0
        %2965 = vmatpush1.msra.mxu0 0.0
        %2966 = vmatprep.subr.mxu0 0.0
        %2967 = vmatpush1.msra.mxu0 0.0
        %2968 = vmatprep.subr.mxu0 0.0
        %2969 = vmatpush1.msra.mxu0 0.0
        %2970 = vmatprep.subr.mxu0 0.0
        %2971 = vmatpush1.msra.mxu0 0.0
        %2972 = vmatprep.subr.mxu0 0.0
        %2973 = vmatpush1.msra.mxu0 0.0
        %2974 = vmatprep.subr.mxu0 0.0
        %2975 = vmatpush1.msra.mxu0 0.0
        %2976 = vmatprep.subr.mxu0 0.0
        %2977 = vmatpush1.msra.mxu0 0.0
        %2978 = vmatprep.subr.mxu0 0.0
        %2979 = vmatpush1.msra.mxu0 0.0
        %2980 = vmatprep.subr.mxu0 0.0
        %2981 = vmatpush1.msra.mxu0 0.0
        %2982 = vmatprep.subr.mxu0 0.0
        %2983 = vmatpush1.msra.mxu0 0.0
        %2984 = vmatprep.subr.mxu0 0.0
        %2985 = vmatpush1.msra.mxu0 0.0
        %2986 = vmatprep.subr.mxu0 0.0
        %2987 = vmatpush1.msra.mxu0 0.0
        %2988 = vmatprep.mubr.f32.mxu0 0.0
        %2989 = vmatmul.mubr.f32.gmra.mrb[0].mxu0 %v2713
        %v2990 = vpop.f32.mrb[0].mxu0
        %v2991 = vadd.f32 0.0, %v2990
        %v2992 = vpop.f32.mrb[0].mxu0
        %2993 = vdwg.mxu0
        %v2994 = vld [vmem:[#allocation11] sm:$0xff]
        %v2995 = vld [vmem:[#allocation11 + $0x8] sm:$0xff]
        %v2996 = vld [vmem:[#allocation11 + $0x10] sm:$0xff]
        %v2997 = vld [vmem:[#allocation11 + $0x18] sm:$0xff]
        %v2998 = vld [vmem:[#allocation11 + $0x20] sm:$0xff]
        %v2999 = vld [vmem:[#allocation11 + $0x28] sm:$0xff]
        %v3000 = vld [vmem:[#allocation11 + $0x30] sm:$0xff]
        %v3001 = vld [vmem:[#allocation11 + $0x38] sm:$0xff]
        %v3002 = vld [vmem:[#allocation11 + $0x40] sm:$0xff]
        %v3003 = vld [vmem:[#allocation11 + $0x48] sm:$0xff]
        %v3004 = vld [vmem:[#allocation11 + $0x50] sm:$0xff]
        %v3005 = vld [vmem:[#allocation11 + $0x58] sm:$0xff]
        %v3006 = vld [vmem:[#allocation11 + $0x60] sm:$0xff]
        %v3007 = vld [vmem:[#allocation11 + $0x68] sm:$0xff]
        %v3008 = vld [vmem:[#allocation11 + $0x70] sm:$0xff]
        %v3009 = vld [vmem:[#allocation11 + $0x78] sm:$0xff]
        %v3010 = vld [vmem:[%s8] sm:$0x1]
        %v3012 = vlaneseq
        %v3013 = vshrl.u32 %v3012, 7
        %v3014 = vsub.s32 0, %v3013
        %v3015 = vrot.slane %v3010, %v3014
        %v3021 = vrot.slane %v2851, 7
        %vm3022 = vcmask 1041409
        %v3023 = vsel %vm3022, %v3021, %v2781
        %v3024 = vrot.slane %v2921, 6
        %vm3025 = vcmask 1042434
        %v3026 = vsel %vm3025, %v3024, %v3023
        %v3027 = vrot.slane %v2991, 5
        %vm3028 = vcmask 1043459
        %v3029 = vsel %vm3028, %v3027, %v3026
        %3031 = vmatprep.subr.mxu0 0.0
        %3032 = vmatpush1.msra.mxu0 %v2994
        %3033 = vmatprep.subr.mxu0 0.0
        %3034 = vmatpush1.msra.mxu0 %v2995
        %3035 = vmatprep.subr.mxu0 0.0
        %3036 = vmatpush1.msra.mxu0 %v2996
        %3037 = vmatprep.subr.mxu0 0.0
        %3038 = vmatpush1.msra.mxu0 %v2997
        %3039 = vmatprep.subr.mxu0 0.0
        %3040 = vmatpush1.msra.mxu0 %v2998
        %3041 = vmatprep.subr.mxu0 0.0
        %3042 = vmatpush1.msra.mxu0 %v2999
        %3043 = vmatprep.subr.mxu0 0.0
        %3044 = vmatpush1.msra.mxu0 %v3000
        %3045 = vmatprep.subr.mxu0 0.0
        %3046 = vmatpush1.msra.mxu0 %v3001
        %3047 = vmatprep.subr.mxu0 0.0
        %3048 = vmatpush1.msra.mxu0 %v3002
        %3049 = vmatprep.subr.mxu0 0.0
        %3050 = vmatpush1.msra.mxu0 %v3003
        %3051 = vmatprep.subr.mxu0 0.0
        %3052 = vmatpush1.msra.mxu0 %v3004
        %3053 = vmatprep.subr.mxu0 0.0
        %3054 = vmatpush1.msra.mxu0 %v3005
        %3055 = vmatprep.subr.mxu0 0.0
        %3056 = vmatpush1.msra.mxu0 %v3006
        %3057 = vmatprep.subr.mxu0 0.0
        %3058 = vmatpush1.msra.mxu0 %v3007
        %3059 = vmatprep.subr.mxu0 0.0
        %3060 = vmatpush1.msra.mxu0 %v3008
        %3061 = vmatprep.subr.mxu0 0.0
        %3062 = vmatpush1.msra.mxu0 %v3009
        %3063 = vmatprep.subr.mxu0 0.0
        %3064 = vmatpush1.msra.mxu0 0.0
        %3065 = vmatprep.subr.mxu0 0.0
        %3066 = vmatpush1.msra.mxu0 0.0
        %3067 = vmatprep.subr.mxu0 0.0
        %3068 = vmatpush1.msra.mxu0 0.0
        %3069 = vmatprep.subr.mxu0 0.0
        %3070 = vmatpush1.msra.mxu0 0.0
        %3071 = vmatprep.subr.mxu0 0.0
        %3072 = vmatpush1.msra.mxu0 0.0
        %3073 = vmatprep.subr.mxu0 0.0
        %3074 = vmatpush1.msra.mxu0 0.0
        %3075 = vmatprep.subr.mxu0 0.0
        %3076 = vmatpush1.msra.mxu0 0.0
        %3077 = vmatprep.subr.mxu0 0.0
        %3078 = vmatpush1.msra.mxu0 0.0
        %3079 = vmatprep.subr.mxu0 0.0
        %3080 = vmatpush1.msra.mxu0 0.0
        %3081 = vmatprep.subr.mxu0 0.0
        %3082 = vmatpush1.msra.mxu0 0.0
        %3083 = vmatprep.subr.mxu0 0.0
        %3084 = vmatpush1.msra.mxu0 0.0
        %3085 = vmatprep.subr.mxu0 0.0
        %3086 = vmatpush1.msra.mxu0 0.0
        %3087 = vmatprep.subr.mxu0 0.0
        %3088 = vmatpush1.msra.mxu0 0.0
        %3089 = vmatprep.subr.mxu0 0.0
        %3090 = vmatpush1.msra.mxu0 0.0
        %3091 = vmatprep.subr.mxu0 0.0
        %3092 = vmatpush1.msra.mxu0 0.0
        %3093 = vmatprep.subr.mxu0 0.0
        %3094 = vmatpush1.msra.mxu0 0.0
        %3095 = vmatprep.mubr.f32.mxu0 0.0
        %3096 = vmatmul.mubr.f32.gmra.mrb[0].mxu0 %v3029
        %v3097 = vpop.f32.mrb[0].mxu0
        %v3098 = vadd.f32 %v3015, %v3097
        %v3099 = vpop.f32.mrb[0].mxu0
        %3100 = vdwg.mxu0
        %3101 = vst [vmem:[%s473] sm:$0xf] %v3098
        %s3102 = sand.u32 %s243, 1
        %s3103 = scalar_lea.sflag [#allocation4], %s3102
        %s3104 = sand.u32 %s243, 1
        %s3105 = smul.addr %s3104, 4
        %s3106 = scalar_lea.vmem [#allocation13], %s3105
        // Predicated region
        $region81: #{tpu_custom_call.1} parent=55 // pred_check
          %p3107 = pneg %p253
        $region82: #{tpu_custom_call.1} parent=55 // pred_check_branch
          %3109 = sbr.rel (%p3107) target = $region84
        $region83: #{tpu_custom_call.1} parent=55 // pred_region
          %s3111 = ssub.s32 64, 64
          %3112 = vsyncadd %s3103, %s3111
          %s3113 = smul.addr %s31, 64
          %s3114 = scalar_lea.hbm %s9, %s3113
          %s3116 = sshll.u32 %s3106, 4
          %s3117 = int_to_ptr.vmem [resolvable:$true] %s3116
          %3119 = dma.vmem_to_hbm [thread:$0]  %s3117, 64, %s3114, %s3103
        $region84: #{tpu_custom_call.1} parent=55 // pred_fallthru
          _
      $region56: #{tpu_custom_call.1} parent=5 // pred_fallthru
        _
      %p3120 = scmp.le.s32.totalorder 2, %s26
      // Predicated region
      $region85: #{tpu_custom_call.1} parent=5 // pred_check
        %p3121 = pneg %p3120
      $region86: #{tpu_custom_call.1} parent=5 // pred_check_branch
        %3123 = sbr.rel (%p3121) target = $region88
      $region87: #{tpu_custom_call.1} parent=5 // pred_region
        %s3124 = ssub.s32 %s26, 2
        // Predicated region
        $region89: #{tpu_custom_call.1} parent=87 // pred_check
          %p3125 = pneg %p259
        $region90: #{tpu_custom_call.1} parent=87 // pred_check_branch
          %3127 = sbr.rel (%p3125) target = $region92
        $region91: #{tpu_custom_call.1} parent=87 // pred_region
          %s3128 = sand.u32 %s244, 1
          %s3129 = scalar_lea.sflag [#allocation4], %s3128
          %s3130 = sand.u32 %s244, 1
          %s3131 = smul.addr %s3130, 4
          %s3132 = scalar_lea.vmem [#allocation13], %s3131
          %3133 = dma.done %s3129, 64
        $region92: #{tpu_custom_call.1} parent=87 // pred_fallthru
          _
      $region88: #{tpu_custom_call.1} parent=5 // pred_fallthru
        _
    $region6: #{tpu_custom_call.1} parent=1 // loop_footer
      %s30 = sadd.s32 1, %s26
    $region7: #{tpu_custom_call.1} parent=1 // loop_footer_branch
      %25 = sbr.rel target = $region3
    $region8: #{tpu_custom_call.1} parent=1 // loop_exit
      _
    %3134 = vsyncpa [#allocation3], 1
    %s3135 = scalar_lea.sflag [#allocation3], 1
    %3136 = vsyncpa %s3135, 1
    %3137 = vsyncpa [#allocation6], 1
    %s3138 = scalar_lea.sflag [#allocation6], 1
    %3139 = vsyncpa %s3138, 1
    %3140 = vsyncpa [#allocation9], 1
    %3141 = vsyncpa [#allocation12], 1
    %3142 = vsyncpa [#allocation4], 1
    %s3143 = scalar_lea.sflag [#allocation4], 1
    %3144 = vsyncpa %s3143, 1

</llo_original>
